<compile_context>
chip_gen: v7x
topology: tpu7x:2x2x1
jax: 0.10.0
libtpu: 0.0.40
codegen_flags: <defaults>
</compile_context>

<pallas_src>
import functools

import jax
import jax.numpy as jnp
from jax.experimental import pallas as pl
from jax.experimental.pallas import tpu as pltpu

EPS = 1e-5
LANE = 128


# ---------------------------------------------------------------------------
# Helpers
# ---------------------------------------------------------------------------
def _round_up(x, m):
    return (x + m - 1) // m * m


def _bn_affine(gamma, beta, mean, var):
    scale = gamma / jnp.sqrt(var + EPS)
    shift = beta - mean * scale
    return scale, shift


def _vmem_limit_bytes():
    # Leave headroom for compiler-internal scratch (v7x: 64 MiB/TC -> ~48 MiB;
    # v5e/v6e: 128 MiB -> 96 MiB).  Fall back to the compiler default.
    try:
        cap = pltpu.get_tpu_info().vmem_capacity_bytes
        return max(32 * 1024 * 1024, (cap * 3) // 4)
    except Exception:
        return None


# ---------------------------------------------------------------------------
# Fused residual-block kernel (one image per grid step)
# ---------------------------------------------------------------------------
def _make_kernel(*, stride, ho, wo, cin_p, cout_pad, projection):
    s = stride

    def body(x_ref, w1_ref, sh1_ref, w2_ref, sh2_ref, ws_ref, o_ref, h_scr):
        def x_tap(dy, dx):
            # Phase-decomposed, zero-padded input: every tap is a static,
            # unit-stride (ho, wo, cin_p) slice.
            p = (dy % s) * s + (dx % s)
            return x_ref[p, pl.ds(dy // s, ho), pl.ds(dx // s, wo), :]

        # ---- stage 1: h = relu(conv1(x) * sc1 + sh1)  (sc1 folded into w1)
        acc = jnp.zeros((ho * wo, cout_pad), jnp.float32)
        for dy in range(3):
            for dx in range(3):
                lhs = x_tap(dy, dx).reshape(ho * wo, cin_p)
                acc += jnp.dot(lhs, w1_ref[dy * 3 + dx],
                               preferred_element_type=jnp.float32)
        h = jnp.maximum(acc + sh1_ref[...], 0.0).astype(jnp.bfloat16)

        # h stays in VMEM with a zero halo for the stride-1 conv2.
        h_scr[...] = jnp.zeros_like(h_scr)
        h_scr[pl.ds(1, ho), pl.ds(1, wo), :] = h.reshape(ho, wo, cout_pad)

        # ---- stage 2: out = relu(conv2(h) * sc2 + shortcut + shift)
        acc2 = jnp.zeros((ho * wo, cout_pad), jnp.float32)
        for dy in range(3):
            for dx in range(3):
                lhs = h_scr[pl.ds(dy, ho), pl.ds(dx, wo), :]
                lhs = lhs.reshape(ho * wo, cout_pad)
                acc2 += jnp.dot(lhs, w2_ref[dy * 3 + dx],
                                preferred_element_type=jnp.float32)

        res = x_tap(1, 1).reshape(ho * wo, cin_p)   # center tap = x at stride s
        if projection:                              # folded 1x1-conv + BN
            acc2 += jnp.dot(res, ws_ref[...], preferred_element_type=jnp.float32)
        else:                                       # identity (cin_p == cout_pad)
            acc2 += res.astype(jnp.float32)

        out = jnp.maximum(acc2 + sh2_ref[...], 0.0)
        o_ref[0] = out.reshape(ho, wo, cout_pad).astype(o_ref.dtype)

    if projection:
        return body

    def ident_kernel(x_ref, w1_ref, sh1_ref, w2_ref, sh2_ref, o_ref, h_scr):
        body(x_ref, w1_ref, sh1_ref, w2_ref, sh2_ref, None, o_ref, h_scr)

    return ident_kernel


# ---------------------------------------------------------------------------
# Wrapper: layout, BN folding, phase decomposition, pallas_call
# ---------------------------------------------------------------------------
@functools.partial(jax.jit, static_argnames=("stride",))
def residual_block_forward(x_nchw, params, stride):
    """ResidualBlock forward.  x_nchw: (N, Cin, H, W) f32, returns NCHW f32."""
    w1, bn1, w2, bn2, ws, bns = params
    cout, cin = int(w1.shape[0]), int(w1.shape[1])
    n, _, h, w = x_nchw.shape
    s = int(stride)
    ho = (h + 2 - 3) // s + 1
    wo = (w + 2 - 3) // s + 1
    projection = (s != 1) or (cin != cout)
    if not projection:
        assert cin == cout and s == 1

    cout_pad = _round_up(cout, 256 if cout >= 256 else LANE)
    # Identity path needs x's channel width to match the padded output width
    # (for the in-kernel residual add); projection path only needs sublane pad.
    cin_p = cout_pad if not projection else _round_up(cin, 8)

    x = jnp.transpose(x_nchw, (0, 2, 3, 1))                     # NCHW -> NHWC
    if cin_p != cin:
        x = jnp.pad(x, ((0, 0), (0, 0), (0, 0), (0, cin_p - cin)))
    xp = jnp.pad(x, ((0, 0), (1, 1), (1, 1), (0, 0))).astype(jnp.bfloat16)

    # Space-to-depth phase decomposition so every in-kernel conv tap is a
    # static unit-stride slice of the VMEM-resident slab.
    if s == 1:
        hp, wp = h + 2, w + 2
        x_ph = xp[:, None]                                      # (N,1,hp,wp,C)
    else:
        hp, wp = ho + 1, wo + 1
        phases = []
        for py in range(s):
            for px in range(s):
                ph = xp[:, py::s, px::s, :][:, :hp, :wp, :]
                ph = jnp.pad(ph, ((0, 0), (0, hp - ph.shape[1]),
                                  (0, wp - ph.shape[2]), (0, 0)))
                phases.append(ph)
        x_ph = jnp.stack(phases, axis=1)                        # (N,s*s,hp,wp,C)
    nph = s * s
    x_ph = x_ph.reshape(n * nph, hp, wp, cin_p)

    # Fold the (inference-mode) BN scale into the conv weights.
    sc1, sh1 = _bn_affine(*bn1)
    sc2, sh2 = _bn_affine(*bn2)

    def conv_w(w_oihw, scale, k_pad):
        co, ci, kh, kw = w_oihw.shape
        wm = jnp.transpose(w_oihw, (2, 3, 1, 0)).reshape(kh * kw, ci, co)
        wm = wm * scale[None, None, :]
        wm = jnp.pad(wm, ((0, 0), (0, k_pad - ci), (0, cout_pad - co)))
        return wm.astype(jnp.bfloat16)

    w1m = conv_w(w1, sc1, cin_p)                  # (9, cin_p, cout_pad)
    w2m = conv_w(w2, sc2, cout_pad)               # (9, cout_pad, cout_pad)
    sh1p = jnp.pad(sh1.reshape(1, -1),
                   ((0, 0), (0, cout_pad - cout))).astype(jnp.float32)

    if projection:
        scs, shs = _bn_affine(*bns)
        wsm = jnp.pad(ws[:, :, 0, 0].T * scs[None, :],
                      ((0, cin_p - cin), (0, cout_pad - cout))).astype(jnp.bfloat16)
        sh2_tot = sh2 + shs
    else:
        wsm = None
        sh2_tot = sh2
    sh2p = jnp.pad(sh2_tot.reshape(1, -1),
                   ((0, 0), (0, cout_pad - cout))).astype(jnp.float32)

    kernel = _make_kernel(stride=s, ho=ho, wo=wo, cin_p=cin_p,
                          cout_pad=cout_pad, projection=projection)

    in_specs = [
        pl.BlockSpec((nph, hp, wp, cin_p), lambda b: (b, 0, 0, 0)),   # x phases
        pl.BlockSpec((9, cin_p, cout_pad), lambda b: (0, 0, 0)),      # w1 (resident)
        pl.BlockSpec((1, cout_pad), lambda b: (0, 0)),                # bn1 shift
        pl.BlockSpec((9, cout_pad, cout_pad), lambda b: (0, 0, 0)),   # w2 (resident)
        pl.BlockSpec((1, cout_pad), lambda b: (0, 0)),                # bn2(+bns) shift
    ]
    args = [x_ph, w1m, sh1p, w2m, sh2p]
    if projection:
        in_specs.append(pl.BlockSpec((cin_p, cout_pad), lambda b: (0, 0)))
        args.append(wsm)

    out = pl.pallas_call(
        kernel,
        out_shape=jax.ShapeDtypeStruct((n, ho, wo, cout_pad), jnp.float32),
        grid_spec=pltpu.PrefetchScalarGridSpec(
            num_scalar_prefetch=0,
            grid=(n,),
            in_specs=in_specs,
            out_specs=pl.BlockSpec((1, ho, wo, cout_pad),
                                   lambda b: (b, 0, 0, 0)),
            scratch_shapes=[pltpu.VMEM((ho + 2, wo + 2, cout_pad), jnp.bfloat16)],
        ),
        compiler_params=pltpu.CompilerParams(
            dimension_semantics=("parallel",),
            vmem_limit_bytes=_vmem_limit_bytes(),
        ),
    )(*args)

    out = out[:, :, :, :cout]                                   # strip lane pad
    return jnp.transpose(out, (0, 3, 1, 2))                     # NHWC -> NCHW


# ---------------------------------------------------------------------------
# Pure-JAX f32 reference (PyTorch eval-mode semantics)
# ---------------------------------------------------------------------------
def _ref_forward(x, params, stride):
    w1, bn1, w2, bn2, ws, bns = params

    def conv(x, w, s, p):
        return jax.lax.conv_general_dilated(
            x, w, (s, s), [(p, p), (p, p)],
            dimension_numbers=("NCHW", "OIHW", "NCHW"))

    def bn(x, g, b, m, v):
        r = lambda a: a[None, :, None, None]
        return (x - r(m)) / jnp.sqrt(r(v) + EPS) * r(g) + r(b)

    h = jax.nn.relu(bn(conv(x, w1, stride, 1), *bn1))
    out = bn(conv(h, w2, 1, 1), *bn2)
    cout, cin = w1.shape[0], w1.shape[1]
    if stride != 1 or cin != cout:
        sc = bn(conv(x, ws, stride, 0), *bns)
    else:
        sc = x
    return jax.nn.relu(out + sc)


def _check(out, ref):
    # bf16 MXU operands -> bf16-level tolerance.
    max_err = float(jnp.max(jnp.abs(out - ref)))
    ref_scale = float(jnp.max(jnp.abs(ref))) + 1e-6
    assert max_err <= 3e-2 * ref_scale + 1e-3, (max_err, ref_scale)


# ---------------------------------------------------------------------------
if __name__ == "__main__":
    key = jax.random.PRNGKey(0)
    ks = jax.random.split(key, 24)

    def rand_bn(k0, k1, k2, k3, c):
        return (jax.random.normal(k0, (c,)) * 0.1 + 1.0,                  # gamma
                jax.random.normal(k1, (c,)) * 0.1,                        # beta
                jax.random.normal(k2, (c,)) * 0.1,                        # mean
                jax.random.uniform(k3, (c,), minval=0.5, maxval=1.5))     # var

    # ---- test 1: projection shortcut (stride=2, Cin != Cout) ----
    N, Cin, Cout, H, W, stride = 2, 4, 8, 16, 16, 2
    x = jax.random.normal(ks[0], (N, Cin, H, W), jnp.float32)
    w1 = jax.random.normal(ks[1], (Cout, Cin, 3, 3), jnp.float32) * 0.2
    bn1 = rand_bn(ks[2], ks[3], ks[4], ks[5], Cout)
    w2 = jax.random.normal(ks[6], (Cout, Cout, 3, 3), jnp.float32) * 0.2
    bn2 = rand_bn(ks[7], ks[8], ks[9], ks[10], Cout)
    ws = jax.random.normal(ks[11], (Cout, Cin, 1, 1), jnp.float32) * 0.2
    bns = rand_bn(ks[12], ks[13], ks[14], ks[15], Cout)
    params = (w1, bn1, w2, bn2, ws, bns)

    out = jax.block_until_ready(residual_block_forward(x, params, stride))
    ref = _ref_forward(x, params, stride)
    assert out.shape == ref.shape == (N, Cout, H // stride, W // stride)
    _check(out, ref)

    # ---- test 2: identity shortcut (stride=1, Cin == Cout) ----
    C = 8
    x2 = jax.random.normal(ks[16], (N, C, H, W), jnp.float32)
    w1b = jax.random.normal(ks[17], (C, C, 3, 3), jnp.float32) * 0.2
    bn1b = rand_bn(ks[18], ks[19], ks[20], ks[21], C)
    w2b = jax.random.normal(ks[22], (C, C, 3, 3), jnp.float32) * 0.2
    bn2b = rand_bn(ks[23], ks[0], ks[1], ks[2], C)
    wsb = jnp.zeros((C, C, 1, 1), jnp.float32)          # unused (identity path)
    bnsb = (jnp.ones((C,)), jnp.zeros((C,)), jnp.zeros((C,)), jnp.ones((C,)))
    params2 = (w1b, bn1b, w2b, bn2b, wsb, bnsb)

    out2 = jax.block_until_ready(residual_block_forward(x2, params2, 1))
    ref2 = _ref_forward(x2, params2, 1)
    assert out2.shape == ref2.shape == (N, C, H, W)
    _check(out2, ref2)

    print("KERNEL_OK")
</pallas_src>

<mosaic_0001>
module attributes {stable_mosaic.version = 11 : i64} {
  func.func @body(%arg0: i32, %arg1: memref<4x9x9x8xbf16, #tpu.memory_space<vmem>>, %arg2: memref<9x8x128xbf16, #tpu.memory_space<vmem>>, %arg3: memref<1x128xf32, #tpu.memory_space<vmem>>, %arg4: memref<9x128x128xbf16, #tpu.memory_space<vmem>>, %arg5: memref<1x128xf32, #tpu.memory_space<vmem>>, %arg6: memref<8x128xbf16, #tpu.memory_space<vmem>>, %arg7: memref<1x8x8x128xf32, #tpu.memory_space<vmem>>, %arg8: memref<10x10x128xbf16, #tpu.memory_space<vmem>>) attributes {dimension_semantics = [#tpu.dimension_semantics<parallel>], iteration_bounds = array<i64: 2>, scalar_prefetch = 0 : i64, scratch_operands = 1 : i64, tpu.core_type = #tpu.core_type<tc>, window_params = [{transform_indices = @transform_0, window_bounds = array<i64: 4, 9, 9, 8>}, {pipeline_mode = #tpu.pipeline_mode<synchronous>, transform_indices = @transform_1, window_bounds = array<i64: 9, 8, 128>}, {pipeline_mode = #tpu.pipeline_mode<synchronous>, transform_indices = @transform_2, window_bounds = array<i64: 1, 128>}, {pipeline_mode = #tpu.pipeline_mode<synchronous>, transform_indices = @transform_3, window_bounds = array<i64: 9, 128, 128>}, {pipeline_mode = #tpu.pipeline_mode<synchronous>, transform_indices = @transform_4, window_bounds = array<i64: 1, 128>}, {pipeline_mode = #tpu.pipeline_mode<synchronous>, transform_indices = @transform_5, window_bounds = array<i64: 8, 128>}, {transform_indices = @transform_6, window_bounds = array<i64: 1, 8, 8, 128>}]} {
    %cst = arith.constant 0.000000e+00 : f32
    %0 = vector.broadcast %cst : f32 to vector<64x128xf32>
    %c0 = arith.constant 0 : index
    %c0_0 = arith.constant 0 : index
    %c0_1 = arith.constant 0 : index
    %c0_2 = arith.constant 0 : index
    %1 = vector.load %arg1[%c0, %c0_0, %c0_1, %c0_2] : memref<4x9x9x8xbf16, #tpu.memory_space<vmem>>, vector<1x8x8x8xbf16>
    %2 = vector.shape_cast %1 : vector<1x8x8x8xbf16> to vector<8x8x8xbf16>
    %3 = vector.shape_cast %2 : vector<8x8x8xbf16> to vector<64x8xbf16>
    %c0_3 = arith.constant 0 : index
    %c0_4 = arith.constant 0 : index
    %c0_5 = arith.constant 0 : index
    %4 = vector.load %arg2[%c0_3, %c0_4, %c0_5] : memref<9x8x128xbf16, #tpu.memory_space<vmem>>, vector<1x8x128xbf16>
    %5 = vector.shape_cast %4 : vector<1x8x128xbf16> to vector<8x128xbf16>
    %cst_6 = arith.constant dense<0.000000e+00> : vector<64x128xf32>
    %6 = tpu.matmul %3, %5, %cst_6 {dimension_numbers = #tpu.dot_dimension_numbers<[1], [0], [0], [1], [0, 0, 1, 1], [], []>} : vector<64x8xbf16>, vector<8x128xbf16>, vector<64x128xf32> -> vector<64x128xf32>
    %7 = arith.addf %0, %6 : vector<64x128xf32>
    %c1 = arith.constant 1 : index
    %c0_7 = arith.constant 0 : index
    %c0_8 = arith.constant 0 : index
    %c0_9 = arith.constant 0 : index
    %8 = vector.load %arg1[%c1, %c0_7, %c0_8, %c0_9] : memref<4x9x9x8xbf16, #tpu.memory_space<vmem>>, vector<1x8x8x8xbf16>
    %9 = vector.shape_cast %8 : vector<1x8x8x8xbf16> to vector<8x8x8xbf16>
    %10 = vector.shape_cast %9 : vector<8x8x8xbf16> to vector<64x8xbf16>
    %c1_10 = arith.constant 1 : index
    %c0_11 = arith.constant 0 : index
    %c0_12 = arith.constant 0 : index
    %11 = vector.load %arg2[%c1_10, %c0_11, %c0_12] : memref<9x8x128xbf16, #tpu.memory_space<vmem>>, vector<1x8x128xbf16>
    %12 = vector.shape_cast %11 : vector<1x8x128xbf16> to vector<8x128xbf16>
    %cst_13 = arith.constant dense<0.000000e+00> : vector<64x128xf32>
    %13 = tpu.matmul %10, %12, %cst_13 {dimension_numbers = #tpu.dot_dimension_numbers<[1], [0], [0], [1], [0, 0, 1, 1], [], []>} : vector<64x8xbf16>, vector<8x128xbf16>, vector<64x128xf32> -> vector<64x128xf32>
    %14 = arith.addf %7, %13 : vector<64x128xf32>
    %c0_14 = arith.constant 0 : index
    %c0_15 = arith.constant 0 : index
    %c1_16 = arith.constant 1 : index
    %c0_17 = arith.constant 0 : index
    %15 = vector.load %arg1[%c0_14, %c0_15, %c1_16, %c0_17] : memref<4x9x9x8xbf16, #tpu.memory_space<vmem>>, vector<1x8x8x8xbf16>
    %16 = vector.shape_cast %15 : vector<1x8x8x8xbf16> to vector<8x8x8xbf16>
    %17 = vector.shape_cast %16 : vector<8x8x8xbf16> to vector<64x8xbf16>
    %c2 = arith.constant 2 : index
    %c0_18 = arith.constant 0 : index
    %c0_19 = arith.constant 0 : index
    %18 = vector.load %arg2[%c2, %c0_18, %c0_19] : memref<9x8x128xbf16, #tpu.memory_space<vmem>>, vector<1x8x128xbf16>
    %19 = vector.shape_cast %18 : vector<1x8x128xbf16> to vector<8x128xbf16>
    %cst_20 = arith.constant dense<0.000000e+00> : vector<64x128xf32>
    %20 = tpu.matmul %17, %19, %cst_20 {dimension_numbers = #tpu.dot_dimension_numbers<[1], [0], [0], [1], [0, 0, 1, 1], [], []>} : vector<64x8xbf16>, vector<8x128xbf16>, vector<64x128xf32> -> vector<64x128xf32>
    %21 = arith.addf %14, %20 : vector<64x128xf32>
    %c2_21 = arith.constant 2 : index
    %c0_22 = arith.constant 0 : index
    %c0_23 = arith.constant 0 : index
    %c0_24 = arith.constant 0 : index
    %22 = vector.load %arg1[%c2_21, %c0_22, %c0_23, %c0_24] : memref<4x9x9x8xbf16, #tpu.memory_space<vmem>>, vector<1x8x8x8xbf16>
    %23 = vector.shape_cast %22 : vector<1x8x8x8xbf16> to vector<8x8x8xbf16>
    %24 = vector.shape_cast %23 : vector<8x8x8xbf16> to vector<64x8xbf16>
    %c3 = arith.constant 3 : index
    %c0_25 = arith.constant 0 : index
    %c0_26 = arith.constant 0 : index
    %25 = vector.load %arg2[%c3, %c0_25, %c0_26] : memref<9x8x128xbf16, #tpu.memory_space<vmem>>, vector<1x8x128xbf16>
    %26 = vector.shape_cast %25 : vector<1x8x128xbf16> to vector<8x128xbf16>
    %cst_27 = arith.constant dense<0.000000e+00> : vector<64x128xf32>
    %27 = tpu.matmul %24, %26, %cst_27 {dimension_numbers = #tpu.dot_dimension_numbers<[1], [0], [0], [1], [0, 0, 1, 1], [], []>} : vector<64x8xbf16>, vector<8x128xbf16>, vector<64x128xf32> -> vector<64x128xf32>
    %28 = arith.addf %21, %27 : vector<64x128xf32>
    %c3_28 = arith.constant 3 : index
    %c0_29 = arith.constant 0 : index
    %c0_30 = arith.constant 0 : index
    %c0_31 = arith.constant 0 : index
    %29 = vector.load %arg1[%c3_28, %c0_29, %c0_30, %c0_31] : memref<4x9x9x8xbf16, #tpu.memory_space<vmem>>, vector<1x8x8x8xbf16>
    %30 = vector.shape_cast %29 : vector<1x8x8x8xbf16> to vector<8x8x8xbf16>
    %31 = vector.shape_cast %30 : vector<8x8x8xbf16> to vector<64x8xbf16>
    %c4 = arith.constant 4 : index
    %c0_32 = arith.constant 0 : index
    %c0_33 = arith.constant 0 : index
    %32 = vector.load %arg2[%c4, %c0_32, %c0_33] : memref<9x8x128xbf16, #tpu.memory_space<vmem>>, vector<1x8x128xbf16>
    %33 = vector.shape_cast %32 : vector<1x8x128xbf16> to vector<8x128xbf16>
    %cst_34 = arith.constant dense<0.000000e+00> : vector<64x128xf32>
    %34 = tpu.matmul %31, %33, %cst_34 {dimension_numbers = #tpu.dot_dimension_numbers<[1], [0], [0], [1], [0, 0, 1, 1], [], []>} : vector<64x8xbf16>, vector<8x128xbf16>, vector<64x128xf32> -> vector<64x128xf32>
    %35 = arith.addf %28, %34 : vector<64x128xf32>
    %c2_35 = arith.constant 2 : index
    %c0_36 = arith.constant 0 : index
    %c1_37 = arith.constant 1 : index
    %c0_38 = arith.constant 0 : index
    %36 = vector.load %arg1[%c2_35, %c0_36, %c1_37, %c0_38] : memref<4x9x9x8xbf16, #tpu.memory_space<vmem>>, vector<1x8x8x8xbf16>
    %37 = vector.shape_cast %36 : vector<1x8x8x8xbf16> to vector<8x8x8xbf16>
    %38 = vector.shape_cast %37 : vector<8x8x8xbf16> to vector<64x8xbf16>
    %c5 = arith.constant 5 : index
    %c0_39 = arith.constant 0 : index
    %c0_40 = arith.constant 0 : index
    %39 = vector.load %arg2[%c5, %c0_39, %c0_40] : memref<9x8x128xbf16, #tpu.memory_space<vmem>>, vector<1x8x128xbf16>
    %40 = vector.shape_cast %39 : vector<1x8x128xbf16> to vector<8x128xbf16>
    %cst_41 = arith.constant dense<0.000000e+00> : vector<64x128xf32>
    %41 = tpu.matmul %38, %40, %cst_41 {dimension_numbers = #tpu.dot_dimension_numbers<[1], [0], [0], [1], [0, 0, 1, 1], [], []>} : vector<64x8xbf16>, vector<8x128xbf16>, vector<64x128xf32> -> vector<64x128xf32>
    %42 = arith.addf %35, %41 : vector<64x128xf32>
    %c0_42 = arith.constant 0 : index
    %c1_43 = arith.constant 1 : index
    %c0_44 = arith.constant 0 : index
    %c0_45 = arith.constant 0 : index
    %43 = vector.load %arg1[%c0_42, %c1_43, %c0_44, %c0_45] : memref<4x9x9x8xbf16, #tpu.memory_space<vmem>>, vector<1x8x8x8xbf16>
    %44 = vector.shape_cast %43 : vector<1x8x8x8xbf16> to vector<8x8x8xbf16>
    %45 = vector.shape_cast %44 : vector<8x8x8xbf16> to vector<64x8xbf16>
    %c6 = arith.constant 6 : index
    %c0_46 = arith.constant 0 : index
    %c0_47 = arith.constant 0 : index
    %46 = vector.load %arg2[%c6, %c0_46, %c0_47] : memref<9x8x128xbf16, #tpu.memory_space<vmem>>, vector<1x8x128xbf16>
    %47 = vector.shape_cast %46 : vector<1x8x128xbf16> to vector<8x128xbf16>
    %cst_48 = arith.constant dense<0.000000e+00> : vector<64x128xf32>
    %48 = tpu.matmul %45, %47, %cst_48 {dimension_numbers = #tpu.dot_dimension_numbers<[1], [0], [0], [1], [0, 0, 1, 1], [], []>} : vector<64x8xbf16>, vector<8x128xbf16>, vector<64x128xf32> -> vector<64x128xf32>
    %49 = arith.addf %42, %48 : vector<64x128xf32>
    %c1_49 = arith.constant 1 : index
    %c1_50 = arith.constant 1 : index
    %c0_51 = arith.constant 0 : index
    %c0_52 = arith.constant 0 : index
    %50 = vector.load %arg1[%c1_49, %c1_50, %c0_51, %c0_52] : memref<4x9x9x8xbf16, #tpu.memory_space<vmem>>, vector<1x8x8x8xbf16>
    %51 = vector.shape_cast %50 : vector<1x8x8x8xbf16> to vector<8x8x8xbf16>
    %52 = vector.shape_cast %51 : vector<8x8x8xbf16> to vector<64x8xbf16>
    %c7 = arith.constant 7 : index
    %c0_53 = arith.constant 0 : index
    %c0_54 = arith.constant 0 : index
    %53 = vector.load %arg2[%c7, %c0_53, %c0_54] : memref<9x8x128xbf16, #tpu.memory_space<vmem>>, vector<1x8x128xbf16>
    %54 = vector.shape_cast %53 : vector<1x8x128xbf16> to vector<8x128xbf16>
    %cst_55 = arith.constant dense<0.000000e+00> : vector<64x128xf32>
    %55 = tpu.matmul %52, %54, %cst_55 {dimension_numbers = #tpu.dot_dimension_numbers<[1], [0], [0], [1], [0, 0, 1, 1], [], []>} : vector<64x8xbf16>, vector<8x128xbf16>, vector<64x128xf32> -> vector<64x128xf32>
    %56 = arith.addf %49, %55 : vector<64x128xf32>
    %c0_56 = arith.constant 0 : index
    %c1_57 = arith.constant 1 : index
    %c1_58 = arith.constant 1 : index
    %c0_59 = arith.constant 0 : index
    %57 = vector.load %arg1[%c0_56, %c1_57, %c1_58, %c0_59] : memref<4x9x9x8xbf16, #tpu.memory_space<vmem>>, vector<1x8x8x8xbf16>
    %58 = vector.shape_cast %57 : vector<1x8x8x8xbf16> to vector<8x8x8xbf16>
    %59 = vector.shape_cast %58 : vector<8x8x8xbf16> to vector<64x8xbf16>
    %c8 = arith.constant 8 : index
    %c0_60 = arith.constant 0 : index
    %c0_61 = arith.constant 0 : index
    %60 = vector.load %arg2[%c8, %c0_60, %c0_61] : memref<9x8x128xbf16, #tpu.memory_space<vmem>>, vector<1x8x128xbf16>
    %61 = vector.shape_cast %60 : vector<1x8x128xbf16> to vector<8x128xbf16>
    %cst_62 = arith.constant dense<0.000000e+00> : vector<64x128xf32>
    %62 = tpu.matmul %59, %61, %cst_62 {dimension_numbers = #tpu.dot_dimension_numbers<[1], [0], [0], [1], [0, 0, 1, 1], [], []>} : vector<64x8xbf16>, vector<8x128xbf16>, vector<64x128xf32> -> vector<64x128xf32>
    %63 = arith.addf %56, %62 : vector<64x128xf32>
    %c0_63 = arith.constant 0 : index
    %c0_64 = arith.constant 0 : index
    %64 = vector.load %arg3[%c0_63, %c0_64] : memref<1x128xf32, #tpu.memory_space<vmem>>, vector<1x128xf32>
    %65 = vector.broadcast %64 : vector<1x128xf32> to vector<64x128xf32>
    %66 = arith.addf %63, %65 : vector<64x128xf32>
    %cst_65 = arith.constant 0.000000e+00 : f32
    %67 = vector.broadcast %cst_65 : f32 to vector<64x128xf32>
    %68 = arith.maximumf %66, %67 : vector<64x128xf32>
    %69 = arith.truncf %68 : vector<64x128xf32> to vector<64x128xbf16>
    %cst_66 = arith.constant 0.000000e+00 : bf16
    %70 = vector.broadcast %cst_66 : bf16 to vector<10x10x128xbf16>
    %c0_67 = arith.constant 0 : index
    %c0_68 = arith.constant 0 : index
    %c0_69 = arith.constant 0 : index
    %71 = vector.load %arg8[%c0_67, %c0_68, %c0_69] : memref<10x10x128xbf16, #tpu.memory_space<vmem>>, vector<10x10x128xbf16>
    tpu.vector_store %arg8[%c0_67, %c0_68, %c0_69], %70 {strides = array<i32>} : memref<10x10x128xbf16, #tpu.memory_space<vmem>>, vector<10x10x128xbf16>,
    %72 = vector.shape_cast %69 : vector<64x128xbf16> to vector<8x8x128xbf16>
    %c1_70 = arith.constant 1 : index
    %c1_71 = arith.constant 1 : index
    %c0_72 = arith.constant 0 : index
    %73 = vector.load %arg8[%c1_70, %c1_71, %c0_72] : memref<10x10x128xbf16, #tpu.memory_space<vmem>>, vector<8x8x128xbf16>
    tpu.vector_store %arg8[%c1_70, %c1_71, %c0_72], %72 {strides = array<i32>} : memref<10x10x128xbf16, #tpu.memory_space<vmem>>, vector<8x8x128xbf16>,
    %cst_73 = arith.constant 0.000000e+00 : f32
    %74 = vector.broadcast %cst_73 : f32 to vector<64x128xf32>
    %c0_74 = arith.constant 0 : index
    %c0_75 = arith.constant 0 : index
    %c0_76 = arith.constant 0 : index
    %75 = vector.load %arg8[%c0_74, %c0_75, %c0_76] : memref<10x10x128xbf16, #tpu.memory_space<vmem>>, vector<8x8x128xbf16>
    %76 = vector.shape_cast %75 : vector<8x8x128xbf16> to vector<64x128xbf16>
    %c0_77 = arith.constant 0 : index
    %c0_78 = arith.constant 0 : index
    %c0_79 = arith.constant 0 : index
    %77 = vector.load %arg4[%c0_77, %c0_78, %c0_79] : memref<9x128x128xbf16, #tpu.memory_space<vmem>>, vector<1x128x128xbf16>
    %78 = vector.shape_cast %77 : vector<1x128x128xbf16> to vector<128x128xbf16>
    %cst_80 = arith.constant dense<0.000000e+00> : vector<64x128xf32>
    %79 = tpu.matmul %76, %78, %cst_80 {dimension_numbers = #tpu.dot_dimension_numbers<[1], [0], [0], [1], [0, 0, 1, 1], [], []>} : vector<64x128xbf16>, vector<128x128xbf16>, vector<64x128xf32> -> vector<64x128xf32>
    %80 = arith.addf %74, %79 : vector<64x128xf32>
    %c0_81 = arith.constant 0 : index
    %c1_82 = arith.constant 1 : index
    %c0_83 = arith.constant 0 : index
    %81 = vector.load %arg8[%c0_81, %c1_82, %c0_83] : memref<10x10x128xbf16, #tpu.memory_space<vmem>>, vector<8x8x128xbf16>
    %82 = vector.shape_cast %81 : vector<8x8x128xbf16> to vector<64x128xbf16>
    %c1_84 = arith.constant 1 : index
    %c0_85 = arith.constant 0 : index
    %c0_86 = arith.constant 0 : index
    %83 = vector.load %arg4[%c1_84, %c0_85, %c0_86] : memref<9x128x128xbf16, #tpu.memory_space<vmem>>, vector<1x128x128xbf16>
    %84 = vector.shape_cast %83 : vector<1x128x128xbf16> to vector<128x128xbf16>
    %cst_87 = arith.constant dense<0.000000e+00> : vector<64x128xf32>
    %85 = tpu.matmul %82, %84, %cst_87 {dimension_numbers = #tpu.dot_dimension_numbers<[1], [0], [0], [1], [0, 0, 1, 1], [], []>} : vector<64x128xbf16>, vector<128x128xbf16>, vector<64x128xf32> -> vector<64x128xf32>
    %86 = arith.addf %80, %85 : vector<64x128xf32>
    %c0_88 = arith.constant 0 : index
    %c2_89 = arith.constant 2 : index
    %c0_90 = arith.constant 0 : index
    %87 = vector.load %arg8[%c0_88, %c2_89, %c0_90] : memref<10x10x128xbf16, #tpu.memory_space<vmem>>, vector<8x8x128xbf16>
    %88 = vector.shape_cast %87 : vector<8x8x128xbf16> to vector<64x128xbf16>
    %c2_91 = arith.constant 2 : index
    %c0_92 = arith.constant 0 : index
    %c0_93 = arith.constant 0 : index
    %89 = vector.load %arg4[%c2_91, %c0_92, %c0_93] : memref<9x128x128xbf16, #tpu.memory_space<vmem>>, vector<1x128x128xbf16>
    %90 = vector.shape_cast %89 : vector<1x128x128xbf16> to vector<128x128xbf16>
    %cst_94 = arith.constant dense<0.000000e+00> : vector<64x128xf32>
    %91 = tpu.matmul %88, %90, %cst_94 {dimension_numbers = #tpu.dot_dimension_numbers<[1], [0], [0], [1], [0, 0, 1, 1], [], []>} : vector<64x128xbf16>, vector<128x128xbf16>, vector<64x128xf32> -> vector<64x128xf32>
    %92 = arith.addf %86, %91 : vector<64x128xf32>
    %c1_95 = arith.constant 1 : index
    %c0_96 = arith.constant 0 : index
    %c0_97 = arith.constant 0 : index
    %93 = vector.load %arg8[%c1_95, %c0_96, %c0_97] : memref<10x10x128xbf16, #tpu.memory_space<vmem>>, vector<8x8x128xbf16>
    %94 = vector.shape_cast %93 : vector<8x8x128xbf16> to vector<64x128xbf16>
    %c3_98 = arith.constant 3 : index
    %c0_99 = arith.constant 0 : index
    %c0_100 = arith.constant 0 : index
    %95 = vector.load %arg4[%c3_98, %c0_99, %c0_100] : memref<9x128x128xbf16, #tpu.memory_space<vmem>>, vector<1x128x128xbf16>
    %96 = vector.shape_cast %95 : vector<1x128x128xbf16> to vector<128x128xbf16>
    %cst_101 = arith.constant dense<0.000000e+00> : vector<64x128xf32>
    %97 = tpu.matmul %94, %96, %cst_101 {dimension_numbers = #tpu.dot_dimension_numbers<[1], [0], [0], [1], [0, 0, 1, 1], [], []>} : vector<64x128xbf16>, vector<128x128xbf16>, vector<64x128xf32> -> vector<64x128xf32>
    %98 = arith.addf %92, %97 : vector<64x128xf32>
    %c1_102 = arith.constant 1 : index
    %c1_103 = arith.constant 1 : index
    %c0_104 = arith.constant 0 : index
    %99 = vector.load %arg8[%c1_102, %c1_103, %c0_104] : memref<10x10x128xbf16, #tpu.memory_space<vmem>>, vector<8x8x128xbf16>
    %100 = vector.shape_cast %99 : vector<8x8x128xbf16> to vector<64x128xbf16>
    %c4_105 = arith.constant 4 : index
    %c0_106 = arith.constant 0 : index
    %c0_107 = arith.constant 0 : index
    %101 = vector.load %arg4[%c4_105, %c0_106, %c0_107] : memref<9x128x128xbf16, #tpu.memory_space<vmem>>, vector<1x128x128xbf16>
    %102 = vector.shape_cast %101 : vector<1x128x128xbf16> to vector<128x128xbf16>
    %cst_108 = arith.constant dense<0.000000e+00> : vector<64x128xf32>
    %103 = tpu.matmul %100, %102, %cst_108 {dimension_numbers = #tpu.dot_dimension_numbers<[1], [0], [0], [1], [0, 0, 1, 1], [], []>} : vector<64x128xbf16>, vector<128x128xbf16>, vector<64x128xf32> -> vector<64x128xf32>
    %104 = arith.addf %98, %103 : vector<64x128xf32>
    %c1_109 = arith.constant 1 : index
    %c2_110 = arith.constant 2 : index
    %c0_111 = arith.constant 0 : index
    %105 = vector.load %arg8[%c1_109, %c2_110, %c0_111] : memref<10x10x128xbf16, #tpu.memory_space<vmem>>, vector<8x8x128xbf16>
    %106 = vector.shape_cast %105 : vector<8x8x128xbf16> to vector<64x128xbf16>
    %c5_112 = arith.constant 5 : index
    %c0_113 = arith.constant 0 : index
    %c0_114 = arith.constant 0 : index
    %107 = vector.load %arg4[%c5_112, %c0_113, %c0_114] : memref<9x128x128xbf16, #tpu.memory_space<vmem>>, vector<1x128x128xbf16>
    %108 = vector.shape_cast %107 : vector<1x128x128xbf16> to vector<128x128xbf16>
    %cst_115 = arith.constant dense<0.000000e+00> : vector<64x128xf32>
    %109 = tpu.matmul %106, %108, %cst_115 {dimension_numbers = #tpu.dot_dimension_numbers<[1], [0], [0], [1], [0, 0, 1, 1], [], []>} : vector<64x128xbf16>, vector<128x128xbf16>, vector<64x128xf32> -> vector<64x128xf32>
    %110 = arith.addf %104, %109 : vector<64x128xf32>
    %c2_116 = arith.constant 2 : index
    %c0_117 = arith.constant 0 : index
    %c0_118 = arith.constant 0 : index
    %111 = vector.load %arg8[%c2_116, %c0_117, %c0_118] : memref<10x10x128xbf16, #tpu.memory_space<vmem>>, vector<8x8x128xbf16>
    %112 = vector.shape_cast %111 : vector<8x8x128xbf16> to vector<64x128xbf16>
    %c6_119 = arith.constant 6 : index
    %c0_120 = arith.constant 0 : index
    %c0_121 = arith.constant 0 : index
    %113 = vector.load %arg4[%c6_119, %c0_120, %c0_121] : memref<9x128x128xbf16, #tpu.memory_space<vmem>>, vector<1x128x128xbf16>
    %114 = vector.shape_cast %113 : vector<1x128x128xbf16> to vector<128x128xbf16>
    %cst_122 = arith.constant dense<0.000000e+00> : vector<64x128xf32>
    %115 = tpu.matmul %112, %114, %cst_122 {dimension_numbers = #tpu.dot_dimension_numbers<[1], [0], [0], [1], [0, 0, 1, 1], [], []>} : vector<64x128xbf16>, vector<128x128xbf16>, vector<64x128xf32> -> vector<64x128xf32>
    %116 = arith.addf %110, %115 : vector<64x128xf32>
    %c2_123 = arith.constant 2 : index
    %c1_124 = arith.constant 1 : index
    %c0_125 = arith.constant 0 : index
    %117 = vector.load %arg8[%c2_123, %c1_124, %c0_125] : memref<10x10x128xbf16, #tpu.memory_space<vmem>>, vector<8x8x128xbf16>
    %118 = vector.shape_cast %117 : vector<8x8x128xbf16> to vector<64x128xbf16>
    %c7_126 = arith.constant 7 : index
    %c0_127 = arith.constant 0 : index
    %c0_128 = arith.constant 0 : index
    %119 = vector.load %arg4[%c7_126, %c0_127, %c0_128] : memref<9x128x128xbf16, #tpu.memory_space<vmem>>, vector<1x128x128xbf16>
    %120 = vector.shape_cast %119 : vector<1x128x128xbf16> to vector<128x128xbf16>
    %cst_129 = arith.constant dense<0.000000e+00> : vector<64x128xf32>
    %121 = tpu.matmul %118, %120, %cst_129 {dimension_numbers = #tpu.dot_dimension_numbers<[1], [0], [0], [1], [0, 0, 1, 1], [], []>} : vector<64x128xbf16>, vector<128x128xbf16>, vector<64x128xf32> -> vector<64x128xf32>
    %122 = arith.addf %116, %121 : vector<64x128xf32>
    %c2_130 = arith.constant 2 : index
    %c2_131 = arith.constant 2 : index
    %c0_132 = arith.constant 0 : index
    %123 = vector.load %arg8[%c2_130, %c2_131, %c0_132] : memref<10x10x128xbf16, #tpu.memory_space<vmem>>, vector<8x8x128xbf16>
    %124 = vector.shape_cast %123 : vector<8x8x128xbf16> to vector<64x128xbf16>
    %c8_133 = arith.constant 8 : index
    %c0_134 = arith.constant 0 : index
    %c0_135 = arith.constant 0 : index
    %125 = vector.load %arg4[%c8_133, %c0_134, %c0_135] : memref<9x128x128xbf16, #tpu.memory_space<vmem>>, vector<1x128x128xbf16>
    %126 = vector.shape_cast %125 : vector<1x128x128xbf16> to vector<128x128xbf16>
    %cst_136 = arith.constant dense<0.000000e+00> : vector<64x128xf32>
    %127 = tpu.matmul %124, %126, %cst_136 {dimension_numbers = #tpu.dot_dimension_numbers<[1], [0], [0], [1], [0, 0, 1, 1], [], []>} : vector<64x128xbf16>, vector<128x128xbf16>, vector<64x128xf32> -> vector<64x128xf32>
    %128 = arith.addf %122, %127 : vector<64x128xf32>
    %c3_137 = arith.constant 3 : index
    %c0_138 = arith.constant 0 : index
    %c0_139 = arith.constant 0 : index
    %c0_140 = arith.constant 0 : index
    %129 = vector.load %arg1[%c3_137, %c0_138, %c0_139, %c0_140] : memref<4x9x9x8xbf16, #tpu.memory_space<vmem>>, vector<1x8x8x8xbf16>
    %130 = vector.shape_cast %129 : vector<1x8x8x8xbf16> to vector<8x8x8xbf16>
    %131 = vector.shape_cast %130 : vector<8x8x8xbf16> to vector<64x8xbf16>
    %c0_141 = arith.constant 0 : index
    %c0_142 = arith.constant 0 : index
    %132 = vector.load %arg6[%c0_141, %c0_142] : memref<8x128xbf16, #tpu.memory_space<vmem>>, vector<8x128xbf16>
    %cst_143 = arith.constant dense<0.000000e+00> : vector<64x128xf32>
    %133 = tpu.matmul %131, %132, %cst_143 {dimension_numbers = #tpu.dot_dimension_numbers<[1], [0], [0], [1], [0, 0, 1, 1], [], []>} : vector<64x8xbf16>, vector<8x128xbf16>, vector<64x128xf32> -> vector<64x128xf32>
    %134 = arith.addf %128, %133 : vector<64x128xf32>
    %c0_144 = arith.constant 0 : index
    %c0_145 = arith.constant 0 : index
    %135 = vector.load %arg5[%c0_144, %c0_145] : memref<1x128xf32, #tpu.memory_space<vmem>>, vector<1x128xf32>
    %136 = vector.broadcast %135 : vector<1x128xf32> to vector<64x128xf32>
    %137 = arith.addf %134, %136 : vector<64x128xf32>
    %cst_146 = arith.constant 0.000000e+00 : f32
    %138 = vector.broadcast %cst_146 : f32 to vector<64x128xf32>
    %139 = arith.maximumf %137, %138 : vector<64x128xf32>
    %140 = vector.shape_cast %139 : vector<64x128xf32> to vector<8x8x128xf32>
    %c0_147 = arith.constant 0 : index
    %c0_148 = arith.constant 0 : index
    %c0_149 = arith.constant 0 : index
    %c0_150 = arith.constant 0 : index
    %141 = vector.load %arg7[%c0_147, %c0_148, %c0_149, %c0_150] : memref<1x8x8x128xf32, #tpu.memory_space<vmem>>, vector<1x8x8x128xf32>
    %142 = vector.shape_cast %141 : vector<1x8x8x128xf32> to vector<8x8x128xf32>
    %143 = vector.shape_cast %140 : vector<8x8x128xf32> to vector<1x8x8x128xf32>
    tpu.vector_store %arg7[%c0_147, %c0_148, %c0_149, %c0_150], %143 {strides = array<i32>} : memref<1x8x8x128xf32, #tpu.memory_space<vmem>>, vector<1x8x8x128xf32>,
    return
  }
  func.func @transform_0(%arg0: i32) -> (i32, i32, i32, i32) {
    %c0_i32 = arith.constant 0 : i32
    %c0_i32_0 = arith.constant 0 : i32
    %c0_i32_1 = arith.constant 0 : i32
    %c0_i32_2 = arith.constant 0 : i32
    return %arg0, %c0_i32, %c0_i32_0, %c0_i32_1 : i32, i32, i32, i32
  }
  func.func @transform_1(%arg0: i32) -> (i32, i32, i32) {
    %c0_i32 = arith.constant 0 : i32
    %c0_i32_0 = arith.constant 0 : i32
    %c0_i32_1 = arith.constant 0 : i32
    %c0_i32_2 = arith.constant 0 : i32
    return %c0_i32, %c0_i32_0, %c0_i32_1 : i32, i32, i32
  }
  func.func @transform_2(%arg0: i32) -> (i32, i32) {
    %c0_i32 = arith.constant 0 : i32
    %c0_i32_0 = arith.constant 0 : i32
    %c0_i32_1 = arith.constant 0 : i32
    return %c0_i32, %c0_i32_0 : i32, i32
  }
  func.func @transform_3(%arg0: i32) -> (i32, i32, i32) {
    %c0_i32 = arith.constant 0 : i32
    %c0_i32_0 = arith.constant 0 : i32
    %c0_i32_1 = arith.constant 0 : i32
    %c0_i32_2 = arith.constant 0 : i32
    return %c0_i32, %c0_i32_0, %c0_i32_1 : i32, i32, i32
  }
  func.func @transform_4(%arg0: i32) -> (i32, i32) {
    %c0_i32 = arith.constant 0 : i32
    %c0_i32_0 = arith.constant 0 : i32
    %c0_i32_1 = arith.constant 0 : i32
    return %c0_i32, %c0_i32_0 : i32, i32
  }
  func.func @transform_5(%arg0: i32) -> (i32, i32) {
    %c0_i32 = arith.constant 0 : i32
    %c0_i32_0 = arith.constant 0 : i32
    %c0_i32_1 = arith.constant 0 : i32
    return %c0_i32, %c0_i32_0 : i32, i32
  }
  func.func @transform_6(%arg0: i32) -> (i32, i32, i32, i32) {
    %c0_i32 = arith.constant 0 : i32
    %c0_i32_0 = arith.constant 0 : i32
    %c0_i32_1 = arith.constant 0 : i32
    %c0_i32_2 = arith.constant 0 : i32
    return %arg0, %c0_i32, %c0_i32_0, %c0_i32_1 : i32, i32, i32, i32
  }
}

</mosaic_0001>

<llo_original>
// kernel: residual_block_forward.1
$region0: #{residual_block_forward.1}
  #allocation0 [shape = 'u32[]', space=smem, size = 0x4, offset = 0x4, fixed_abs, tag = 'smem constant byte address 0x4 - core index']
  #allocation1 [shape = 'u32[144,128]{1,0:T(1,128)}', space=vmem, size = 0x12000, scoped, tag = 'internal scratch']
  #allocation2 [shape = 'bf16[10,10,128]{2,1,0:T(8,128)(2,1)}', space=vmem, size = 0xa000, scoped, tag = 'scratch operand']
  %s0 = inlined_call_operand.vmem [shape: bf16[8,9,9,8], index: 0, kind: input, shape index: {}]
  %s1 = inlined_call_operand.vmem [shape: bf16[9,8,128], index: 1, kind: input, shape index: {}]
  %s2 = inlined_call_operand.vmem [shape: f32[1,128], index: 2, kind: input, shape index: {}]
  %s3 = inlined_call_operand.vmem [shape: bf16[9,128,128], index: 3, kind: input, shape index: {}]
  %s4 = inlined_call_operand.vmem [shape: f32[1,128], index: 4, kind: input, shape index: {}]
  %s5 = inlined_call_operand.vmem [shape: bf16[8,128], index: 5, kind: input, shape index: {}]
  %s6 = inlined_call_operand.vmem [shape: f32[2,8,8,128], index: 6, kind: output, shape index: {}]
  %s7 = sld [smem:[#allocation0]]
  $region57: #{residual_block_forward.1} parent=0
    _
  %s9 = ssub.s32 1, %s7
  %s10 = scalar_select 0, %s9, %s7
  loop: start=0, step=1, limit=4
  $region2: #{residual_block_forward.1} parent=0 // loop_pre_header
    _
  $region3: #{residual_block_forward.1} parent=0 // loop_header
    %s12 = sphi 0, %s16
    %p13 = scmp.ge.s32.totalorder %s12, 4
    %s22 = sphi 0, %s24
    %s25 = sphi 0, %s22
    %s26 = sphi 0, %s25
    %s42 = sphi 0, %s26
    %s46 = sphi 0, %s46
    %s48 = sphi 0, %s46
    %s49 = sphi 0, %s48
    %s63 = sphi 0, %s49
    %s67 = sphi 0, %s67
    %s69 = sphi 0, %s67
    %s70 = sphi 0, %s69
    %s84 = sphi 0, %s70
    %s88 = sphi 0, %s88
    %s90 = sphi 0, %s88
    %s91 = sphi 0, %s90
    %s105 = sphi 0, %s91
    %s109 = sphi 0, %s109
    %s111 = sphi 0, %s109
    %s112 = sphi 0, %s111
    %s126 = sphi 0, %s112
    %s130 = sphi 0, %s130
    %s132 = sphi 0, %s130
    %s133 = sphi 0, %s132
    %s147 = sphi 0, %s133
    %s153 = sphi 0, %s155
    %s156 = sphi 0, %s153
    %s157 = sphi 0, %s156
    %s173 = sphi 0, %s157
  $region4: #{residual_block_forward.1} parent=0 // loop_header_branch
    %15 = sbr.rel (%p13) target = $region8
  $region5: #{residual_block_forward.1} parent=0 // loop_body
    %s17 = ssub.s32 %s12, 1
    %s18 = ssub.s32 %s12, 2
    %s19 = sadd.s32 %s12, 1
    %s20 = ssub.s32 %s12, %s19
    %p21 = scmp.eq.s32.totalorder %s20, 0
    %s23 = sadd.s32 %s22, 1
    %s24 = scalar_select %p21, %s22, %s23
    %p27 = pneg %p21
    %p28 = scmp.eq.s32.totalorder %s12, 1
    %p29 = por %p27, %p28
    %p30 = scmp.ne.s32.totalorder %s22, %s25
    %p31 = scmp.eq.s32.totalorder %s12, 0
    %p32 = por %p30, %p31
    %p33 = scmp.ne.s32.totalorder %s22, %s25
    %p34 = scmp.eq.s32.totalorder %s17, 1
    %p35 = por %p33, %p34
    %p36 = scmp.ne.s32.totalorder %s25, %s26
    %p37 = scmp.eq.s32.totalorder %s17, 0
    %p38 = por %p36, %p37
    %p39 = scmp.ne.s32.totalorder %s25, %s26
    %p40 = scmp.eq.s32.totalorder %s18, 1
    %p41 = por %p39, %p40
    %p43 = scmp.ne.s32.totalorder %s26, %s42
    %p44 = scmp.eq.s32.totalorder %s18, 0
    %p45 = por %p43, %p44
    %s47 = sadd.s32 %s46, 1
    %p50 = scmp.eq.s32.totalorder %s12, 1
    %p51 = scmp.ne.s32.totalorder %s46, %s48
    %p52 = scmp.eq.s32.totalorder %s12, 0
    %p53 = por %p51, %p52
    %p54 = scmp.ne.s32.totalorder %s46, %s48
    %p55 = scmp.eq.s32.totalorder %s17, 1
    %p56 = por %p54, %p55
    %p57 = scmp.ne.s32.totalorder %s48, %s49
    %p58 = scmp.eq.s32.totalorder %s17, 0
    %p59 = por %p57, %p58
    %p60 = scmp.ne.s32.totalorder %s48, %s49
    %p61 = scmp.eq.s32.totalorder %s18, 1
    %p62 = por %p60, %p61
    %p64 = scmp.ne.s32.totalorder %s49, %s63
    %p65 = scmp.eq.s32.totalorder %s18, 0
    %p66 = por %p64, %p65
    %s68 = sadd.s32 %s67, 1
    %p71 = scmp.eq.s32.totalorder %s12, 1
    %p72 = scmp.ne.s32.totalorder %s67, %s69
    %p73 = scmp.eq.s32.totalorder %s12, 0
    %p74 = por %p72, %p73
    %p75 = scmp.ne.s32.totalorder %s67, %s69
    %p76 = scmp.eq.s32.totalorder %s17, 1
    %p77 = por %p75, %p76
    %p78 = scmp.ne.s32.totalorder %s69, %s70
    %p79 = scmp.eq.s32.totalorder %s17, 0
    %p80 = por %p78, %p79
    %p81 = scmp.ne.s32.totalorder %s69, %s70
    %p82 = scmp.eq.s32.totalorder %s18, 1
    %p83 = por %p81, %p82
    %p85 = scmp.ne.s32.totalorder %s70, %s84
    %p86 = scmp.eq.s32.totalorder %s18, 0
    %p87 = por %p85, %p86
    %s89 = sadd.s32 %s88, 1
    %p92 = scmp.eq.s32.totalorder %s12, 1
    %p93 = scmp.ne.s32.totalorder %s88, %s90
    %p94 = scmp.eq.s32.totalorder %s12, 0
    %p95 = por %p93, %p94
    %p96 = scmp.ne.s32.totalorder %s88, %s90
    %p97 = scmp.eq.s32.totalorder %s17, 1
    %p98 = por %p96, %p97
    %p99 = scmp.ne.s32.totalorder %s90, %s91
    %p100 = scmp.eq.s32.totalorder %s17, 0
    %p101 = por %p99, %p100
    %p102 = scmp.ne.s32.totalorder %s90, %s91
    %p103 = scmp.eq.s32.totalorder %s18, 1
    %p104 = por %p102, %p103
    %p106 = scmp.ne.s32.totalorder %s91, %s105
    %p107 = scmp.eq.s32.totalorder %s18, 0
    %p108 = por %p106, %p107
    %s110 = sadd.s32 %s109, 1
    %p113 = scmp.eq.s32.totalorder %s12, 1
    %p114 = scmp.ne.s32.totalorder %s109, %s111
    %p115 = scmp.eq.s32.totalorder %s12, 0
    %p116 = por %p114, %p115
    %p117 = scmp.ne.s32.totalorder %s109, %s111
    %p118 = scmp.eq.s32.totalorder %s17, 1
    %p119 = por %p117, %p118
    %p120 = scmp.ne.s32.totalorder %s111, %s112
    %p121 = scmp.eq.s32.totalorder %s17, 0
    %p122 = por %p120, %p121
    %p123 = scmp.ne.s32.totalorder %s111, %s112
    %p124 = scmp.eq.s32.totalorder %s18, 1
    %p125 = por %p123, %p124
    %p127 = scmp.ne.s32.totalorder %s112, %s126
    %p128 = scmp.eq.s32.totalorder %s18, 0
    %p129 = por %p127, %p128
    %s131 = sadd.s32 %s130, 1
    %p134 = scmp.eq.s32.totalorder %s12, 1
    %p135 = scmp.ne.s32.totalorder %s130, %s132
    %p136 = scmp.eq.s32.totalorder %s12, 0
    %p137 = por %p135, %p136
    %p138 = scmp.ne.s32.totalorder %s130, %s132
    %p139 = scmp.eq.s32.totalorder %s17, 1
    %p140 = por %p138, %p139
    %p141 = scmp.ne.s32.totalorder %s132, %s133
    %p142 = scmp.eq.s32.totalorder %s17, 0
    %p143 = por %p141, %p142
    %p144 = scmp.ne.s32.totalorder %s132, %s133
    %p145 = scmp.eq.s32.totalorder %s18, 1
    %p146 = por %p144, %p145
    %p148 = scmp.ne.s32.totalorder %s133, %s147
    %p149 = scmp.eq.s32.totalorder %s18, 0
    %p150 = por %p148, %p149
    %s151 = ssub.s32 %s12, %s19
    %p152 = scmp.eq.s32.totalorder %s151, 0
    %s154 = sadd.s32 %s153, 1
    %s155 = scalar_select %p152, %s153, %s154
    %p158 = pneg %p152
    %p159 = scmp.eq.s32.totalorder %s12, 1
    %p160 = por %p158, %p159
    %p161 = scmp.ne.s32.totalorder %s153, %s156
    %p162 = scmp.eq.s32.totalorder %s12, 0
    %p163 = por %p161, %p162
    %p164 = scmp.ne.s32.totalorder %s153, %s156
    %p165 = scmp.eq.s32.totalorder %s17, 1
    %p166 = por %p164, %p165
    %p167 = scmp.ne.s32.totalorder %s156, %s157
    %p168 = scmp.eq.s32.totalorder %s17, 0
    %p169 = por %p167, %p168
    %p170 = scmp.ne.s32.totalorder %s156, %s157
    %p171 = scmp.eq.s32.totalorder %s18, 1
    %p172 = por %p170, %p171
    %p174 = scmp.ne.s32.totalorder %s157, %s173
    %p175 = scmp.eq.s32.totalorder %s18, 0
    %p176 = por %p174, %p175
    %p177 = scmp.le.s32.totalorder 1, %s12
    %p178 = scmp.lt.s32.totalorder %s12, 3
    %p179 = pnand %p177, %p178
    %p180 = pneg %p179
    // Predicated region
    $region9: #{residual_block_forward.1} parent=5 // pred_check
      _
    $region10: #{residual_block_forward.1} parent=5 // pred_check_branch
      %182 = sbr.rel (%p179) target = $region12
    $region11: #{residual_block_forward.1} parent=5 // pred_region
      %s183 = ssub.s32 %s12, 1
      // Predicated region
      $region13: #{residual_block_forward.1} parent=11 // pred_check
        %p184 = pneg %p59
      $region14: #{residual_block_forward.1} parent=11 // pred_check_branch
        %186 = sbr.rel (%p184) target = $region16
      $region15: #{residual_block_forward.1} parent=11 // pred_region
        _
      $region16: #{residual_block_forward.1} parent=11 // pred_fallthru
        _
      // Predicated region
      $region17: #{residual_block_forward.1} parent=11 // pred_check
        %p187 = pneg %p80
      $region18: #{residual_block_forward.1} parent=11 // pred_check_branch
        %189 = sbr.rel (%p187) target = $region20
      $region19: #{residual_block_forward.1} parent=11 // pred_region
        _
      $region20: #{residual_block_forward.1} parent=11 // pred_fallthru
        _
      // Predicated region
      $region21: #{residual_block_forward.1} parent=11 // pred_check
        %p190 = pneg %p101
      $region22: #{residual_block_forward.1} parent=11 // pred_check_branch
        %192 = sbr.rel (%p190) target = $region24
      $region23: #{residual_block_forward.1} parent=11 // pred_region
        _
      $region24: #{residual_block_forward.1} parent=11 // pred_fallthru
        _
      // Predicated region
      $region25: #{residual_block_forward.1} parent=11 // pred_check
        %p193 = pneg %p122
      $region26: #{residual_block_forward.1} parent=11 // pred_check_branch
        %195 = sbr.rel (%p193) target = $region28
      $region27: #{residual_block_forward.1} parent=11 // pred_region
        _
      $region28: #{residual_block_forward.1} parent=11 // pred_fallthru
        _
      // Predicated region
      $region29: #{residual_block_forward.1} parent=11 // pred_check
        %p196 = pneg %p143
      $region30: #{residual_block_forward.1} parent=11 // pred_check_branch
        %198 = sbr.rel (%p196) target = $region32
      $region31: #{residual_block_forward.1} parent=11 // pred_region
        _
      $region32: #{residual_block_forward.1} parent=11 // pred_fallthru
        _
    $region12: #{residual_block_forward.1} parent=5 // pred_fallthru
      _
    %p199 = scmp.lt.s32.totalorder %s12, 2
    // Predicated region
    $region33: #{residual_block_forward.1} parent=5 // pred_check
      %p200 = pneg %p199
    $region34: #{residual_block_forward.1} parent=5 // pred_check_branch
      %202 = sbr.rel (%p200) target = $region36
    $region35: #{residual_block_forward.1} parent=5 // pred_region
      // Predicated region
      $region37: #{residual_block_forward.1} parent=35 // pred_check
        %p203 = pneg %p32
      $region38: #{residual_block_forward.1} parent=35 // pred_check_branch
        %205 = sbr.rel (%p203) target = $region40
      $region39: #{residual_block_forward.1} parent=35 // pred_region
        %s206 = smul.u32 4, %s12
        %p207 = scmp.lt.s32.totalorder %s206, 7
        %s208 = scalar_select %p207, %s206, 7
        %s209 = smul.addr %s208, 18
        %s210 = smul.addr %s209, 4
        %s211 = scalar_lea.vmem %s0, %s210
        %s212 = smul.u32 4, %s12
      $region40: #{residual_block_forward.1} parent=35 // pred_fallthru
        _
    $region36: #{residual_block_forward.1} parent=5 // pred_fallthru
      _
    %p213 = scmp.le.s32.totalorder 1, %s12
    %p214 = scmp.lt.s32.totalorder %s12, 3
    %p215 = pnand %p213, %p214
    %p216 = pneg %p215
    // Predicated region
    $region41: #{residual_block_forward.1} parent=5 // pred_check
      _
    $region42: #{residual_block_forward.1} parent=5 // pred_check_branch
      %218 = sbr.rel (%p215) target = $region44
    $region43: #{residual_block_forward.1} parent=5 // pred_region
      %s219 = ssub.s32 %s12, 1
      %s220 = smul.u32 4, %s17
      %p221 = scmp.lt.s32.totalorder %s220, 7
      %s222 = scalar_select %p221, %s220, 7
      %s223 = smul.addr %s222, 18
      %s224 = smul.addr %s223, 4
      %s225 = scalar_lea.vmem %s0, %s224
      %p226 = pneg %p38
      %p227 = pneg %p35
      %p228 = pneg %p59
      %p229 = pneg %p56
      %p230 = pneg %p80
      %p231 = pneg %p77
      %p232 = pneg %p101
      %p233 = pneg %p98
      %p234 = pneg %p122
      %p235 = pneg %p119
      %p236 = pneg %p143
      %p237 = pneg %p140
      %p238 = pneg %p169
      %p239 = pneg %p166
      %p240 = scmp.lt.s32.totalorder %s17, 1
      %s241 = scalar_select %p240, %s17, 1
      %s242 = smul.addr %s241, 8
      %s243 = smul.addr %s242, 8
      %s244 = scalar_lea.vmem %s6, %s243
      %s245 = smul.u32 4, %s17
      %p246 = scmp.lt.s32.totalorder %s245, 7
      %s247 = scalar_select %p246, %s245, 7
      %s248 = smul.addr %s247, 18
      %s249 = smul.addr %s248, 4
      %s250 = scalar_lea.vmem %s0, %s249
      %s251 = smul.u32 4, %s17
      %p252 = scmp.lt.s32.totalorder %s17, 1
      %s253 = scalar_select %p252, %s17, 1
      %s254 = smul.addr %s253, 8
      %s255 = smul.addr %s254, 8
      %s256 = scalar_lea.vmem %s6, %s255
      %v258 = vld [vmem:[%s250] sm:$0xf]
      %v259 = vld [vmem:[%s250 + $0x8] sm:$0xf]
      %v260 = vld [vmem:[%s250 + $0x10] sm:$0xf]
      %v261 = vld [vmem:[%s250 + $0x18] sm:$0xf]
      %v262 = vld [vmem:[%s250 + $0x20] sm:$0xf]
      %v263 = vld [vmem:[%s250 + $0x28] sm:$0xf]
      %v264 = vld [vmem:[%s250 + $0x30] sm:$0xf]
      %v265 = vld [vmem:[%s250 + $0x38] sm:$0xf]
      %v266 = vld [vmem:[%s1] sm:$0xf]
      %s267 = scalar_lea.vmem %s250, 72
      %v268 = vld [vmem:[%s267] sm:$0xf]
      %v269 = vld [vmem:[%s267 + $0x8] sm:$0xf]
      %v270 = vld [vmem:[%s267 + $0x10] sm:$0xf]
      %v271 = vld [vmem:[%s267 + $0x18] sm:$0xf]
      %v272 = vld [vmem:[%s267 + $0x20] sm:$0xf]
      %v273 = vld [vmem:[%s267 + $0x28] sm:$0xf]
      %v274 = vld [vmem:[%s267 + $0x30] sm:$0xf]
      %v275 = vld [vmem:[%s267 + $0x38] sm:$0xf]
      %s276 = scalar_lea.vmem %s1, 4
      %v277 = vld [vmem:[%s276] sm:$0xf]
      %v286 = vunpack.c.l.b16 %v268
      %v287 = vunpack.c.l.b16 %v269
      %v288 = vunpack.c.l.b16 %v270
      %v289 = vunpack.c.l.b16 %v271
      %v290 = vunpack.c.l.b16 %v272
      %v291 = vunpack.c.l.b16 %v273
      %v292 = vunpack.c.l.b16 %v274
      %v293 = vunpack.c.l.b16 %v275
      %v294 = vpack.c.b16 %v287, %v286
      %v295 = vpack.c.b16 %v289, %v288
      %v296 = vpack.c.b16 %v291, %v290
      %v297 = vpack.c.b16 %v293, %v292
      %vm298 = vcmask 64512
      %v300 = vsel %vm298, %v294, 0
      %v303 = vsel %vm298, %v295, 0
      %v306 = vsel %vm298, %v296, 0
      %v309 = vsel %vm298, %v297, 0
      %vm311 = vcmask 1043456
      %v313 = vsel %vm311, %v277, 0
      %315 = vmatprep.subr.bf16.mxu0 0
      %316 = vmatpush1.bf16.msra.mxu0 %v313
      %317 = vmatprep.subr.bf16.mxu0 0
      %318 = vmatpush1.bf16.msra.mxu0 0
      %319 = vmatprep.subr.bf16.mxu0 0
      %320 = vmatpush1.bf16.msra.mxu0 0
      %321 = vmatprep.subr.bf16.mxu0 0
      %322 = vmatpush1.bf16.msra.mxu0 0
      %323 = vmatprep.subr.bf16.mxu0 0
      %324 = vmatpush1.bf16.msra.mxu0 0
      %325 = vmatprep.subr.bf16.mxu0 0
      %326 = vmatpush1.bf16.msra.mxu0 0
      %327 = vmatprep.subr.bf16.mxu0 0
      %328 = vmatpush1.bf16.msra.mxu0 0
      %329 = vmatprep.subr.bf16.mxu0 0
      %330 = vmatpush1.bf16.msra.mxu0 0
      %331 = vmatprep.subr.bf16.mxu0 0
      %332 = vmatpush1.bf16.msra.mxu0 0
      %333 = vmatprep.subr.bf16.mxu0 0
      %334 = vmatpush1.bf16.msra.mxu0 0
      %335 = vmatprep.subr.bf16.mxu0 0
      %336 = vmatpush1.bf16.msra.mxu0 0
      %337 = vmatprep.subr.bf16.mxu0 0
      %338 = vmatpush1.bf16.msra.mxu0 0
      %339 = vmatprep.subr.bf16.mxu0 0
      %340 = vmatpush1.bf16.msra.mxu0 0
      %341 = vmatprep.subr.bf16.mxu0 0
      %342 = vmatpush1.bf16.msra.mxu0 0
      %343 = vmatprep.subr.bf16.mxu0 0
      %344 = vmatpush1.bf16.msra.mxu0 0
      %345 = vmatprep.subr.bf16.mxu0 0
      %346 = vmatpush1.bf16.msra.mxu0 0
      %347 = vmatprep.mubr.bf16.mxu0 0
      %348 = vmatmul.mubr.bf16.gmra.mrb[0].mxu0 %v300
      %v349 = vpop.f32.mrb[0].mxu0
      %v350 = vadd.f32 0.0, %v349
      %v351 = vpop.f32.mrb[0].mxu0
      %v352 = vpop.f32.mrb[0].mxu0
      %v353 = vadd.f32 0.0, %v352
      %v354 = vpop.f32.mrb[0].mxu0
      %355 = vmatprep.mubr.bf16.mxu0 0
      %356 = vmatmul.mubr.bf16.gmra.mrb[0].mxu0 %v303
      %v357 = vpop.f32.mrb[0].mxu0
      %v358 = vadd.f32 0.0, %v357
      %v359 = vpop.f32.mrb[0].mxu0
      %v360 = vpop.f32.mrb[0].mxu0
      %v361 = vadd.f32 0.0, %v360
      %v362 = vpop.f32.mrb[0].mxu0
      %363 = vmatprep.mubr.bf16.mxu0 0
      %364 = vmatmul.mubr.bf16.gmra.mrb[0].mxu0 %v306
      %v365 = vpop.f32.mrb[0].mxu0
      %v366 = vadd.f32 0.0, %v365
      %v367 = vpop.f32.mrb[0].mxu0
      %v368 = vpop.f32.mrb[0].mxu0
      %v369 = vadd.f32 0.0, %v368
      %v370 = vpop.f32.mrb[0].mxu0
      %371 = vmatprep.mubr.bf16.mxu0 0
      %372 = vmatmul.mubr.bf16.gmra.mrb[0].mxu0 %v309
      %v373 = vpop.f32.mrb[0].mxu0
      %v374 = vadd.f32 0.0, %v373
      %v375 = vpop.f32.mrb[0].mxu0
      %v376 = vpop.f32.mrb[0].mxu0
      %v377 = vadd.f32 0.0, %v376
      %v378 = vpop.f32.mrb[0].mxu0
      %379 = vdwg.mxu0
      %v388 = vunpack.c.l.b16 %v258
      %v389 = vunpack.c.l.b16 %v259
      %v390 = vunpack.c.l.b16 %v260
      %v391 = vunpack.c.l.b16 %v261
      %v392 = vunpack.c.l.b16 %v262
      %v393 = vunpack.c.l.b16 %v263
      %v394 = vunpack.c.l.b16 %v264
      %v395 = vunpack.c.l.b16 %v265
      %v396 = vpack.c.b16 %v389, %v388
      %v397 = vpack.c.b16 %v391, %v390
      %v398 = vpack.c.b16 %v393, %v392
      %v399 = vpack.c.b16 %v395, %v394
      %v401 = vsel %vm298, %v396, 0
      %v404 = vsel %vm298, %v397, 0
      %v407 = vsel %vm298, %v398, 0
      %v410 = vsel %vm298, %v399, 0
      %v413 = vsel %vm311, %v266, 0
      %415 = vmatprep.subr.bf16.mxu0 0
      %416 = vmatpush1.bf16.msra.mxu0 %v413
      %417 = vmatprep.subr.bf16.mxu0 0
      %418 = vmatpush1.bf16.msra.mxu0 0
      %419 = vmatprep.subr.bf16.mxu0 0
      %420 = vmatpush1.bf16.msra.mxu0 0
      %421 = vmatprep.subr.bf16.mxu0 0
      %422 = vmatpush1.bf16.msra.mxu0 0
      %423 = vmatprep.subr.bf16.mxu0 0
      %424 = vmatpush1.bf16.msra.mxu0 0
      %425 = vmatprep.subr.bf16.mxu0 0
      %426 = vmatpush1.bf16.msra.mxu0 0
      %427 = vmatprep.subr.bf16.mxu0 0
      %428 = vmatpush1.bf16.msra.mxu0 0
      %429 = vmatprep.subr.bf16.mxu0 0
      %430 = vmatpush1.bf16.msra.mxu0 0
      %431 = vmatprep.subr.bf16.mxu0 0
      %432 = vmatpush1.bf16.msra.mxu0 0
      %433 = vmatprep.subr.bf16.mxu0 0
      %434 = vmatpush1.bf16.msra.mxu0 0
      %435 = vmatprep.subr.bf16.mxu0 0
      %436 = vmatpush1.bf16.msra.mxu0 0
      %437 = vmatprep.subr.bf16.mxu0 0
      %438 = vmatpush1.bf16.msra.mxu0 0
      %439 = vmatprep.subr.bf16.mxu0 0
      %440 = vmatpush1.bf16.msra.mxu0 0
      %441 = vmatprep.subr.bf16.mxu0 0
      %442 = vmatpush1.bf16.msra.mxu0 0
      %443 = vmatprep.subr.bf16.mxu0 0
      %444 = vmatpush1.bf16.msra.mxu0 0
      %445 = vmatprep.subr.bf16.mxu0 0
      %446 = vmatpush1.bf16.msra.mxu0 0
      %447 = vmatprep.mubr.bf16.mxu0 0
      %448 = vmatmul.mubr.bf16.gmra.mrb[0].mxu0 %v401
      %v449 = vpop.f32.mrb[0].mxu0
      %v450 = vadd.f32 %v350, %v449
      %v451 = vpop.f32.mrb[0].mxu0
      %v452 = vpop.f32.mrb[0].mxu0
      %v453 = vadd.f32 %v353, %v452
      %v454 = vpop.f32.mrb[0].mxu0
      %455 = vmatprep.mubr.bf16.mxu0 0
      %456 = vmatmul.mubr.bf16.gmra.mrb[0].mxu0 %v404
      %v457 = vpop.f32.mrb[0].mxu0
      %v458 = vadd.f32 %v358, %v457
      %v459 = vpop.f32.mrb[0].mxu0
      %v460 = vpop.f32.mrb[0].mxu0
      %v461 = vadd.f32 %v361, %v460
      %v462 = vpop.f32.mrb[0].mxu0
      %463 = vmatprep.mubr.bf16.mxu0 0
      %464 = vmatmul.mubr.bf16.gmra.mrb[0].mxu0 %v407
      %v465 = vpop.f32.mrb[0].mxu0
      %v466 = vadd.f32 %v366, %v465
      %v467 = vpop.f32.mrb[0].mxu0
      %v468 = vpop.f32.mrb[0].mxu0
      %v469 = vadd.f32 %v369, %v468
      %v470 = vpop.f32.mrb[0].mxu0
      %471 = vmatprep.mubr.bf16.mxu0 0
      %472 = vmatmul.mubr.bf16.gmra.mrb[0].mxu0 %v410
      %v473 = vpop.f32.mrb[0].mxu0
      %v474 = vadd.f32 %v374, %v473
      %v475 = vpop.f32.mrb[0].mxu0
      %v476 = vpop.f32.mrb[0].mxu0
      %v477 = vadd.f32 %v377, %v476
      %v478 = vpop.f32.mrb[0].mxu0
      %479 = vdwg.mxu0
      %v480 = vld [vmem:[%s250] sm:$0xf]
      %v481 = vld [vmem:[%s250 + $0x4] sm:$0x1]
      %v482 = vld [vmem:[%s250 + $0x8] sm:$0xf]
      %v483 = vld [vmem:[%s250 + $0xc] sm:$0x1]
      %v484 = vld [vmem:[%s250 + $0x10] sm:$0xf]
      %v485 = vld [vmem:[%s250 + $0x14] sm:$0x1]
      %v486 = vld [vmem:[%s250 + $0x18] sm:$0xf]
      %v487 = vld [vmem:[%s250 + $0x1c] sm:$0x1]
      %v488 = vld [vmem:[%s250 + $0x20] sm:$0xf]
      %v489 = vld [vmem:[%s250 + $0x24] sm:$0x1]
      %v490 = vld [vmem:[%s250 + $0x28] sm:$0xf]
      %v491 = vld [vmem:[%s250 + $0x2c] sm:$0x1]
      %v492 = vld [vmem:[%s250 + $0x30] sm:$0xf]
      %v493 = vld [vmem:[%s250 + $0x34] sm:$0x1]
      %v494 = vld [vmem:[%s250 + $0x38] sm:$0xf]
      %v495 = vld [vmem:[%s250 + $0x3c] sm:$0x1]
      %vm496 = vsmask.f32 3328
      %vm497 = vsmask.f32 7440
      %vm498 = vmor %vm496, %vm497
      %v500 = vshrl.u32 %v480, 16
      %v502 = vrot.slane %v500, 4
      %v503 = vshll.u32 %v480, 16
      %v505 = vrot.slane %v503, 5
      %v506 = vor.u32 %v502, %v505
      %v507 = vrot.slane %v506, 4
      %v509 = vshll.u32 %v481, 16
      %v511 = vrot.slane %v509, 5
      %v512 = vsel %vm498, %v507, %v511
      %v514 = vshrl.u32 %v482, 16
      %v516 = vrot.slane %v514, 4
      %v517 = vshll.u32 %v482, 16
      %v519 = vrot.slane %v517, 5
      %v520 = vor.u32 %v516, %v519
      %v521 = vrot.slane %v520, 4
      %v523 = vshll.u32 %v483, 16
      %v525 = vrot.slane %v523, 5
      %v526 = vsel %vm498, %v521, %v525
      %v528 = vshrl.u32 %v484, 16
      %v530 = vrot.slane %v528, 4
      %v531 = vshll.u32 %v484, 16
      %v533 = vrot.slane %v531, 5
      %v534 = vor.u32 %v530, %v533
      %v535 = vrot.slane %v534, 4
      %v537 = vshll.u32 %v485, 16
      %v539 = vrot.slane %v537, 5
      %v540 = vsel %vm498, %v535, %v539
      %v542 = vshrl.u32 %v486, 16
      %v544 = vrot.slane %v542, 4
      %v545 = vshll.u32 %v486, 16
      %v547 = vrot.slane %v545, 5
      %v548 = vor.u32 %v544, %v547
      %v549 = vrot.slane %v548, 4
      %v551 = vshll.u32 %v487, 16
      %v553 = vrot.slane %v551, 5
      %v554 = vsel %vm498, %v549, %v553
      %v556 = vshrl.u32 %v488, 16
      %v558 = vrot.slane %v556, 4
      %v559 = vshll.u32 %v488, 16
      %v561 = vrot.slane %v559, 5
      %v562 = vor.u32 %v558, %v561
      %v563 = vrot.slane %v562, 4
      %v565 = vshll.u32 %v489, 16
      %v567 = vrot.slane %v565, 5
      %v568 = vsel %vm498, %v563, %v567
      %v570 = vshrl.u32 %v490, 16
      %v572 = vrot.slane %v570, 4
      %v573 = vshll.u32 %v490, 16
      %v575 = vrot.slane %v573, 5
      %v576 = vor.u32 %v572, %v575
      %v577 = vrot.slane %v576, 4
      %v579 = vshll.u32 %v491, 16
      %v581 = vrot.slane %v579, 5
      %v582 = vsel %vm498, %v577, %v581
      %v584 = vshrl.u32 %v492, 16
      %v586 = vrot.slane %v584, 4
      %v587 = vshll.u32 %v492, 16
      %v589 = vrot.slane %v587, 5
      %v590 = vor.u32 %v586, %v589
      %v591 = vrot.slane %v590, 4
      %v593 = vshll.u32 %v493, 16
      %v595 = vrot.slane %v593, 5
      %v596 = vsel %vm498, %v591, %v595
      %v598 = vshrl.u32 %v494, 16
      %v600 = vrot.slane %v598, 4
      %v601 = vshll.u32 %v494, 16
      %v603 = vrot.slane %v601, 5
      %v604 = vor.u32 %v600, %v603
      %v605 = vrot.slane %v604, 4
      %v607 = vshll.u32 %v495, 16
      %v609 = vrot.slane %v607, 5
      %v610 = vsel %vm498, %v605, %v609
      %s611 = scalar_lea.vmem %s1, 8
      %v612 = vld [vmem:[%s611] sm:$0xf]
      %v613 = vunpack.c.l.b16 %v512
      %v614 = vunpack.c.l.b16 %v526
      %v615 = vunpack.c.l.b16 %v540
      %v616 = vunpack.c.l.b16 %v554
      %v617 = vunpack.c.l.b16 %v568
      %v618 = vunpack.c.l.b16 %v582
      %v619 = vunpack.c.l.b16 %v596
      %v620 = vunpack.c.l.b16 %v610
      %v621 = vpack.c.b16 %v614, %v613
      %v622 = vpack.c.b16 %v616, %v615
      %v623 = vpack.c.b16 %v618, %v617
      %v624 = vpack.c.b16 %v620, %v619
      %v626 = vsel %vm298, %v621, 0
      %v629 = vsel %vm298, %v622, 0
      %v632 = vsel %vm298, %v623, 0
      %v635 = vsel %vm298, %v624, 0
      %v638 = vsel %vm311, %v612, 0
      %640 = vmatprep.subr.bf16.mxu0 0
      %641 = vmatpush1.bf16.msra.mxu0 %v638
      %642 = vmatprep.subr.bf16.mxu0 0
      %643 = vmatpush1.bf16.msra.mxu0 0
      %644 = vmatprep.subr.bf16.mxu0 0
      %645 = vmatpush1.bf16.msra.mxu0 0
      %646 = vmatprep.subr.bf16.mxu0 0
      %647 = vmatpush1.bf16.msra.mxu0 0
      %648 = vmatprep.subr.bf16.mxu0 0
      %649 = vmatpush1.bf16.msra.mxu0 0
      %650 = vmatprep.subr.bf16.mxu0 0
      %651 = vmatpush1.bf16.msra.mxu0 0
      %652 = vmatprep.subr.bf16.mxu0 0
      %653 = vmatpush1.bf16.msra.mxu0 0
      %654 = vmatprep.subr.bf16.mxu0 0
      %655 = vmatpush1.bf16.msra.mxu0 0
      %656 = vmatprep.subr.bf16.mxu0 0
      %657 = vmatpush1.bf16.msra.mxu0 0
      %658 = vmatprep.subr.bf16.mxu0 0
      %659 = vmatpush1.bf16.msra.mxu0 0
      %660 = vmatprep.subr.bf16.mxu0 0
      %661 = vmatpush1.bf16.msra.mxu0 0
      %662 = vmatprep.subr.bf16.mxu0 0
      %663 = vmatpush1.bf16.msra.mxu0 0
      %664 = vmatprep.subr.bf16.mxu0 0
      %665 = vmatpush1.bf16.msra.mxu0 0
      %666 = vmatprep.subr.bf16.mxu0 0
      %667 = vmatpush1.bf16.msra.mxu0 0
      %668 = vmatprep.subr.bf16.mxu0 0
      %669 = vmatpush1.bf16.msra.mxu0 0
      %670 = vmatprep.subr.bf16.mxu0 0
      %671 = vmatpush1.bf16.msra.mxu0 0
      %672 = vmatprep.mubr.bf16.mxu0 0
      %673 = vmatmul.mubr.bf16.gmra.mrb[0].mxu0 %v626
      %v674 = vpop.f32.mrb[0].mxu0
      %v675 = vadd.f32 0.0, %v674
      %v676 = vpop.f32.mrb[0].mxu0
      %v677 = vpop.f32.mrb[0].mxu0
      %v678 = vadd.f32 0.0, %v677
      %v679 = vpop.f32.mrb[0].mxu0
      %680 = vmatprep.mubr.bf16.mxu0 0
      %681 = vmatmul.mubr.bf16.gmra.mrb[0].mxu0 %v629
      %v682 = vpop.f32.mrb[0].mxu0
      %v683 = vadd.f32 0.0, %v682
      %v684 = vpop.f32.mrb[0].mxu0
      %v685 = vpop.f32.mrb[0].mxu0
      %v686 = vadd.f32 0.0, %v685
      %v687 = vpop.f32.mrb[0].mxu0
      %688 = vmatprep.mubr.bf16.mxu0 0
      %689 = vmatmul.mubr.bf16.gmra.mrb[0].mxu0 %v632
      %v690 = vpop.f32.mrb[0].mxu0
      %v691 = vadd.f32 0.0, %v690
      %v692 = vpop.f32.mrb[0].mxu0
      %v693 = vpop.f32.mrb[0].mxu0
      %v694 = vadd.f32 0.0, %v693
      %v695 = vpop.f32.mrb[0].mxu0
      %696 = vmatprep.mubr.bf16.mxu0 0
      %697 = vmatmul.mubr.bf16.gmra.mrb[0].mxu0 %v635
      %v698 = vpop.f32.mrb[0].mxu0
      %v699 = vadd.f32 0.0, %v698
      %v700 = vpop.f32.mrb[0].mxu0
      %v701 = vpop.f32.mrb[0].mxu0
      %v702 = vadd.f32 0.0, %v701
      %v703 = vpop.f32.mrb[0].mxu0
      %704 = vdwg.mxu0
      %v705 = vadd.f32 %v450, %v675
      %v706 = vadd.f32 %v453, %v678
      %v707 = vadd.f32 %v458, %v683
      %v708 = vadd.f32 %v461, %v686
      %v709 = vadd.f32 %v466, %v691
      %v710 = vadd.f32 %v469, %v694
      %v711 = vadd.f32 %v474, %v699
      %v712 = vadd.f32 %v477, %v702
      %s713 = scalar_lea.vmem %s250, 144
      %v714 = vld [vmem:[%s713] sm:$0xf]
      %v715 = vld [vmem:[%s713 + $0x8] sm:$0xf]
      %v716 = vld [vmem:[%s713 + $0x10] sm:$0xf]
      %v717 = vld [vmem:[%s713 + $0x18] sm:$0xf]
      %v718 = vld [vmem:[%s713 + $0x20] sm:$0xf]
      %v719 = vld [vmem:[%s713 + $0x28] sm:$0xf]
      %v720 = vld [vmem:[%s713 + $0x30] sm:$0xf]
      %v721 = vld [vmem:[%s713 + $0x38] sm:$0xf]
      %s722 = scalar_lea.vmem %s1, 12
      %v723 = vld [vmem:[%s722] sm:$0xf]
      %v732 = vunpack.c.l.b16 %v714
      %v733 = vunpack.c.l.b16 %v715
      %v734 = vunpack.c.l.b16 %v716
      %v735 = vunpack.c.l.b16 %v717
      %v736 = vunpack.c.l.b16 %v718
      %v737 = vunpack.c.l.b16 %v719
      %v738 = vunpack.c.l.b16 %v720
      %v739 = vunpack.c.l.b16 %v721
      %v740 = vpack.c.b16 %v733, %v732
      %v741 = vpack.c.b16 %v735, %v734
      %v742 = vpack.c.b16 %v737, %v736
      %v743 = vpack.c.b16 %v739, %v738
      %v745 = vsel %vm298, %v740, 0
      %v748 = vsel %vm298, %v741, 0
      %v751 = vsel %vm298, %v742, 0
      %v754 = vsel %vm298, %v743, 0
      %v757 = vsel %vm311, %v723, 0
      %759 = vmatprep.subr.bf16.mxu0 0
      %760 = vmatpush1.bf16.msra.mxu0 %v757
      %761 = vmatprep.subr.bf16.mxu0 0
      %762 = vmatpush1.bf16.msra.mxu0 0
      %763 = vmatprep.subr.bf16.mxu0 0
      %764 = vmatpush1.bf16.msra.mxu0 0
      %765 = vmatprep.subr.bf16.mxu0 0
      %766 = vmatpush1.bf16.msra.mxu0 0
      %767 = vmatprep.subr.bf16.mxu0 0
      %768 = vmatpush1.bf16.msra.mxu0 0
      %769 = vmatprep.subr.bf16.mxu0 0
      %770 = vmatpush1.bf16.msra.mxu0 0
      %771 = vmatprep.subr.bf16.mxu0 0
      %772 = vmatpush1.bf16.msra.mxu0 0
      %773 = vmatprep.subr.bf16.mxu0 0
      %774 = vmatpush1.bf16.msra.mxu0 0
      %775 = vmatprep.subr.bf16.mxu0 0
      %776 = vmatpush1.bf16.msra.mxu0 0
      %777 = vmatprep.subr.bf16.mxu0 0
      %778 = vmatpush1.bf16.msra.mxu0 0
      %779 = vmatprep.subr.bf16.mxu0 0
      %780 = vmatpush1.bf16.msra.mxu0 0
      %781 = vmatprep.subr.bf16.mxu0 0
      %782 = vmatpush1.bf16.msra.mxu0 0
      %783 = vmatprep.subr.bf16.mxu0 0
      %784 = vmatpush1.bf16.msra.mxu0 0
      %785 = vmatprep.subr.bf16.mxu0 0
      %786 = vmatpush1.bf16.msra.mxu0 0
      %787 = vmatprep.subr.bf16.mxu0 0
      %788 = vmatpush1.bf16.msra.mxu0 0
      %789 = vmatprep.subr.bf16.mxu0 0
      %790 = vmatpush1.bf16.msra.mxu0 0
      %791 = vmatprep.mubr.bf16.mxu0 0
      %792 = vmatmul.mubr.bf16.gmra.mrb[0].mxu0 %v745
      %v793 = vpop.f32.mrb[0].mxu0
      %v794 = vadd.f32 0.0, %v793
      %v795 = vpop.f32.mrb[0].mxu0
      %v796 = vpop.f32.mrb[0].mxu0
      %v797 = vadd.f32 0.0, %v796
      %v798 = vpop.f32.mrb[0].mxu0
      %799 = vmatprep.mubr.bf16.mxu0 0
      %800 = vmatmul.mubr.bf16.gmra.mrb[0].mxu0 %v748
      %v801 = vpop.f32.mrb[0].mxu0
      %v802 = vadd.f32 0.0, %v801
      %v803 = vpop.f32.mrb[0].mxu0
      %v804 = vpop.f32.mrb[0].mxu0
      %v805 = vadd.f32 0.0, %v804
      %v806 = vpop.f32.mrb[0].mxu0
      %807 = vmatprep.mubr.bf16.mxu0 0
      %808 = vmatmul.mubr.bf16.gmra.mrb[0].mxu0 %v751
      %v809 = vpop.f32.mrb[0].mxu0
      %v810 = vadd.f32 0.0, %v809
      %v811 = vpop.f32.mrb[0].mxu0
      %v812 = vpop.f32.mrb[0].mxu0
      %v813 = vadd.f32 0.0, %v812
      %v814 = vpop.f32.mrb[0].mxu0
      %815 = vmatprep.mubr.bf16.mxu0 0
      %816 = vmatmul.mubr.bf16.gmra.mrb[0].mxu0 %v754
      %v817 = vpop.f32.mrb[0].mxu0
      %v818 = vadd.f32 0.0, %v817
      %v819 = vpop.f32.mrb[0].mxu0
      %v820 = vpop.f32.mrb[0].mxu0
      %v821 = vadd.f32 0.0, %v820
      %v822 = vpop.f32.mrb[0].mxu0
      %823 = vdwg.mxu0
      %v824 = vadd.f32 %v705, %v794
      %v825 = vadd.f32 %v706, %v797
      %v826 = vadd.f32 %v707, %v802
      %v827 = vadd.f32 %v708, %v805
      %v828 = vadd.f32 %v709, %v810
      %v829 = vadd.f32 %v710, %v813
      %v830 = vadd.f32 %v711, %v818
      %v831 = vadd.f32 %v712, %v821
      %s832 = scalar_lea.vmem %s250, 216
      %v833 = vld [vmem:[%s832] sm:$0xf]
      %v834 = vld [vmem:[%s832 + $0x8] sm:$0xf]
      %v835 = vld [vmem:[%s832 + $0x10] sm:$0xf]
      %v836 = vld [vmem:[%s832 + $0x18] sm:$0xf]
      %v837 = vld [vmem:[%s832 + $0x20] sm:$0xf]
      %v838 = vld [vmem:[%s832 + $0x28] sm:$0xf]
      %v839 = vld [vmem:[%s832 + $0x30] sm:$0xf]
      %v840 = vld [vmem:[%s832 + $0x38] sm:$0xf]
      %s841 = scalar_lea.vmem %s1, 16
      %v842 = vld [vmem:[%s841] sm:$0xf]
      %v851 = vunpack.c.l.b16 %v833
      %v852 = vunpack.c.l.b16 %v834
      %v853 = vunpack.c.l.b16 %v835
      %v854 = vunpack.c.l.b16 %v836
      %v855 = vunpack.c.l.b16 %v837
      %v856 = vunpack.c.l.b16 %v838
      %v857 = vunpack.c.l.b16 %v839
      %v858 = vunpack.c.l.b16 %v840
      %v859 = vpack.c.b16 %v852, %v851
      %v860 = vpack.c.b16 %v854, %v853
      %v861 = vpack.c.b16 %v856, %v855
      %v862 = vpack.c.b16 %v858, %v857
      %v864 = vsel %vm298, %v859, 0
      %v867 = vsel %vm298, %v860, 0
      %v870 = vsel %vm298, %v861, 0
      %v873 = vsel %vm298, %v862, 0
      %v876 = vsel %vm311, %v842, 0
      %878 = vmatprep.subr.bf16.mxu0 0
      %879 = vmatpush1.bf16.msra.mxu0 %v876
      %880 = vmatprep.subr.bf16.mxu0 0
      %881 = vmatpush1.bf16.msra.mxu0 0
      %882 = vmatprep.subr.bf16.mxu0 0
      %883 = vmatpush1.bf16.msra.mxu0 0
      %884 = vmatprep.subr.bf16.mxu0 0
      %885 = vmatpush1.bf16.msra.mxu0 0
      %886 = vmatprep.subr.bf16.mxu0 0
      %887 = vmatpush1.bf16.msra.mxu0 0
      %888 = vmatprep.subr.bf16.mxu0 0
      %889 = vmatpush1.bf16.msra.mxu0 0
      %890 = vmatprep.subr.bf16.mxu0 0
      %891 = vmatpush1.bf16.msra.mxu0 0
      %892 = vmatprep.subr.bf16.mxu0 0
      %893 = vmatpush1.bf16.msra.mxu0 0
      %894 = vmatprep.subr.bf16.mxu0 0
      %895 = vmatpush1.bf16.msra.mxu0 0
      %896 = vmatprep.subr.bf16.mxu0 0
      %897 = vmatpush1.bf16.msra.mxu0 0
      %898 = vmatprep.subr.bf16.mxu0 0
      %899 = vmatpush1.bf16.msra.mxu0 0
      %900 = vmatprep.subr.bf16.mxu0 0
      %901 = vmatpush1.bf16.msra.mxu0 0
      %902 = vmatprep.subr.bf16.mxu0 0
      %903 = vmatpush1.bf16.msra.mxu0 0
      %904 = vmatprep.subr.bf16.mxu0 0
      %905 = vmatpush1.bf16.msra.mxu0 0
      %906 = vmatprep.subr.bf16.mxu0 0
      %907 = vmatpush1.bf16.msra.mxu0 0
      %908 = vmatprep.subr.bf16.mxu0 0
      %909 = vmatpush1.bf16.msra.mxu0 0
      %910 = vmatprep.mubr.bf16.mxu0 0
      %911 = vmatmul.mubr.bf16.gmra.mrb[0].mxu0 %v864
      %v912 = vpop.f32.mrb[0].mxu0
      %v913 = vadd.f32 0.0, %v912
      %v914 = vpop.f32.mrb[0].mxu0
      %v915 = vpop.f32.mrb[0].mxu0
      %v916 = vadd.f32 0.0, %v915
      %v917 = vpop.f32.mrb[0].mxu0
      %918 = vmatprep.mubr.bf16.mxu0 0
      %919 = vmatmul.mubr.bf16.gmra.mrb[0].mxu0 %v867
      %v920 = vpop.f32.mrb[0].mxu0
      %v921 = vadd.f32 0.0, %v920
      %v922 = vpop.f32.mrb[0].mxu0
      %v923 = vpop.f32.mrb[0].mxu0
      %v924 = vadd.f32 0.0, %v923
      %v925 = vpop.f32.mrb[0].mxu0
      %926 = vmatprep.mubr.bf16.mxu0 0
      %927 = vmatmul.mubr.bf16.gmra.mrb[0].mxu0 %v870
      %v928 = vpop.f32.mrb[0].mxu0
      %v929 = vadd.f32 0.0, %v928
      %v930 = vpop.f32.mrb[0].mxu0
      %v931 = vpop.f32.mrb[0].mxu0
      %v932 = vadd.f32 0.0, %v931
      %v933 = vpop.f32.mrb[0].mxu0
      %934 = vmatprep.mubr.bf16.mxu0 0
      %935 = vmatmul.mubr.bf16.gmra.mrb[0].mxu0 %v873
      %v936 = vpop.f32.mrb[0].mxu0
      %v937 = vadd.f32 0.0, %v936
      %v938 = vpop.f32.mrb[0].mxu0
      %v939 = vpop.f32.mrb[0].mxu0
      %v940 = vadd.f32 0.0, %v939
      %v941 = vpop.f32.mrb[0].mxu0
      %942 = vdwg.mxu0
      %v943 = vadd.f32 %v824, %v913
      %v944 = vadd.f32 %v825, %v916
      %v945 = vadd.f32 %v826, %v921
      %v946 = vadd.f32 %v827, %v924
      %v947 = vadd.f32 %v828, %v929
      %v948 = vadd.f32 %v829, %v932
      %v949 = vadd.f32 %v830, %v937
      %v950 = vadd.f32 %v831, %v940
      %v951 = vld [vmem:[%s713] sm:$0xf]
      %v952 = vld [vmem:[%s713 + $0x4] sm:$0x1]
      %v953 = vld [vmem:[%s713 + $0x8] sm:$0xf]
      %v954 = vld [vmem:[%s713 + $0xc] sm:$0x1]
      %v955 = vld [vmem:[%s713 + $0x10] sm:$0xf]
      %v956 = vld [vmem:[%s713 + $0x14] sm:$0x1]
      %v957 = vld [vmem:[%s713 + $0x18] sm:$0xf]
      %v958 = vld [vmem:[%s713 + $0x1c] sm:$0x1]
      %v959 = vld [vmem:[%s713 + $0x20] sm:$0xf]
      %v960 = vld [vmem:[%s713 + $0x24] sm:$0x1]
      %v961 = vld [vmem:[%s713 + $0x28] sm:$0xf]
      %v962 = vld [vmem:[%s713 + $0x2c] sm:$0x1]
      %v963 = vld [vmem:[%s713 + $0x30] sm:$0xf]
      %v964 = vld [vmem:[%s713 + $0x34] sm:$0x1]
      %v965 = vld [vmem:[%s713 + $0x38] sm:$0xf]
      %v966 = vld [vmem:[%s713 + $0x3c] sm:$0x1]
      %v968 = vshrl.u32 %v951, 16
      %v970 = vrot.slane %v968, 4
      %v971 = vshll.u32 %v951, 16
      %v973 = vrot.slane %v971, 5
      %v974 = vor.u32 %v970, %v973
      %v975 = vrot.slane %v974, 4
      %v977 = vshll.u32 %v952, 16
      %v979 = vrot.slane %v977, 5
      %v980 = vsel %vm498, %v975, %v979
      %v982 = vshrl.u32 %v953, 16
      %v984 = vrot.slane %v982, 4
      %v985 = vshll.u32 %v953, 16
      %v987 = vrot.slane %v985, 5
      %v988 = vor.u32 %v984, %v987
      %v989 = vrot.slane %v988, 4
      %v991 = vshll.u32 %v954, 16
      %v993 = vrot.slane %v991, 5
      %v994 = vsel %vm498, %v989, %v993
      %v996 = vshrl.u32 %v955, 16
      %v998 = vrot.slane %v996, 4
      %v999 = vshll.u32 %v955, 16
      %v1001 = vrot.slane %v999, 5
      %v1002 = vor.u32 %v998, %v1001
      %v1003 = vrot.slane %v1002, 4
      %v1005 = vshll.u32 %v956, 16
      %v1007 = vrot.slane %v1005, 5
      %v1008 = vsel %vm498, %v1003, %v1007
      %v1010 = vshrl.u32 %v957, 16
      %v1012 = vrot.slane %v1010, 4
      %v1013 = vshll.u32 %v957, 16
      %v1015 = vrot.slane %v1013, 5
      %v1016 = vor.u32 %v1012, %v1015
      %v1017 = vrot.slane %v1016, 4
      %v1019 = vshll.u32 %v958, 16
      %v1021 = vrot.slane %v1019, 5
      %v1022 = vsel %vm498, %v1017, %v1021
      %v1024 = vshrl.u32 %v959, 16
      %v1026 = vrot.slane %v1024, 4
      %v1027 = vshll.u32 %v959, 16
      %v1029 = vrot.slane %v1027, 5
      %v1030 = vor.u32 %v1026, %v1029
      %v1031 = vrot.slane %v1030, 4
      %v1033 = vshll.u32 %v960, 16
      %v1035 = vrot.slane %v1033, 5
      %v1036 = vsel %vm498, %v1031, %v1035
      %v1038 = vshrl.u32 %v961, 16
      %v1040 = vrot.slane %v1038, 4
      %v1041 = vshll.u32 %v961, 16
      %v1043 = vrot.slane %v1041, 5
      %v1044 = vor.u32 %v1040, %v1043
      %v1045 = vrot.slane %v1044, 4
      %v1047 = vshll.u32 %v962, 16
      %v1049 = vrot.slane %v1047, 5
      %v1050 = vsel %vm498, %v1045, %v1049
      %v1052 = vshrl.u32 %v963, 16
      %v1054 = vrot.slane %v1052, 4
      %v1055 = vshll.u32 %v963, 16
      %v1057 = vrot.slane %v1055, 5
      %v1058 = vor.u32 %v1054, %v1057
      %v1059 = vrot.slane %v1058, 4
      %v1061 = vshll.u32 %v964, 16
      %v1063 = vrot.slane %v1061, 5
      %v1064 = vsel %vm498, %v1059, %v1063
      %v1066 = vshrl.u32 %v965, 16
      %v1068 = vrot.slane %v1066, 4
      %v1069 = vshll.u32 %v965, 16
      %v1071 = vrot.slane %v1069, 5
      %v1072 = vor.u32 %v1068, %v1071
      %v1073 = vrot.slane %v1072, 4
      %v1075 = vshll.u32 %v966, 16
      %v1077 = vrot.slane %v1075, 5
      %v1078 = vsel %vm498, %v1073, %v1077
      %s1079 = scalar_lea.vmem %s1, 20
      %v1080 = vld [vmem:[%s1079] sm:$0xf]
      %v1081 = vunpack.c.l.b16 %v980
      %v1082 = vunpack.c.l.b16 %v994
      %v1083 = vunpack.c.l.b16 %v1008
      %v1084 = vunpack.c.l.b16 %v1022
      %v1085 = vunpack.c.l.b16 %v1036
      %v1086 = vunpack.c.l.b16 %v1050
      %v1087 = vunpack.c.l.b16 %v1064
      %v1088 = vunpack.c.l.b16 %v1078
      %v1089 = vpack.c.b16 %v1082, %v1081
      %v1090 = vpack.c.b16 %v1084, %v1083
      %v1091 = vpack.c.b16 %v1086, %v1085
      %v1092 = vpack.c.b16 %v1088, %v1087
      %v1094 = vsel %vm298, %v1089, 0
      %v1097 = vsel %vm298, %v1090, 0
      %v1100 = vsel %vm298, %v1091, 0
      %v1103 = vsel %vm298, %v1092, 0
      %v1106 = vsel %vm311, %v1080, 0
      %1108 = vmatprep.subr.bf16.mxu0 0
      %1109 = vmatpush1.bf16.msra.mxu0 %v1106
      %1110 = vmatprep.subr.bf16.mxu0 0
      %1111 = vmatpush1.bf16.msra.mxu0 0
      %1112 = vmatprep.subr.bf16.mxu0 0
      %1113 = vmatpush1.bf16.msra.mxu0 0
      %1114 = vmatprep.subr.bf16.mxu0 0
      %1115 = vmatpush1.bf16.msra.mxu0 0
      %1116 = vmatprep.subr.bf16.mxu0 0
      %1117 = vmatpush1.bf16.msra.mxu0 0
      %1118 = vmatprep.subr.bf16.mxu0 0
      %1119 = vmatpush1.bf16.msra.mxu0 0
      %1120 = vmatprep.subr.bf16.mxu0 0
      %1121 = vmatpush1.bf16.msra.mxu0 0
      %1122 = vmatprep.subr.bf16.mxu0 0
      %1123 = vmatpush1.bf16.msra.mxu0 0
      %1124 = vmatprep.subr.bf16.mxu0 0
      %1125 = vmatpush1.bf16.msra.mxu0 0
      %1126 = vmatprep.subr.bf16.mxu0 0
      %1127 = vmatpush1.bf16.msra.mxu0 0
      %1128 = vmatprep.subr.bf16.mxu0 0
      %1129 = vmatpush1.bf16.msra.mxu0 0
      %1130 = vmatprep.subr.bf16.mxu0 0
      %1131 = vmatpush1.bf16.msra.mxu0 0
      %1132 = vmatprep.subr.bf16.mxu0 0
      %1133 = vmatpush1.bf16.msra.mxu0 0
      %1134 = vmatprep.subr.bf16.mxu0 0
      %1135 = vmatpush1.bf16.msra.mxu0 0
      %1136 = vmatprep.subr.bf16.mxu0 0
      %1137 = vmatpush1.bf16.msra.mxu0 0
      %1138 = vmatprep.subr.bf16.mxu0 0
      %1139 = vmatpush1.bf16.msra.mxu0 0
      %1140 = vmatprep.mubr.bf16.mxu0 0
      %1141 = vmatmul.mubr.bf16.gmra.mrb[0].mxu0 %v1094
      %v1142 = vpop.f32.mrb[0].mxu0
      %v1143 = vadd.f32 0.0, %v1142
      %v1144 = vpop.f32.mrb[0].mxu0
      %v1145 = vpop.f32.mrb[0].mxu0
      %v1146 = vadd.f32 0.0, %v1145
      %v1147 = vpop.f32.mrb[0].mxu0
      %1148 = vmatprep.mubr.bf16.mxu0 0
      %1149 = vmatmul.mubr.bf16.gmra.mrb[0].mxu0 %v1097
      %v1150 = vpop.f32.mrb[0].mxu0
      %v1151 = vadd.f32 0.0, %v1150
      %v1152 = vpop.f32.mrb[0].mxu0
      %v1153 = vpop.f32.mrb[0].mxu0
      %v1154 = vadd.f32 0.0, %v1153
      %v1155 = vpop.f32.mrb[0].mxu0
      %1156 = vmatprep.mubr.bf16.mxu0 0
      %1157 = vmatmul.mubr.bf16.gmra.mrb[0].mxu0 %v1100
      %v1158 = vpop.f32.mrb[0].mxu0
      %v1159 = vadd.f32 0.0, %v1158
      %v1160 = vpop.f32.mrb[0].mxu0
      %v1161 = vpop.f32.mrb[0].mxu0
      %v1162 = vadd.f32 0.0, %v1161
      %v1163 = vpop.f32.mrb[0].mxu0
      %1164 = vmatprep.mubr.bf16.mxu0 0
      %1165 = vmatmul.mubr.bf16.gmra.mrb[0].mxu0 %v1103
      %v1166 = vpop.f32.mrb[0].mxu0
      %v1167 = vadd.f32 0.0, %v1166
      %v1168 = vpop.f32.mrb[0].mxu0
      %v1169 = vpop.f32.mrb[0].mxu0
      %v1170 = vadd.f32 0.0, %v1169
      %v1171 = vpop.f32.mrb[0].mxu0
      %1172 = vdwg.mxu0
      %v1173 = vadd.f32 %v943, %v1143
      %v1174 = vadd.f32 %v944, %v1146
      %v1175 = vadd.f32 %v945, %v1151
      %v1176 = vadd.f32 %v946, %v1154
      %v1177 = vadd.f32 %v947, %v1159
      %v1178 = vadd.f32 %v948, %v1162
      %v1179 = vadd.f32 %v949, %v1167
      %v1180 = vadd.f32 %v950, %v1170
      %s1181 = scalar_lea.vmem %s250, 8
      %v1182 = vld [vmem:[%s1181] sm:$0xf]
      %v1183 = vld [vmem:[%s1181 + $0x8] sm:$0xf]
      %v1184 = vld [vmem:[%s1181 + $0x10] sm:$0xf]
      %v1185 = vld [vmem:[%s1181 + $0x18] sm:$0xf]
      %v1186 = vld [vmem:[%s1181 + $0x20] sm:$0xf]
      %v1187 = vld [vmem:[%s1181 + $0x28] sm:$0xf]
      %v1188 = vld [vmem:[%s1181 + $0x30] sm:$0xf]
      %v1189 = vld [vmem:[%s1181 + $0x38] sm:$0xf]
      %s1190 = scalar_lea.vmem %s1, 24
      %v1191 = vld [vmem:[%s1190] sm:$0xf]
      %v1200 = vunpack.c.l.b16 %v1182
      %v1201 = vunpack.c.l.b16 %v1183
      %v1202 = vunpack.c.l.b16 %v1184
      %v1203 = vunpack.c.l.b16 %v1185
      %v1204 = vunpack.c.l.b16 %v1186
      %v1205 = vunpack.c.l.b16 %v1187
      %v1206 = vunpack.c.l.b16 %v1188
      %v1207 = vunpack.c.l.b16 %v1189
      %v1208 = vpack.c.b16 %v1201, %v1200
      %v1209 = vpack.c.b16 %v1203, %v1202
      %v1210 = vpack.c.b16 %v1205, %v1204
      %v1211 = vpack.c.b16 %v1207, %v1206
      %v1213 = vsel %vm298, %v1208, 0
      %v1216 = vsel %vm298, %v1209, 0
      %v1219 = vsel %vm298, %v1210, 0
      %v1222 = vsel %vm298, %v1211, 0
      %v1225 = vsel %vm311, %v1191, 0
      %1227 = vmatprep.subr.bf16.mxu0 0
      %1228 = vmatpush1.bf16.msra.mxu0 %v1225
      %1229 = vmatprep.subr.bf16.mxu0 0
      %1230 = vmatpush1.bf16.msra.mxu0 0
      %1231 = vmatprep.subr.bf16.mxu0 0
      %1232 = vmatpush1.bf16.msra.mxu0 0
      %1233 = vmatprep.subr.bf16.mxu0 0
      %1234 = vmatpush1.bf16.msra.mxu0 0
      %1235 = vmatprep.subr.bf16.mxu0 0
      %1236 = vmatpush1.bf16.msra.mxu0 0
      %1237 = vmatprep.subr.bf16.mxu0 0
      %1238 = vmatpush1.bf16.msra.mxu0 0
      %1239 = vmatprep.subr.bf16.mxu0 0
      %1240 = vmatpush1.bf16.msra.mxu0 0
      %1241 = vmatprep.subr.bf16.mxu0 0
      %1242 = vmatpush1.bf16.msra.mxu0 0
      %1243 = vmatprep.subr.bf16.mxu0 0
      %1244 = vmatpush1.bf16.msra.mxu0 0
      %1245 = vmatprep.subr.bf16.mxu0 0
      %1246 = vmatpush1.bf16.msra.mxu0 0
      %1247 = vmatprep.subr.bf16.mxu0 0
      %1248 = vmatpush1.bf16.msra.mxu0 0
      %1249 = vmatprep.subr.bf16.mxu0 0
      %1250 = vmatpush1.bf16.msra.mxu0 0
      %1251 = vmatprep.subr.bf16.mxu0 0
      %1252 = vmatpush1.bf16.msra.mxu0 0
      %1253 = vmatprep.subr.bf16.mxu0 0
      %1254 = vmatpush1.bf16.msra.mxu0 0
      %1255 = vmatprep.subr.bf16.mxu0 0
      %1256 = vmatpush1.bf16.msra.mxu0 0
      %1257 = vmatprep.subr.bf16.mxu0 0
      %1258 = vmatpush1.bf16.msra.mxu0 0
      %1259 = vmatprep.mubr.bf16.mxu0 0
      %1260 = vmatmul.mubr.bf16.gmra.mrb[0].mxu0 %v1213
      %v1261 = vpop.f32.mrb[0].mxu0
      %v1262 = vadd.f32 0.0, %v1261
      %v1263 = vpop.f32.mrb[0].mxu0
      %v1264 = vpop.f32.mrb[0].mxu0
      %v1265 = vadd.f32 0.0, %v1264
      %v1266 = vpop.f32.mrb[0].mxu0
      %1267 = vmatprep.mubr.bf16.mxu0 0
      %1268 = vmatmul.mubr.bf16.gmra.mrb[0].mxu0 %v1216
      %v1269 = vpop.f32.mrb[0].mxu0
      %v1270 = vadd.f32 0.0, %v1269
      %v1271 = vpop.f32.mrb[0].mxu0
      %v1272 = vpop.f32.mrb[0].mxu0
      %v1273 = vadd.f32 0.0, %v1272
      %v1274 = vpop.f32.mrb[0].mxu0
      %1275 = vmatprep.mubr.bf16.mxu0 0
      %1276 = vmatmul.mubr.bf16.gmra.mrb[0].mxu0 %v1219
      %v1277 = vpop.f32.mrb[0].mxu0
      %v1278 = vadd.f32 0.0, %v1277
      %v1279 = vpop.f32.mrb[0].mxu0
      %v1280 = vpop.f32.mrb[0].mxu0
      %v1281 = vadd.f32 0.0, %v1280
      %v1282 = vpop.f32.mrb[0].mxu0
      %1283 = vmatprep.mubr.bf16.mxu0 0
      %1284 = vmatmul.mubr.bf16.gmra.mrb[0].mxu0 %v1222
      %v1285 = vpop.f32.mrb[0].mxu0
      %v1286 = vadd.f32 0.0, %v1285
      %v1287 = vpop.f32.mrb[0].mxu0
      %v1288 = vpop.f32.mrb[0].mxu0
      %v1289 = vadd.f32 0.0, %v1288
      %v1290 = vpop.f32.mrb[0].mxu0
      %1291 = vdwg.mxu0
      %v1292 = vadd.f32 %v1173, %v1262
      %v1293 = vadd.f32 %v1174, %v1265
      %v1294 = vadd.f32 %v1175, %v1270
      %v1295 = vadd.f32 %v1176, %v1273
      %v1296 = vadd.f32 %v1177, %v1278
      %v1297 = vadd.f32 %v1178, %v1281
      %v1298 = vadd.f32 %v1179, %v1286
      %v1299 = vadd.f32 %v1180, %v1289
      %s1300 = scalar_lea.vmem %s250, 80
      %v1301 = vld [vmem:[%s1300] sm:$0xf]
      %v1302 = vld [vmem:[%s1300 + $0x8] sm:$0xf]
      %v1303 = vld [vmem:[%s1300 + $0x10] sm:$0xf]
      %v1304 = vld [vmem:[%s1300 + $0x18] sm:$0xf]
      %v1305 = vld [vmem:[%s1300 + $0x20] sm:$0xf]
      %v1306 = vld [vmem:[%s1300 + $0x28] sm:$0xf]
      %v1307 = vld [vmem:[%s1300 + $0x30] sm:$0xf]
      %v1308 = vld [vmem:[%s1300 + $0x38] sm:$0xf]
      %s1309 = scalar_lea.vmem %s1, 28
      %v1310 = vld [vmem:[%s1309] sm:$0xf]
      %v1319 = vunpack.c.l.b16 %v1301
      %v1320 = vunpack.c.l.b16 %v1302
      %v1321 = vunpack.c.l.b16 %v1303
      %v1322 = vunpack.c.l.b16 %v1304
      %v1323 = vunpack.c.l.b16 %v1305
      %v1324 = vunpack.c.l.b16 %v1306
      %v1325 = vunpack.c.l.b16 %v1307
      %v1326 = vunpack.c.l.b16 %v1308
      %v1327 = vpack.c.b16 %v1320, %v1319
      %v1328 = vpack.c.b16 %v1322, %v1321
      %v1329 = vpack.c.b16 %v1324, %v1323
      %v1330 = vpack.c.b16 %v1326, %v1325
      %v1332 = vsel %vm298, %v1327, 0
      %v1335 = vsel %vm298, %v1328, 0
      %v1338 = vsel %vm298, %v1329, 0
      %v1341 = vsel %vm298, %v1330, 0
      %v1344 = vsel %vm311, %v1310, 0
      %1346 = vmatprep.subr.bf16.mxu0 0
      %1347 = vmatpush1.bf16.msra.mxu0 %v1344
      %1348 = vmatprep.subr.bf16.mxu0 0
      %1349 = vmatpush1.bf16.msra.mxu0 0
      %1350 = vmatprep.subr.bf16.mxu0 0
      %1351 = vmatpush1.bf16.msra.mxu0 0
      %1352 = vmatprep.subr.bf16.mxu0 0
      %1353 = vmatpush1.bf16.msra.mxu0 0
      %1354 = vmatprep.subr.bf16.mxu0 0
      %1355 = vmatpush1.bf16.msra.mxu0 0
      %1356 = vmatprep.subr.bf16.mxu0 0
      %1357 = vmatpush1.bf16.msra.mxu0 0
      %1358 = vmatprep.subr.bf16.mxu0 0
      %1359 = vmatpush1.bf16.msra.mxu0 0
      %1360 = vmatprep.subr.bf16.mxu0 0
      %1361 = vmatpush1.bf16.msra.mxu0 0
      %1362 = vmatprep.subr.bf16.mxu0 0
      %1363 = vmatpush1.bf16.msra.mxu0 0
      %1364 = vmatprep.subr.bf16.mxu0 0
      %1365 = vmatpush1.bf16.msra.mxu0 0
      %1366 = vmatprep.subr.bf16.mxu0 0
      %1367 = vmatpush1.bf16.msra.mxu0 0
      %1368 = vmatprep.subr.bf16.mxu0 0
      %1369 = vmatpush1.bf16.msra.mxu0 0
      %1370 = vmatprep.subr.bf16.mxu0 0
      %1371 = vmatpush1.bf16.msra.mxu0 0
      %1372 = vmatprep.subr.bf16.mxu0 0
      %1373 = vmatpush1.bf16.msra.mxu0 0
      %1374 = vmatprep.subr.bf16.mxu0 0
      %1375 = vmatpush1.bf16.msra.mxu0 0
      %1376 = vmatprep.subr.bf16.mxu0 0
      %1377 = vmatpush1.bf16.msra.mxu0 0
      %1378 = vmatprep.mubr.bf16.mxu0 0
      %1379 = vmatmul.mubr.bf16.gmra.mrb[0].mxu0 %v1332
      %v1380 = vpop.f32.mrb[0].mxu0
      %v1381 = vadd.f32 0.0, %v1380
      %v1382 = vpop.f32.mrb[0].mxu0
      %v1383 = vpop.f32.mrb[0].mxu0
      %v1384 = vadd.f32 0.0, %v1383
      %v1385 = vpop.f32.mrb[0].mxu0
      %1386 = vmatprep.mubr.bf16.mxu0 0
      %1387 = vmatmul.mubr.bf16.gmra.mrb[0].mxu0 %v1335
      %v1388 = vpop.f32.mrb[0].mxu0
      %v1389 = vadd.f32 0.0, %v1388
      %v1390 = vpop.f32.mrb[0].mxu0
      %v1391 = vpop.f32.mrb[0].mxu0
      %v1392 = vadd.f32 0.0, %v1391
      %v1393 = vpop.f32.mrb[0].mxu0
      %1394 = vmatprep.mubr.bf16.mxu0 0
      %1395 = vmatmul.mubr.bf16.gmra.mrb[0].mxu0 %v1338
      %v1396 = vpop.f32.mrb[0].mxu0
      %v1397 = vadd.f32 0.0, %v1396
      %v1398 = vpop.f32.mrb[0].mxu0
      %v1399 = vpop.f32.mrb[0].mxu0
      %v1400 = vadd.f32 0.0, %v1399
      %v1401 = vpop.f32.mrb[0].mxu0
      %1402 = vmatprep.mubr.bf16.mxu0 0
      %1403 = vmatmul.mubr.bf16.gmra.mrb[0].mxu0 %v1341
      %v1404 = vpop.f32.mrb[0].mxu0
      %v1405 = vadd.f32 0.0, %v1404
      %v1406 = vpop.f32.mrb[0].mxu0
      %v1407 = vpop.f32.mrb[0].mxu0
      %v1408 = vadd.f32 0.0, %v1407
      %v1409 = vpop.f32.mrb[0].mxu0
      %1410 = vdwg.mxu0
      %v1411 = vadd.f32 %v1292, %v1381
      %v1412 = vadd.f32 %v1293, %v1384
      %v1413 = vadd.f32 %v1294, %v1389
      %v1414 = vadd.f32 %v1295, %v1392
      %v1415 = vadd.f32 %v1296, %v1397
      %v1416 = vadd.f32 %v1297, %v1400
      %v1417 = vadd.f32 %v1298, %v1405
      %v1418 = vadd.f32 %v1299, %v1408
      %v1419 = vld [vmem:[%s1181] sm:$0xf]
      %v1420 = vld [vmem:[%s1181 + $0x4] sm:$0x1]
      %v1421 = vld [vmem:[%s1181 + $0x8] sm:$0xf]
      %v1422 = vld [vmem:[%s1181 + $0xc] sm:$0x1]
      %v1423 = vld [vmem:[%s1181 + $0x10] sm:$0xf]
      %v1424 = vld [vmem:[%s1181 + $0x14] sm:$0x1]
      %v1425 = vld [vmem:[%s1181 + $0x18] sm:$0xf]
      %v1426 = vld [vmem:[%s1181 + $0x1c] sm:$0x1]
      %v1427 = vld [vmem:[%s1181 + $0x20] sm:$0xf]
      %v1428 = vld [vmem:[%s1181 + $0x24] sm:$0x1]
      %v1429 = vld [vmem:[%s1181 + $0x28] sm:$0xf]
      %v1430 = vld [vmem:[%s1181 + $0x2c] sm:$0x1]
      %v1431 = vld [vmem:[%s1181 + $0x30] sm:$0xf]
      %v1432 = vld [vmem:[%s1181 + $0x34] sm:$0x1]
      %v1433 = vld [vmem:[%s1181 + $0x38] sm:$0xf]
      %v1434 = vld [vmem:[%s1181 + $0x3c] sm:$0x1]
      %v1436 = vshrl.u32 %v1419, 16
      %v1438 = vrot.slane %v1436, 4
      %v1439 = vshll.u32 %v1419, 16
      %v1441 = vrot.slane %v1439, 5
      %v1442 = vor.u32 %v1438, %v1441
      %v1443 = vrot.slane %v1442, 4
      %v1445 = vshll.u32 %v1420, 16
      %v1447 = vrot.slane %v1445, 5
      %v1448 = vsel %vm498, %v1443, %v1447
      %v1450 = vshrl.u32 %v1421, 16
      %v1452 = vrot.slane %v1450, 4
      %v1453 = vshll.u32 %v1421, 16
      %v1455 = vrot.slane %v1453, 5
      %v1456 = vor.u32 %v1452, %v1455
      %v1457 = vrot.slane %v1456, 4
      %v1459 = vshll.u32 %v1422, 16
      %v1461 = vrot.slane %v1459, 5
      %v1462 = vsel %vm498, %v1457, %v1461
      %v1464 = vshrl.u32 %v1423, 16
      %v1466 = vrot.slane %v1464, 4
      %v1467 = vshll.u32 %v1423, 16
      %v1469 = vrot.slane %v1467, 5
      %v1470 = vor.u32 %v1466, %v1469
      %v1471 = vrot.slane %v1470, 4
      %v1473 = vshll.u32 %v1424, 16
      %v1475 = vrot.slane %v1473, 5
      %v1476 = vsel %vm498, %v1471, %v1475
      %v1478 = vshrl.u32 %v1425, 16
      %v1480 = vrot.slane %v1478, 4
      %v1481 = vshll.u32 %v1425, 16
      %v1483 = vrot.slane %v1481, 5
      %v1484 = vor.u32 %v1480, %v1483
      %v1485 = vrot.slane %v1484, 4
      %v1487 = vshll.u32 %v1426, 16
      %v1489 = vrot.slane %v1487, 5
      %v1490 = vsel %vm498, %v1485, %v1489
      %v1492 = vshrl.u32 %v1427, 16
      %v1494 = vrot.slane %v1492, 4
      %v1495 = vshll.u32 %v1427, 16
      %v1497 = vrot.slane %v1495, 5
      %v1498 = vor.u32 %v1494, %v1497
      %v1499 = vrot.slane %v1498, 4
      %v1501 = vshll.u32 %v1428, 16
      %v1503 = vrot.slane %v1501, 5
      %v1504 = vsel %vm498, %v1499, %v1503
      %v1506 = vshrl.u32 %v1429, 16
      %v1508 = vrot.slane %v1506, 4
      %v1509 = vshll.u32 %v1429, 16
      %v1511 = vrot.slane %v1509, 5
      %v1512 = vor.u32 %v1508, %v1511
      %v1513 = vrot.slane %v1512, 4
      %v1515 = vshll.u32 %v1430, 16
      %v1517 = vrot.slane %v1515, 5
      %v1518 = vsel %vm498, %v1513, %v1517
      %v1520 = vshrl.u32 %v1431, 16
      %v1522 = vrot.slane %v1520, 4
      %v1523 = vshll.u32 %v1431, 16
      %v1525 = vrot.slane %v1523, 5
      %v1526 = vor.u32 %v1522, %v1525
      %v1527 = vrot.slane %v1526, 4
      %v1529 = vshll.u32 %v1432, 16
      %v1531 = vrot.slane %v1529, 5
      %v1532 = vsel %vm498, %v1527, %v1531
      %v1534 = vshrl.u32 %v1433, 16
      %v1536 = vrot.slane %v1534, 4
      %v1537 = vshll.u32 %v1433, 16
      %v1539 = vrot.slane %v1537, 5
      %v1540 = vor.u32 %v1536, %v1539
      %v1541 = vrot.slane %v1540, 4
      %v1543 = vshll.u32 %v1434, 16
      %v1545 = vrot.slane %v1543, 5
      %v1546 = vsel %vm498, %v1541, %v1545
      %s1547 = scalar_lea.vmem %s1, 32
      %v1548 = vld [vmem:[%s1547] sm:$0xf]
      %v1549 = vunpack.c.l.b16 %v1448
      %v1550 = vunpack.c.l.b16 %v1462
      %v1551 = vunpack.c.l.b16 %v1476
      %v1552 = vunpack.c.l.b16 %v1490
      %v1553 = vunpack.c.l.b16 %v1504
      %v1554 = vunpack.c.l.b16 %v1518
      %v1555 = vunpack.c.l.b16 %v1532
      %v1556 = vunpack.c.l.b16 %v1546
      %v1557 = vpack.c.b16 %v1550, %v1549
      %v1558 = vpack.c.b16 %v1552, %v1551
      %v1559 = vpack.c.b16 %v1554, %v1553
      %v1560 = vpack.c.b16 %v1556, %v1555
      %v1562 = vsel %vm298, %v1557, 0
      %v1565 = vsel %vm298, %v1558, 0
      %v1568 = vsel %vm298, %v1559, 0
      %v1571 = vsel %vm298, %v1560, 0
      %v1574 = vsel %vm311, %v1548, 0
      %1576 = vmatprep.subr.bf16.mxu0 0
      %1577 = vmatpush1.bf16.msra.mxu0 %v1574
      %1578 = vmatprep.subr.bf16.mxu0 0
      %1579 = vmatpush1.bf16.msra.mxu0 0
      %1580 = vmatprep.subr.bf16.mxu0 0
      %1581 = vmatpush1.bf16.msra.mxu0 0
      %1582 = vmatprep.subr.bf16.mxu0 0
      %1583 = vmatpush1.bf16.msra.mxu0 0
      %1584 = vmatprep.subr.bf16.mxu0 0
      %1585 = vmatpush1.bf16.msra.mxu0 0
      %1586 = vmatprep.subr.bf16.mxu0 0
      %1587 = vmatpush1.bf16.msra.mxu0 0
      %1588 = vmatprep.subr.bf16.mxu0 0
      %1589 = vmatpush1.bf16.msra.mxu0 0
      %1590 = vmatprep.subr.bf16.mxu0 0
      %1591 = vmatpush1.bf16.msra.mxu0 0
      %1592 = vmatprep.subr.bf16.mxu0 0
      %1593 = vmatpush1.bf16.msra.mxu0 0
      %1594 = vmatprep.subr.bf16.mxu0 0
      %1595 = vmatpush1.bf16.msra.mxu0 0
      %1596 = vmatprep.subr.bf16.mxu0 0
      %1597 = vmatpush1.bf16.msra.mxu0 0
      %1598 = vmatprep.subr.bf16.mxu0 0
      %1599 = vmatpush1.bf16.msra.mxu0 0
      %1600 = vmatprep.subr.bf16.mxu0 0
      %1601 = vmatpush1.bf16.msra.mxu0 0
      %1602 = vmatprep.subr.bf16.mxu0 0
      %1603 = vmatpush1.bf16.msra.mxu0 0
      %1604 = vmatprep.subr.bf16.mxu0 0
      %1605 = vmatpush1.bf16.msra.mxu0 0
      %1606 = vmatprep.subr.bf16.mxu0 0
      %1607 = vmatpush1.bf16.msra.mxu0 0
      %1608 = vmatprep.mubr.bf16.mxu0 0
      %1609 = vmatmul.mubr.bf16.gmra.mrb[0].mxu0 %v1562
      %v1610 = vpop.f32.mrb[0].mxu0
      %v1611 = vadd.f32 0.0, %v1610
      %v1612 = vpop.f32.mrb[0].mxu0
      %v1613 = vpop.f32.mrb[0].mxu0
      %v1614 = vadd.f32 0.0, %v1613
      %v1615 = vpop.f32.mrb[0].mxu0
      %1616 = vmatprep.mubr.bf16.mxu0 0
      %1617 = vmatmul.mubr.bf16.gmra.mrb[0].mxu0 %v1565
      %v1618 = vpop.f32.mrb[0].mxu0
      %v1619 = vadd.f32 0.0, %v1618
      %v1620 = vpop.f32.mrb[0].mxu0
      %v1621 = vpop.f32.mrb[0].mxu0
      %v1622 = vadd.f32 0.0, %v1621
      %v1623 = vpop.f32.mrb[0].mxu0
      %1624 = vmatprep.mubr.bf16.mxu0 0
      %1625 = vmatmul.mubr.bf16.gmra.mrb[0].mxu0 %v1568
      %v1626 = vpop.f32.mrb[0].mxu0
      %v1627 = vadd.f32 0.0, %v1626
      %v1628 = vpop.f32.mrb[0].mxu0
      %v1629 = vpop.f32.mrb[0].mxu0
      %v1630 = vadd.f32 0.0, %v1629
      %v1631 = vpop.f32.mrb[0].mxu0
      %1632 = vmatprep.mubr.bf16.mxu0 0
      %1633 = vmatmul.mubr.bf16.gmra.mrb[0].mxu0 %v1571
      %v1634 = vpop.f32.mrb[0].mxu0
      %v1635 = vadd.f32 0.0, %v1634
      %v1636 = vpop.f32.mrb[0].mxu0
      %v1637 = vpop.f32.mrb[0].mxu0
      %v1638 = vadd.f32 0.0, %v1637
      %v1639 = vpop.f32.mrb[0].mxu0
      %1640 = vdwg.mxu0
      %v1641 = vadd.f32 %v1411, %v1611
      %v1642 = vadd.f32 %v1412, %v1614
      %v1643 = vadd.f32 %v1413, %v1619
      %v1644 = vadd.f32 %v1414, %v1622
      %v1645 = vadd.f32 %v1415, %v1627
      %v1646 = vadd.f32 %v1416, %v1630
      %v1647 = vadd.f32 %v1417, %v1635
      %v1648 = vadd.f32 %v1418, %v1638
      %v1649 = vld [vmem:[%s2] sm:$0x1]
      %v1651 = vlaneseq
      %v1652 = vshrl.u32 %v1651, 7
      %v1653 = vsub.s32 0, %v1652
      %v1654 = vrot.slane %v1649, %v1653
      %v1656 = vadd.f32 %v1641, %v1654
      %v1657 = vadd.f32 %v1642, %v1654
      %v1658 = vadd.f32 %v1643, %v1654
      %v1659 = vadd.f32 %v1644, %v1654
      %v1660 = vadd.f32 %v1645, %v1654
      %v1661 = vadd.f32 %v1646, %v1654
      %v1662 = vadd.f32 %v1647, %v1654
      %v1663 = vadd.f32 %v1648, %v1654
      %v1664 = vmax.f32 %v1656, 0.0
      %v1665 = vmax.f32 %v1657, 0.0
      %v1666 = vmax.f32 %v1658, 0.0
      %v1667 = vmax.f32 %v1659, 0.0
      %v1668 = vmax.f32 %v1660, 0.0
      %v1669 = vmax.f32 %v1661, 0.0
      %v1670 = vmax.f32 %v1662, 0.0
      %v1671 = vmax.f32 %v1663, 0.0
      %v1672 = vpack.c.bf16 %v1665, %v1664
      %v1673 = vpack.c.bf16 %v1667, %v1666
      %v1674 = vpack.c.bf16 %v1669, %v1668
      %v1675 = vpack.c.bf16 %v1671, %v1670
      %1676 = vst [vmem:[#allocation2] sm:$0xf] 0
      %1677 = vst [vmem:[#allocation2 + $0x4] sm:$0x1] 0
      %1678 = vst [vmem:[#allocation2 + $0x8] sm:$0xf] 0
      %1679 = vst [vmem:[#allocation2 + $0xc] sm:$0x1] 0
      %1680 = vst [vmem:[#allocation2 + $0x10] sm:$0xf] 0
      %1681 = vst [vmem:[#allocation2 + $0x14] sm:$0x1] 0
      %1682 = vst [vmem:[#allocation2 + $0x18] sm:$0xf] 0
      %1683 = vst [vmem:[#allocation2 + $0x1c] sm:$0x1] 0
      %1684 = vst [vmem:[#allocation2 + $0x20] sm:$0xf] 0
      %1685 = vst [vmem:[#allocation2 + $0x24] sm:$0x1] 0
      %1686 = vst [vmem:[#allocation2 + $0x28] sm:$0xf] 0
      %1687 = vst [vmem:[#allocation2 + $0x2c] sm:$0x1] 0
      %1688 = vst [vmem:[#allocation2 + $0x30] sm:$0xf] 0
      %1689 = vst [vmem:[#allocation2 + $0x34] sm:$0x1] 0
      %1690 = vst [vmem:[#allocation2 + $0x38] sm:$0xf] 0
      %1691 = vst [vmem:[#allocation2 + $0x3c] sm:$0x1] 0
      %1692 = vst [vmem:[#allocation2 + $0x40] sm:$0xf] 0
      %1693 = vst [vmem:[#allocation2 + $0x44] sm:$0x1] 0
      %1694 = vst [vmem:[#allocation2 + $0x48] sm:$0xf] 0
      %1695 = vst [vmem:[#allocation2 + $0x4c] sm:$0x1] 0
      %v1700 = vunpack.c.l.b16 %v1672
      %v1701 = vunpack.c.h.b16 %v1672
      %v1702 = vunpack.c.l.b16 %v1673
      %v1703 = vunpack.c.h.b16 %v1673
      %v1704 = vunpack.c.l.b16 %v1674
      %v1705 = vunpack.c.h.b16 %v1674
      %v1706 = vunpack.c.l.b16 %v1675
      %v1707 = vunpack.c.h.b16 %v1675
      %v1708 = vpack.c.b16 %v1700, %v1700
      %v1709 = vpack.c.b16 %v1701, %v1701
      %v1710 = vpack.c.b16 %v1702, %v1702
      %v1711 = vpack.c.b16 %v1703, %v1703
      %v1712 = vpack.c.b16 %v1704, %v1704
      %v1713 = vpack.c.b16 %v1705, %v1705
      %v1714 = vpack.c.b16 %v1706, %v1706
      %v1715 = vpack.c.b16 %v1707, %v1707
      %v1717 = vshrl.u32 %v1708, 16
      %v1719 = vrot.slane %v1717, 7
      %v1720 = vshll.u32 %v1708, 16
      %v1722 = vor.u32 %v1719, %v1720
      %v1723 = vrot.slane %v1719, 4
      %v1725 = vshrl.u32 %v1709, 16
      %v1727 = vrot.slane %v1725, 7
      %v1728 = vshll.u32 %v1709, 16
      %v1730 = vor.u32 %v1727, %v1728
      %v1731 = vrot.slane %v1727, 4
      %v1733 = vshrl.u32 %v1710, 16
      %v1735 = vrot.slane %v1733, 7
      %v1736 = vshll.u32 %v1710, 16
      %v1738 = vor.u32 %v1735, %v1736
      %v1739 = vrot.slane %v1735, 4
      %v1741 = vshrl.u32 %v1711, 16
      %v1743 = vrot.slane %v1741, 7
      %v1744 = vshll.u32 %v1711, 16
      %v1746 = vor.u32 %v1743, %v1744
      %v1747 = vrot.slane %v1743, 4
      %v1749 = vshrl.u32 %v1712, 16
      %v1751 = vrot.slane %v1749, 7
      %v1752 = vshll.u32 %v1712, 16
      %v1754 = vor.u32 %v1751, %v1752
      %v1755 = vrot.slane %v1751, 4
      %v1757 = vshrl.u32 %v1713, 16
      %v1759 = vrot.slane %v1757, 7
      %v1760 = vshll.u32 %v1713, 16
      %v1762 = vor.u32 %v1759, %v1760
      %v1763 = vrot.slane %v1759, 4
      %v1765 = vshrl.u32 %v1714, 16
      %v1767 = vrot.slane %v1765, 7
      %v1768 = vshll.u32 %v1714, 16
      %v1770 = vor.u32 %v1767, %v1768
      %v1771 = vrot.slane %v1767, 4
      %v1773 = vshrl.u32 %v1715, 16
      %v1775 = vrot.slane %v1773, 7
      %v1776 = vshll.u32 %v1715, 16
      %v1778 = vor.u32 %v1775, %v1776
      %v1779 = vrot.slane %v1775, 4
      %s1796 = scalar_lea.vmem [#allocation2], 8
      %vm1797 = vcmask 1043456
      %vm1798 = vsmask.f32 7938
      %vm1799 = vmand %vm1797, %vm1798
      %v1800 = vld [vmem:[%s1796] sm:$0xf]
      %v1801 = vsel %vm1799, %v1722, %v1800
      %1802 = vst [vmem:[%s1796] sm:$0xf] %v1801
      %vm1803 = vcmask 1040384
      %vm1804 = vsmask.f32 256
      %vm1805 = vmand %vm1803, %vm1804
      %v1806 = vld [vmem:[%s1796 + $0x4] sm:$0x1]
      %v1807 = vsel %vm1805, %v1723, %v1806
      %1808 = vst [vmem:[%s1796 + $0x4] sm:$0x1] %v1807
      %v1809 = vld [vmem:[%s1796 + $0x8] sm:$0xf]
      %v1810 = vsel %vm1799, %v1730, %v1809
      %1811 = vst [vmem:[%s1796 + $0x8] sm:$0xf] %v1810
      %v1812 = vld [vmem:[%s1796 + $0xc] sm:$0x1]
      %v1813 = vsel %vm1805, %v1731, %v1812
      %1814 = vst [vmem:[%s1796 + $0xc] sm:$0x1] %v1813
      %v1815 = vld [vmem:[%s1796 + $0x10] sm:$0xf]
      %v1816 = vsel %vm1799, %v1738, %v1815
      %1817 = vst [vmem:[%s1796 + $0x10] sm:$0xf] %v1816
      %v1818 = vld [vmem:[%s1796 + $0x14] sm:$0x1]
      %v1819 = vsel %vm1805, %v1739, %v1818
      %1820 = vst [vmem:[%s1796 + $0x14] sm:$0x1] %v1819
      %v1821 = vld [vmem:[%s1796 + $0x18] sm:$0xf]
      %v1822 = vsel %vm1799, %v1746, %v1821
      %1823 = vst [vmem:[%s1796 + $0x18] sm:$0xf] %v1822
      %v1824 = vld [vmem:[%s1796 + $0x1c] sm:$0x1]
      %v1825 = vsel %vm1805, %v1747, %v1824
      %1826 = vst [vmem:[%s1796 + $0x1c] sm:$0x1] %v1825
      %v1827 = vld [vmem:[%s1796 + $0x20] sm:$0xf]
      %v1828 = vsel %vm1799, %v1754, %v1827
      %1829 = vst [vmem:[%s1796 + $0x20] sm:$0xf] %v1828
      %v1830 = vld [vmem:[%s1796 + $0x24] sm:$0x1]
      %v1831 = vsel %vm1805, %v1755, %v1830
      %1832 = vst [vmem:[%s1796 + $0x24] sm:$0x1] %v1831
      %v1833 = vld [vmem:[%s1796 + $0x28] sm:$0xf]
      %v1834 = vsel %vm1799, %v1762, %v1833
      %1835 = vst [vmem:[%s1796 + $0x28] sm:$0xf] %v1834
      %v1836 = vld [vmem:[%s1796 + $0x2c] sm:$0x1]
      %v1837 = vsel %vm1805, %v1763, %v1836
      %1838 = vst [vmem:[%s1796 + $0x2c] sm:$0x1] %v1837
      %v1839 = vld [vmem:[%s1796 + $0x30] sm:$0xf]
      %v1840 = vsel %vm1799, %v1770, %v1839
      %1841 = vst [vmem:[%s1796 + $0x30] sm:$0xf] %v1840
      %v1842 = vld [vmem:[%s1796 + $0x34] sm:$0x1]
      %v1843 = vsel %vm1805, %v1771, %v1842
      %1844 = vst [vmem:[%s1796 + $0x34] sm:$0x1] %v1843
      %v1845 = vld [vmem:[%s1796 + $0x38] sm:$0xf]
      %v1846 = vsel %vm1799, %v1778, %v1845
      %1847 = vst [vmem:[%s1796 + $0x38] sm:$0xf] %v1846
      %v1848 = vld [vmem:[%s1796 + $0x3c] sm:$0x1]
      %v1849 = vsel %vm1805, %v1779, %v1848
      %1850 = vst [vmem:[%s1796 + $0x3c] sm:$0x1] %v1849
      %v1851 = vld [vmem:[#allocation2] sm:$0xf]
      %v1852 = vld [vmem:[#allocation2 + $0x8] sm:$0xf]
      %v1853 = vld [vmem:[#allocation2 + $0x10] sm:$0xf]
      %v1854 = vld [vmem:[#allocation2 + $0x18] sm:$0xf]
      %v1855 = vld [vmem:[#allocation2 + $0x20] sm:$0xf]
      %v1856 = vld [vmem:[#allocation2 + $0x28] sm:$0xf]
      %v1857 = vld [vmem:[#allocation2 + $0x30] sm:$0xf]
      %v1858 = vld [vmem:[#allocation2 + $0x38] sm:$0xf]
      %v1859 = vld [vmem:[%s3] sm:$0xf]
      %v1860 = vld [vmem:[%s3 + $0x4] sm:$0xf]
      %v1861 = vld [vmem:[%s3 + $0x8] sm:$0xf]
      %v1862 = vld [vmem:[%s3 + $0xc] sm:$0xf]
      %v1863 = vld [vmem:[%s3 + $0x10] sm:$0xf]
      %v1864 = vld [vmem:[%s3 + $0x14] sm:$0xf]
      %v1865 = vld [vmem:[%s3 + $0x18] sm:$0xf]
      %v1866 = vld [vmem:[%s3 + $0x1c] sm:$0xf]
      %v1867 = vld [vmem:[%s3 + $0x20] sm:$0xf]
      %v1868 = vld [vmem:[%s3 + $0x24] sm:$0xf]
      %v1869 = vld [vmem:[%s3 + $0x28] sm:$0xf]
      %v1870 = vld [vmem:[%s3 + $0x2c] sm:$0xf]
      %v1871 = vld [vmem:[%s3 + $0x30] sm:$0xf]
      %v1872 = vld [vmem:[%s3 + $0x34] sm:$0xf]
      %v1873 = vld [vmem:[%s3 + $0x38] sm:$0xf]
      %v1874 = vld [vmem:[%s3 + $0x3c] sm:$0xf]
      %v1875 = vld [vmem:[#allocation2 + $0x4] sm:$0x1]
      %v1876 = vld [vmem:[#allocation2 + $0xc] sm:$0x1]
      %v1877 = vld [vmem:[#allocation2 + $0x14] sm:$0x1]
      %v1878 = vld [vmem:[#allocation2 + $0x1c] sm:$0x1]
      %v1879 = vld [vmem:[#allocation2 + $0x24] sm:$0x1]
      %v1880 = vld [vmem:[#allocation2 + $0x2c] sm:$0x1]
      %v1881 = vld [vmem:[#allocation2 + $0x34] sm:$0x1]
      %v1882 = vld [vmem:[#allocation2 + $0x3c] sm:$0x1]
      %v1884 = vshrl.u32 %v1851, 16
      %v1886 = vrot.slane %v1884, 4
      %v1887 = vshll.u32 %v1851, 16
      %v1889 = vrot.slane %v1887, 5
      %v1890 = vor.u32 %v1886, %v1889
      %v1891 = vrot.slane %v1890, 4
      %v1893 = vshll.u32 %v1875, 16
      %v1895 = vrot.slane %v1893, 5
      %v1896 = vsel %vm498, %v1891, %v1895
      %v1898 = vshrl.u32 %v1852, 16
      %v1900 = vrot.slane %v1898, 4
      %v1901 = vshll.u32 %v1852, 16
      %v1903 = vrot.slane %v1901, 5
      %v1904 = vor.u32 %v1900, %v1903
      %v1905 = vrot.slane %v1904, 4
      %v1907 = vshll.u32 %v1876, 16
      %v1909 = vrot.slane %v1907, 5
      %v1910 = vsel %vm498, %v1905, %v1909
      %v1912 = vshrl.u32 %v1853, 16
      %v1914 = vrot.slane %v1912, 4
      %v1915 = vshll.u32 %v1853, 16
      %v1917 = vrot.slane %v1915, 5
      %v1918 = vor.u32 %v1914, %v1917
      %v1919 = vrot.slane %v1918, 4
      %v1921 = vshll.u32 %v1877, 16
      %v1923 = vrot.slane %v1921, 5
      %v1924 = vsel %vm498, %v1919, %v1923
      %v1926 = vshrl.u32 %v1854, 16
      %v1928 = vrot.slane %v1926, 4
      %v1929 = vshll.u32 %v1854, 16
      %v1931 = vrot.slane %v1929, 5
      %v1932 = vor.u32 %v1928, %v1931
      %v1933 = vrot.slane %v1932, 4
      %v1935 = vshll.u32 %v1878, 16
      %v1937 = vrot.slane %v1935, 5
      %v1938 = vsel %vm498, %v1933, %v1937
      %v1940 = vshrl.u32 %v1855, 16
      %v1942 = vrot.slane %v1940, 4
      %v1943 = vshll.u32 %v1855, 16
      %v1945 = vrot.slane %v1943, 5
      %v1946 = vor.u32 %v1942, %v1945
      %v1947 = vrot.slane %v1946, 4
      %v1949 = vshll.u32 %v1879, 16
      %v1951 = vrot.slane %v1949, 5
      %v1952 = vsel %vm498, %v1947, %v1951
      %v1954 = vshrl.u32 %v1856, 16
      %v1956 = vrot.slane %v1954, 4
      %v1957 = vshll.u32 %v1856, 16
      %v1959 = vrot.slane %v1957, 5
      %v1960 = vor.u32 %v1956, %v1959
      %v1961 = vrot.slane %v1960, 4
      %v1963 = vshll.u32 %v1880, 16
      %v1965 = vrot.slane %v1963, 5
      %v1966 = vsel %vm498, %v1961, %v1965
      %v1968 = vshrl.u32 %v1857, 16
      %v1970 = vrot.slane %v1968, 4
      %v1971 = vshll.u32 %v1857, 16
      %v1973 = vrot.slane %v1971, 5
      %v1974 = vor.u32 %v1970, %v1973
      %v1975 = vrot.slane %v1974, 4
      %v1977 = vshll.u32 %v1881, 16
      %v1979 = vrot.slane %v1977, 5
      %v1980 = vsel %vm498, %v1975, %v1979
      %v1982 = vshrl.u32 %v1858, 16
      %v1984 = vrot.slane %v1982, 4
      %v1985 = vshll.u32 %v1858, 16
      %v1987 = vrot.slane %v1985, 5
      %v1988 = vor.u32 %v1984, %v1987
      %v1989 = vrot.slane %v1988, 4
      %v1991 = vshll.u32 %v1882, 16
      %v1993 = vrot.slane %v1991, 5
      %v1994 = vsel %vm498, %v1989, %v1993
      %s1995 = scalar_lea.vmem %s3, 64
      %v1996 = vld [vmem:[%s1995] sm:$0xf]
      %v1997 = vld [vmem:[%s1995 + $0x4] sm:$0xf]
      %v1998 = vld [vmem:[%s1995 + $0x8] sm:$0xf]
      %v1999 = vld [vmem:[%s1995 + $0xc] sm:$0xf]
      %v2000 = vld [vmem:[%s1995 + $0x10] sm:$0xf]
      %v2001 = vld [vmem:[%s1995 + $0x14] sm:$0xf]
      %v2002 = vld [vmem:[%s1995 + $0x18] sm:$0xf]
      %v2003 = vld [vmem:[%s1995 + $0x1c] sm:$0xf]
      %v2004 = vld [vmem:[%s1995 + $0x20] sm:$0xf]
      %v2005 = vld [vmem:[%s1995 + $0x24] sm:$0xf]
      %v2006 = vld [vmem:[%s1995 + $0x28] sm:$0xf]
      %v2007 = vld [vmem:[%s1995 + $0x2c] sm:$0xf]
      %v2008 = vld [vmem:[%s1995 + $0x30] sm:$0xf]
      %v2009 = vld [vmem:[%s1995 + $0x34] sm:$0xf]
      %v2010 = vld [vmem:[%s1995 + $0x38] sm:$0xf]
      %v2011 = vld [vmem:[%s1995 + $0x3c] sm:$0xf]
      %v2012 = vunpack.c.l.b16 %v1896
      %v2013 = vunpack.c.l.b16 %v1910
      %v2014 = vunpack.c.l.b16 %v1924
      %v2015 = vunpack.c.l.b16 %v1938
      %v2016 = vunpack.c.l.b16 %v1952
      %v2017 = vunpack.c.l.b16 %v1966
      %v2018 = vunpack.c.l.b16 %v1980
      %v2019 = vunpack.c.l.b16 %v1994
      %v2020 = vpack.c.b16 %v2013, %v2012
      %v2021 = vpack.c.b16 %v2015, %v2014
      %v2022 = vpack.c.b16 %v2017, %v2016
      %v2023 = vpack.c.b16 %v2019, %v2018
      %v2044 = vunpack.c.l.b16 %v1996
      %v2045 = vunpack.c.l.b16 %v1997
      %v2046 = vunpack.c.l.b16 %v1998
      %v2047 = vunpack.c.l.b16 %v1999
      %v2048 = vunpack.c.l.b16 %v2000
      %v2049 = vunpack.c.l.b16 %v2001
      %v2050 = vunpack.c.l.b16 %v2002
      %v2051 = vunpack.c.l.b16 %v2003
      %v2052 = vunpack.c.l.b16 %v2004
      %v2053 = vunpack.c.l.b16 %v2005
      %v2054 = vunpack.c.l.b16 %v2006
      %v2055 = vunpack.c.l.b16 %v2007
      %v2056 = vunpack.c.l.b16 %v2008
      %v2057 = vunpack.c.l.b16 %v2009
      %v2058 = vunpack.c.l.b16 %v2010
      %v2059 = vunpack.c.l.b16 %v2011
      %v2060 = vpack.c.b16 %v2045, %v2044
      %v2061 = vpack.c.b16 %v2047, %v2046
      %v2062 = vpack.c.b16 %v2049, %v2048
      %v2063 = vpack.c.b16 %v2051, %v2050
      %v2064 = vpack.c.b16 %v2053, %v2052
      %v2065 = vpack.c.b16 %v2055, %v2054
      %v2066 = vpack.c.b16 %v2057, %v2056
      %v2067 = vpack.c.b16 %v2059, %v2058
      %2076 = vmatprep.subr.bf16.mxu0 0
      %2077 = vmatpush1.bf16.msra.mxu0 %v2060
      %2078 = vmatprep.subr.bf16.mxu0 0
      %2079 = vmatpush1.bf16.msra.mxu0 %v2061
      %2080 = vmatprep.subr.bf16.mxu0 0
      %2081 = vmatpush1.bf16.msra.mxu0 %v2062
      %2082 = vmatprep.subr.bf16.mxu0 0
      %2083 = vmatpush1.bf16.msra.mxu0 %v2063
      %2084 = vmatprep.subr.bf16.mxu0 0
      %2085 = vmatpush1.bf16.msra.mxu0 %v2064
      %2086 = vmatprep.subr.bf16.mxu0 0
      %2087 = vmatpush1.bf16.msra.mxu0 %v2065
      %2088 = vmatprep.subr.bf16.mxu0 0
      %2089 = vmatpush1.bf16.msra.mxu0 %v2066
      %2090 = vmatprep.subr.bf16.mxu0 0
      %2091 = vmatpush1.bf16.msra.mxu0 %v2067
      %2092 = vmatprep.subr.bf16.mxu0 0
      %2093 = vmatpush1.bf16.msra.mxu0 0
      %2094 = vmatprep.subr.bf16.mxu0 0
      %2095 = vmatpush1.bf16.msra.mxu0 0
      %2096 = vmatprep.subr.bf16.mxu0 0
      %2097 = vmatpush1.bf16.msra.mxu0 0
      %2098 = vmatprep.subr.bf16.mxu0 0
      %2099 = vmatpush1.bf16.msra.mxu0 0
      %2100 = vmatprep.subr.bf16.mxu0 0
      %2101 = vmatpush1.bf16.msra.mxu0 0
      %2102 = vmatprep.subr.bf16.mxu0 0
      %2103 = vmatpush1.bf16.msra.mxu0 0
      %2104 = vmatprep.subr.bf16.mxu0 0
      %2105 = vmatpush1.bf16.msra.mxu0 0
      %2106 = vmatprep.subr.bf16.mxu0 0
      %2107 = vmatpush1.bf16.msra.mxu0 0
      %2108 = vmatprep.mubr.bf16.mxu0 0
      %2109 = vmatmul.mubr.bf16.gmra.mrb[0].mxu0 %v2020
      %v2110 = vpop.f32.mrb[0].mxu0
      %v2111 = vadd.f32 0.0, %v2110
      %v2112 = vpop.f32.mrb[0].mxu0
      %v2113 = vpop.f32.mrb[0].mxu0
      %v2114 = vadd.f32 0.0, %v2113
      %v2115 = vpop.f32.mrb[0].mxu0
      %2116 = vmatprep.mubr.bf16.mxu0 0
      %2117 = vmatmul.mubr.bf16.gmra.mrb[0].mxu0 %v2021
      %v2118 = vpop.f32.mrb[0].mxu0
      %v2119 = vadd.f32 0.0, %v2118
      %v2120 = vpop.f32.mrb[0].mxu0
      %v2121 = vpop.f32.mrb[0].mxu0
      %v2122 = vadd.f32 0.0, %v2121
      %v2123 = vpop.f32.mrb[0].mxu0
      %2124 = vmatprep.mubr.bf16.mxu0 0
      %2125 = vmatmul.mubr.bf16.gmra.mrb[0].mxu0 %v2022
      %v2126 = vpop.f32.mrb[0].mxu0
      %v2127 = vadd.f32 0.0, %v2126
      %v2128 = vpop.f32.mrb[0].mxu0
      %v2129 = vpop.f32.mrb[0].mxu0
      %v2130 = vadd.f32 0.0, %v2129
      %v2131 = vpop.f32.mrb[0].mxu0
      %2132 = vmatprep.mubr.bf16.mxu0 0
      %2133 = vmatmul.mubr.bf16.gmra.mrb[0].mxu0 %v2023
      %v2134 = vpop.f32.mrb[0].mxu0
      %v2135 = vadd.f32 0.0, %v2134
      %v2136 = vpop.f32.mrb[0].mxu0
      %v2137 = vpop.f32.mrb[0].mxu0
      %v2138 = vadd.f32 0.0, %v2137
      %v2139 = vpop.f32.mrb[0].mxu0
      %2140 = vdwg.mxu0
      %v2149 = vunpack.c.l.b16 %v1851
      %v2150 = vunpack.c.l.b16 %v1852
      %v2151 = vunpack.c.l.b16 %v1853
      %v2152 = vunpack.c.l.b16 %v1854
      %v2153 = vunpack.c.l.b16 %v1855
      %v2154 = vunpack.c.l.b16 %v1856
      %v2155 = vunpack.c.l.b16 %v1857
      %v2156 = vunpack.c.l.b16 %v1858
      %v2157 = vpack.c.b16 %v2150, %v2149
      %v2158 = vpack.c.b16 %v2152, %v2151
      %v2159 = vpack.c.b16 %v2154, %v2153
      %v2160 = vpack.c.b16 %v2156, %v2155
      %v2181 = vunpack.c.l.b16 %v1859
      %v2182 = vunpack.c.l.b16 %v1860
      %v2183 = vunpack.c.l.b16 %v1861
      %v2184 = vunpack.c.l.b16 %v1862
      %v2185 = vunpack.c.l.b16 %v1863
      %v2186 = vunpack.c.l.b16 %v1864
      %v2187 = vunpack.c.l.b16 %v1865
      %v2188 = vunpack.c.l.b16 %v1866
      %v2189 = vunpack.c.l.b16 %v1867
      %v2190 = vunpack.c.l.b16 %v1868
      %v2191 = vunpack.c.l.b16 %v1869
      %v2192 = vunpack.c.l.b16 %v1870
      %v2193 = vunpack.c.l.b16 %v1871
      %v2194 = vunpack.c.l.b16 %v1872
      %v2195 = vunpack.c.l.b16 %v1873
      %v2196 = vunpack.c.l.b16 %v1874
      %v2197 = vpack.c.b16 %v2182, %v2181
      %v2198 = vpack.c.b16 %v2184, %v2183
      %v2199 = vpack.c.b16 %v2186, %v2185
      %v2200 = vpack.c.b16 %v2188, %v2187
      %v2201 = vpack.c.b16 %v2190, %v2189
      %v2202 = vpack.c.b16 %v2192, %v2191
      %v2203 = vpack.c.b16 %v2194, %v2193
      %v2204 = vpack.c.b16 %v2196, %v2195
      %2213 = vmatprep.subr.bf16.mxu0 0
      %2214 = vmatpush1.bf16.msra.mxu0 %v2197
      %2215 = vmatprep.subr.bf16.mxu0 0
      %2216 = vmatpush1.bf16.msra.mxu0 %v2198
      %2217 = vmatprep.subr.bf16.mxu0 0
      %2218 = vmatpush1.bf16.msra.mxu0 %v2199
      %2219 = vmatprep.subr.bf16.mxu0 0
      %2220 = vmatpush1.bf16.msra.mxu0 %v2200
      %2221 = vmatprep.subr.bf16.mxu0 0
      %2222 = vmatpush1.bf16.msra.mxu0 %v2201
      %2223 = vmatprep.subr.bf16.mxu0 0
      %2224 = vmatpush1.bf16.msra.mxu0 %v2202
      %2225 = vmatprep.subr.bf16.mxu0 0
      %2226 = vmatpush1.bf16.msra.mxu0 %v2203
      %2227 = vmatprep.subr.bf16.mxu0 0
      %2228 = vmatpush1.bf16.msra.mxu0 %v2204
      %2229 = vmatprep.subr.bf16.mxu0 0
      %2230 = vmatpush1.bf16.msra.mxu0 0
      %2231 = vmatprep.subr.bf16.mxu0 0
      %2232 = vmatpush1.bf16.msra.mxu0 0
      %2233 = vmatprep.subr.bf16.mxu0 0
      %2234 = vmatpush1.bf16.msra.mxu0 0
      %2235 = vmatprep.subr.bf16.mxu0 0
      %2236 = vmatpush1.bf16.msra.mxu0 0
      %2237 = vmatprep.subr.bf16.mxu0 0
      %2238 = vmatpush1.bf16.msra.mxu0 0
      %2239 = vmatprep.subr.bf16.mxu0 0
      %2240 = vmatpush1.bf16.msra.mxu0 0
      %2241 = vmatprep.subr.bf16.mxu0 0
      %2242 = vmatpush1.bf16.msra.mxu0 0
      %2243 = vmatprep.subr.bf16.mxu0 0
      %2244 = vmatpush1.bf16.msra.mxu0 0
      %2245 = vmatprep.mubr.bf16.mxu0 0
      %2246 = vmatmul.mubr.bf16.gmra.mrb[0].mxu0 %v2157
      %v2247 = vpop.f32.mrb[0].mxu0
      %v2248 = vadd.f32 %v2111, %v2247
      %v2249 = vpop.f32.mrb[0].mxu0
      %v2250 = vpop.f32.mrb[0].mxu0
      %v2251 = vadd.f32 %v2114, %v2250
      %v2252 = vpop.f32.mrb[0].mxu0
      %2253 = vmatprep.mubr.bf16.mxu0 0
      %2254 = vmatmul.mubr.bf16.gmra.mrb[0].mxu0 %v2158
      %v2255 = vpop.f32.mrb[0].mxu0
      %v2256 = vadd.f32 %v2119, %v2255
      %v2257 = vpop.f32.mrb[0].mxu0
      %v2258 = vpop.f32.mrb[0].mxu0
      %v2259 = vadd.f32 %v2122, %v2258
      %v2260 = vpop.f32.mrb[0].mxu0
      %2261 = vmatprep.mubr.bf16.mxu0 0
      %2262 = vmatmul.mubr.bf16.gmra.mrb[0].mxu0 %v2159
      %v2263 = vpop.f32.mrb[0].mxu0
      %v2264 = vadd.f32 %v2127, %v2263
      %v2265 = vpop.f32.mrb[0].mxu0
      %v2266 = vpop.f32.mrb[0].mxu0
      %v2267 = vadd.f32 %v2130, %v2266
      %v2268 = vpop.f32.mrb[0].mxu0
      %2269 = vmatprep.mubr.bf16.mxu0 0
      %2270 = vmatmul.mubr.bf16.gmra.mrb[0].mxu0 %v2160
      %v2271 = vpop.f32.mrb[0].mxu0
      %v2272 = vadd.f32 %v2135, %v2271
      %v2273 = vpop.f32.mrb[0].mxu0
      %v2274 = vpop.f32.mrb[0].mxu0
      %v2275 = vadd.f32 %v2138, %v2274
      %v2276 = vpop.f32.mrb[0].mxu0
      %2277 = vdwg.mxu0
      %v2278 = vld [vmem:[#allocation2] sm:$0xe]
      %v2279 = vld [vmem:[#allocation2 + $0x8] sm:$0xe]
      %v2280 = vld [vmem:[#allocation2 + $0x10] sm:$0xe]
      %v2281 = vld [vmem:[#allocation2 + $0x18] sm:$0xe]
      %v2282 = vld [vmem:[#allocation2 + $0x20] sm:$0xe]
      %v2283 = vld [vmem:[#allocation2 + $0x28] sm:$0xe]
      %v2284 = vld [vmem:[#allocation2 + $0x30] sm:$0xe]
      %v2285 = vld [vmem:[#allocation2 + $0x38] sm:$0xe]
      %vm2302 = vcmask 1042432
      %vm2303 = vcmask 1046532
      %vm2304 = vmor %vm2302, %vm2303
      %v2305 = vrot.slane %v2278, 5
      %v2306 = vrot.slane %v2305, 4
      %v2307 = vrot.slane %v1875, 5
      %v2308 = vsel %vm2304, %v2306, %v2307
      %v2309 = vrot.slane %v2279, 5
      %v2310 = vrot.slane %v2309, 4
      %v2311 = vrot.slane %v1876, 5
      %v2312 = vsel %vm2304, %v2310, %v2311
      %v2313 = vrot.slane %v2280, 5
      %v2314 = vrot.slane %v2313, 4
      %v2315 = vrot.slane %v1877, 5
      %v2316 = vsel %vm2304, %v2314, %v2315
      %v2317 = vrot.slane %v2281, 5
      %v2318 = vrot.slane %v2317, 4
      %v2319 = vrot.slane %v1878, 5
      %v2320 = vsel %vm2304, %v2318, %v2319
      %v2321 = vrot.slane %v2282, 5
      %v2322 = vrot.slane %v2321, 4
      %v2323 = vrot.slane %v1879, 5
      %v2324 = vsel %vm2304, %v2322, %v2323
      %v2325 = vrot.slane %v2283, 5
      %v2326 = vrot.slane %v2325, 4
      %v2327 = vrot.slane %v1880, 5
      %v2328 = vsel %vm2304, %v2326, %v2327
      %v2329 = vrot.slane %v2284, 5
      %v2330 = vrot.slane %v2329, 4
      %v2331 = vrot.slane %v1881, 5
      %v2332 = vsel %vm2304, %v2330, %v2331
      %v2333 = vrot.slane %v2285, 5
      %v2334 = vrot.slane %v2333, 4
      %v2335 = vrot.slane %v1882, 5
      %v2336 = vsel %vm2304, %v2334, %v2335
      %s2337 = scalar_lea.vmem %s3, 128
      %v2338 = vld [vmem:[%s2337] sm:$0xf]
      %v2339 = vld [vmem:[%s2337 + $0x4] sm:$0xf]
      %v2340 = vld [vmem:[%s2337 + $0x8] sm:$0xf]
      %v2341 = vld [vmem:[%s2337 + $0xc] sm:$0xf]
      %v2342 = vld [vmem:[%s2337 + $0x10] sm:$0xf]
      %v2343 = vld [vmem:[%s2337 + $0x14] sm:$0xf]
      %v2344 = vld [vmem:[%s2337 + $0x18] sm:$0xf]
      %v2345 = vld [vmem:[%s2337 + $0x1c] sm:$0xf]
      %v2346 = vld [vmem:[%s2337 + $0x20] sm:$0xf]
      %v2347 = vld [vmem:[%s2337 + $0x24] sm:$0xf]
      %v2348 = vld [vmem:[%s2337 + $0x28] sm:$0xf]
      %v2349 = vld [vmem:[%s2337 + $0x2c] sm:$0xf]
      %v2350 = vld [vmem:[%s2337 + $0x30] sm:$0xf]
      %v2351 = vld [vmem:[%s2337 + $0x34] sm:$0xf]
      %v2352 = vld [vmem:[%s2337 + $0x38] sm:$0xf]
      %v2353 = vld [vmem:[%s2337 + $0x3c] sm:$0xf]
      %v2354 = vunpack.c.l.b16 %v2308
      %v2355 = vunpack.c.l.b16 %v2312
      %v2356 = vunpack.c.l.b16 %v2316
      %v2357 = vunpack.c.l.b16 %v2320
      %v2358 = vunpack.c.l.b16 %v2324
      %v2359 = vunpack.c.l.b16 %v2328
      %v2360 = vunpack.c.l.b16 %v2332
      %v2361 = vunpack.c.l.b16 %v2336
      %v2362 = vpack.c.b16 %v2355, %v2354
      %v2363 = vpack.c.b16 %v2357, %v2356
      %v2364 = vpack.c.b16 %v2359, %v2358
      %v2365 = vpack.c.b16 %v2361, %v2360
      %v2386 = vunpack.c.l.b16 %v2338
      %v2387 = vunpack.c.l.b16 %v2339
      %v2388 = vunpack.c.l.b16 %v2340
      %v2389 = vunpack.c.l.b16 %v2341
      %v2390 = vunpack.c.l.b16 %v2342
      %v2391 = vunpack.c.l.b16 %v2343
      %v2392 = vunpack.c.l.b16 %v2344
      %v2393 = vunpack.c.l.b16 %v2345
      %v2394 = vunpack.c.l.b16 %v2346
      %v2395 = vunpack.c.l.b16 %v2347
      %v2396 = vunpack.c.l.b16 %v2348
      %v2397 = vunpack.c.l.b16 %v2349
      %v2398 = vunpack.c.l.b16 %v2350
      %v2399 = vunpack.c.l.b16 %v2351
      %v2400 = vunpack.c.l.b16 %v2352
      %v2401 = vunpack.c.l.b16 %v2353
      %v2402 = vpack.c.b16 %v2387, %v2386
      %v2403 = vpack.c.b16 %v2389, %v2388
      %v2404 = vpack.c.b16 %v2391, %v2390
      %v2405 = vpack.c.b16 %v2393, %v2392
      %v2406 = vpack.c.b16 %v2395, %v2394
      %v2407 = vpack.c.b16 %v2397, %v2396
      %v2408 = vpack.c.b16 %v2399, %v2398
      %v2409 = vpack.c.b16 %v2401, %v2400
      %2418 = vmatprep.subr.bf16.mxu0 0
      %2419 = vmatpush1.bf16.msra.mxu0 %v2402
      %2420 = vmatprep.subr.bf16.mxu0 0
      %2421 = vmatpush1.bf16.msra.mxu0 %v2403
      %2422 = vmatprep.subr.bf16.mxu0 0
      %2423 = vmatpush1.bf16.msra.mxu0 %v2404
      %2424 = vmatprep.subr.bf16.mxu0 0
      %2425 = vmatpush1.bf16.msra.mxu0 %v2405
      %2426 = vmatprep.subr.bf16.mxu0 0
      %2427 = vmatpush1.bf16.msra.mxu0 %v2406
      %2428 = vmatprep.subr.bf16.mxu0 0
      %2429 = vmatpush1.bf16.msra.mxu0 %v2407
      %2430 = vmatprep.subr.bf16.mxu0 0
      %2431 = vmatpush1.bf16.msra.mxu0 %v2408
      %2432 = vmatprep.subr.bf16.mxu0 0
      %2433 = vmatpush1.bf16.msra.mxu0 %v2409
      %2434 = vmatprep.subr.bf16.mxu0 0
      %2435 = vmatpush1.bf16.msra.mxu0 0
      %2436 = vmatprep.subr.bf16.mxu0 0
      %2437 = vmatpush1.bf16.msra.mxu0 0
      %2438 = vmatprep.subr.bf16.mxu0 0
      %2439 = vmatpush1.bf16.msra.mxu0 0
      %2440 = vmatprep.subr.bf16.mxu0 0
      %2441 = vmatpush1.bf16.msra.mxu0 0
      %2442 = vmatprep.subr.bf16.mxu0 0
      %2443 = vmatpush1.bf16.msra.mxu0 0
      %2444 = vmatprep.subr.bf16.mxu0 0
      %2445 = vmatpush1.bf16.msra.mxu0 0
      %2446 = vmatprep.subr.bf16.mxu0 0
      %2447 = vmatpush1.bf16.msra.mxu0 0
      %2448 = vmatprep.subr.bf16.mxu0 0
      %2449 = vmatpush1.bf16.msra.mxu0 0
      %2450 = vmatprep.mubr.bf16.mxu0 0
      %2451 = vmatmul.mubr.bf16.gmra.mrb[0].mxu0 %v2362
      %v2452 = vpop.f32.mrb[0].mxu0
      %v2453 = vadd.f32 0.0, %v2452
      %v2454 = vpop.f32.mrb[0].mxu0
      %v2455 = vpop.f32.mrb[0].mxu0
      %v2456 = vadd.f32 0.0, %v2455
      %v2457 = vpop.f32.mrb[0].mxu0
      %2458 = vmatprep.mubr.bf16.mxu0 0
      %2459 = vmatmul.mubr.bf16.gmra.mrb[0].mxu0 %v2363
      %v2460 = vpop.f32.mrb[0].mxu0
      %v2461 = vadd.f32 0.0, %v2460
      %v2462 = vpop.f32.mrb[0].mxu0
      %v2463 = vpop.f32.mrb[0].mxu0
      %v2464 = vadd.f32 0.0, %v2463
      %v2465 = vpop.f32.mrb[0].mxu0
      %2466 = vmatprep.mubr.bf16.mxu0 0
      %2467 = vmatmul.mubr.bf16.gmra.mrb[0].mxu0 %v2364
      %v2468 = vpop.f32.mrb[0].mxu0
      %v2469 = vadd.f32 0.0, %v2468
      %v2470 = vpop.f32.mrb[0].mxu0
      %v2471 = vpop.f32.mrb[0].mxu0
      %v2472 = vadd.f32 0.0, %v2471
      %v2473 = vpop.f32.mrb[0].mxu0
      %2474 = vmatprep.mubr.bf16.mxu0 0
      %2475 = vmatmul.mubr.bf16.gmra.mrb[0].mxu0 %v2365
      %v2476 = vpop.f32.mrb[0].mxu0
      %v2477 = vadd.f32 0.0, %v2476
      %v2478 = vpop.f32.mrb[0].mxu0
      %v2479 = vpop.f32.mrb[0].mxu0
      %v2480 = vadd.f32 0.0, %v2479
      %v2481 = vpop.f32.mrb[0].mxu0
      %2482 = vdwg.mxu0
      %v2483 = vadd.f32 %v2248, %v2453
      %v2484 = vadd.f32 %v2251, %v2456
      %v2485 = vadd.f32 %v2256, %v2461
      %v2486 = vadd.f32 %v2259, %v2464
      %v2487 = vadd.f32 %v2264, %v2469
      %v2488 = vadd.f32 %v2267, %v2472
      %v2489 = vadd.f32 %v2272, %v2477
      %v2490 = vadd.f32 %v2275, %v2480
      %v2491 = vld [vmem:[%s1796] sm:$0xf]
      %v2492 = vld [vmem:[%s1796 + $0x8] sm:$0xf]
      %v2493 = vld [vmem:[%s1796 + $0x10] sm:$0xf]
      %v2494 = vld [vmem:[%s1796 + $0x18] sm:$0xf]
      %v2495 = vld [vmem:[%s1796 + $0x20] sm:$0xf]
      %v2496 = vld [vmem:[%s1796 + $0x28] sm:$0xf]
      %v2497 = vld [vmem:[%s1796 + $0x30] sm:$0xf]
      %v2498 = vld [vmem:[%s1796 + $0x38] sm:$0xf]
      %s2499 = scalar_lea.vmem %s3, 192
      %v2500 = vld [vmem:[%s2499] sm:$0xf]
      %v2501 = vld [vmem:[%s2499 + $0x4] sm:$0xf]
      %v2502 = vld [vmem:[%s2499 + $0x8] sm:$0xf]
      %v2503 = vld [vmem:[%s2499 + $0xc] sm:$0xf]
      %v2504 = vld [vmem:[%s2499 + $0x10] sm:$0xf]
      %v2505 = vld [vmem:[%s2499 + $0x14] sm:$0xf]
      %v2506 = vld [vmem:[%s2499 + $0x18] sm:$0xf]
      %v2507 = vld [vmem:[%s2499 + $0x1c] sm:$0xf]
      %v2508 = vld [vmem:[%s2499 + $0x20] sm:$0xf]
      %v2509 = vld [vmem:[%s2499 + $0x24] sm:$0xf]
      %v2510 = vld [vmem:[%s2499 + $0x28] sm:$0xf]
      %v2511 = vld [vmem:[%s2499 + $0x2c] sm:$0xf]
      %v2512 = vld [vmem:[%s2499 + $0x30] sm:$0xf]
      %v2513 = vld [vmem:[%s2499 + $0x34] sm:$0xf]
      %v2514 = vld [vmem:[%s2499 + $0x38] sm:$0xf]
      %v2515 = vld [vmem:[%s2499 + $0x3c] sm:$0xf]
      %v2524 = vunpack.c.l.b16 %v2491
      %v2525 = vunpack.c.l.b16 %v2492
      %v2526 = vunpack.c.l.b16 %v2493
      %v2527 = vunpack.c.l.b16 %v2494
      %v2528 = vunpack.c.l.b16 %v2495
      %v2529 = vunpack.c.l.b16 %v2496
      %v2530 = vunpack.c.l.b16 %v2497
      %v2531 = vunpack.c.l.b16 %v2498
      %v2532 = vpack.c.b16 %v2525, %v2524
      %v2533 = vpack.c.b16 %v2527, %v2526
      %v2534 = vpack.c.b16 %v2529, %v2528
      %v2535 = vpack.c.b16 %v2531, %v2530
      %v2556 = vunpack.c.l.b16 %v2500
      %v2557 = vunpack.c.l.b16 %v2501
      %v2558 = vunpack.c.l.b16 %v2502
      %v2559 = vunpack.c.l.b16 %v2503
      %v2560 = vunpack.c.l.b16 %v2504
      %v2561 = vunpack.c.l.b16 %v2505
      %v2562 = vunpack.c.l.b16 %v2506
      %v2563 = vunpack.c.l.b16 %v2507
      %v2564 = vunpack.c.l.b16 %v2508
      %v2565 = vunpack.c.l.b16 %v2509
      %v2566 = vunpack.c.l.b16 %v2510
      %v2567 = vunpack.c.l.b16 %v2511
      %v2568 = vunpack.c.l.b16 %v2512
      %v2569 = vunpack.c.l.b16 %v2513
      %v2570 = vunpack.c.l.b16 %v2514
      %v2571 = vunpack.c.l.b16 %v2515
      %v2572 = vpack.c.b16 %v2557, %v2556
      %v2573 = vpack.c.b16 %v2559, %v2558
      %v2574 = vpack.c.b16 %v2561, %v2560
      %v2575 = vpack.c.b16 %v2563, %v2562
      %v2576 = vpack.c.b16 %v2565, %v2564
      %v2577 = vpack.c.b16 %v2567, %v2566
      %v2578 = vpack.c.b16 %v2569, %v2568
      %v2579 = vpack.c.b16 %v2571, %v2570
      %2588 = vmatprep.subr.bf16.mxu0 0
      %2589 = vmatpush1.bf16.msra.mxu0 %v2572
      %2590 = vmatprep.subr.bf16.mxu0 0
      %2591 = vmatpush1.bf16.msra.mxu0 %v2573
      %2592 = vmatprep.subr.bf16.mxu0 0
      %2593 = vmatpush1.bf16.msra.mxu0 %v2574
      %2594 = vmatprep.subr.bf16.mxu0 0
      %2595 = vmatpush1.bf16.msra.mxu0 %v2575
      %2596 = vmatprep.subr.bf16.mxu0 0
      %2597 = vmatpush1.bf16.msra.mxu0 %v2576
      %2598 = vmatprep.subr.bf16.mxu0 0
      %2599 = vmatpush1.bf16.msra.mxu0 %v2577
      %2600 = vmatprep.subr.bf16.mxu0 0
      %2601 = vmatpush1.bf16.msra.mxu0 %v2578
      %2602 = vmatprep.subr.bf16.mxu0 0
      %2603 = vmatpush1.bf16.msra.mxu0 %v2579
      %2604 = vmatprep.subr.bf16.mxu0 0
      %2605 = vmatpush1.bf16.msra.mxu0 0
      %2606 = vmatprep.subr.bf16.mxu0 0
      %2607 = vmatpush1.bf16.msra.mxu0 0
      %2608 = vmatprep.subr.bf16.mxu0 0
      %2609 = vmatpush1.bf16.msra.mxu0 0
      %2610 = vmatprep.subr.bf16.mxu0 0
      %2611 = vmatpush1.bf16.msra.mxu0 0
      %2612 = vmatprep.subr.bf16.mxu0 0
      %2613 = vmatpush1.bf16.msra.mxu0 0
      %2614 = vmatprep.subr.bf16.mxu0 0
      %2615 = vmatpush1.bf16.msra.mxu0 0
      %2616 = vmatprep.subr.bf16.mxu0 0
      %2617 = vmatpush1.bf16.msra.mxu0 0
      %2618 = vmatprep.subr.bf16.mxu0 0
      %2619 = vmatpush1.bf16.msra.mxu0 0
      %2620 = vmatprep.mubr.bf16.mxu0 0
      %2621 = vmatmul.mubr.bf16.gmra.mrb[0].mxu0 %v2532
      %v2622 = vpop.f32.mrb[0].mxu0
      %v2623 = vadd.f32 0.0, %v2622
      %v2624 = vpop.f32.mrb[0].mxu0
      %v2625 = vpop.f32.mrb[0].mxu0
      %v2626 = vadd.f32 0.0, %v2625
      %v2627 = vpop.f32.mrb[0].mxu0
      %2628 = vmatprep.mubr.bf16.mxu0 0
      %2629 = vmatmul.mubr.bf16.gmra.mrb[0].mxu0 %v2533
      %v2630 = vpop.f32.mrb[0].mxu0
      %v2631 = vadd.f32 0.0, %v2630
      %v2632 = vpop.f32.mrb[0].mxu0
      %v2633 = vpop.f32.mrb[0].mxu0
      %v2634 = vadd.f32 0.0, %v2633
      %v2635 = vpop.f32.mrb[0].mxu0
      %2636 = vmatprep.mubr.bf16.mxu0 0
      %2637 = vmatmul.mubr.bf16.gmra.mrb[0].mxu0 %v2534
      %v2638 = vpop.f32.mrb[0].mxu0
      %v2639 = vadd.f32 0.0, %v2638
      %v2640 = vpop.f32.mrb[0].mxu0
      %v2641 = vpop.f32.mrb[0].mxu0
      %v2642 = vadd.f32 0.0, %v2641
      %v2643 = vpop.f32.mrb[0].mxu0
      %2644 = vmatprep.mubr.bf16.mxu0 0
      %2645 = vmatmul.mubr.bf16.gmra.mrb[0].mxu0 %v2535
      %v2646 = vpop.f32.mrb[0].mxu0
      %v2647 = vadd.f32 0.0, %v2646
      %v2648 = vpop.f32.mrb[0].mxu0
      %v2649 = vpop.f32.mrb[0].mxu0
      %v2650 = vadd.f32 0.0, %v2649
      %v2651 = vpop.f32.mrb[0].mxu0
      %2652 = vdwg.mxu0
      %v2653 = vadd.f32 %v2483, %v2623
      %v2654 = vadd.f32 %v2484, %v2626
      %v2655 = vadd.f32 %v2485, %v2631
      %v2656 = vadd.f32 %v2486, %v2634
      %v2657 = vadd.f32 %v2487, %v2639
      %v2658 = vadd.f32 %v2488, %v2642
      %v2659 = vadd.f32 %v2489, %v2647
      %v2660 = vadd.f32 %v2490, %v2650
      %v2661 = vld [vmem:[%s1796] sm:$0xf]
      %v2662 = vld [vmem:[%s1796 + $0x4] sm:$0x1]
      %v2663 = vld [vmem:[%s1796 + $0x8] sm:$0xf]
      %v2664 = vld [vmem:[%s1796 + $0xc] sm:$0x1]
      %v2665 = vld [vmem:[%s1796 + $0x10] sm:$0xf]
      %v2666 = vld [vmem:[%s1796 + $0x14] sm:$0x1]
      %v2667 = vld [vmem:[%s1796 + $0x18] sm:$0xf]
      %v2668 = vld [vmem:[%s1796 + $0x1c] sm:$0x1]
      %v2669 = vld [vmem:[%s1796 + $0x20] sm:$0xf]
      %v2670 = vld [vmem:[%s1796 + $0x24] sm:$0x1]
      %v2671 = vld [vmem:[%s1796 + $0x28] sm:$0xf]
      %v2672 = vld [vmem:[%s1796 + $0x2c] sm:$0x1]
      %v2673 = vld [vmem:[%s1796 + $0x30] sm:$0xf]
      %v2674 = vld [vmem:[%s1796 + $0x34] sm:$0x1]
      %v2675 = vld [vmem:[%s1796 + $0x38] sm:$0xf]
      %v2676 = vld [vmem:[%s1796 + $0x3c] sm:$0x1]
      %v2678 = vshrl.u32 %v2661, 16
      %v2680 = vrot.slane %v2678, 4
      %v2681 = vshll.u32 %v2661, 16
      %v2683 = vrot.slane %v2681, 5
      %v2684 = vor.u32 %v2680, %v2683
      %v2685 = vrot.slane %v2684, 4
      %v2687 = vshll.u32 %v2662, 16
      %v2689 = vrot.slane %v2687, 5
      %v2690 = vsel %vm498, %v2685, %v2689
      %v2692 = vshrl.u32 %v2663, 16
      %v2694 = vrot.slane %v2692, 4
      %v2695 = vshll.u32 %v2663, 16
      %v2697 = vrot.slane %v2695, 5
      %v2698 = vor.u32 %v2694, %v2697
      %v2699 = vrot.slane %v2698, 4
      %v2701 = vshll.u32 %v2664, 16
      %v2703 = vrot.slane %v2701, 5
      %v2704 = vsel %vm498, %v2699, %v2703
      %v2706 = vshrl.u32 %v2665, 16
      %v2708 = vrot.slane %v2706, 4
      %v2709 = vshll.u32 %v2665, 16
      %v2711 = vrot.slane %v2709, 5
      %v2712 = vor.u32 %v2708, %v2711
      %v2713 = vrot.slane %v2712, 4
      %v2715 = vshll.u32 %v2666, 16
      %v2717 = vrot.slane %v2715, 5
      %v2718 = vsel %vm498, %v2713, %v2717
      %v2720 = vshrl.u32 %v2667, 16
      %v2722 = vrot.slane %v2720, 4
      %v2723 = vshll.u32 %v2667, 16
      %v2725 = vrot.slane %v2723, 5
      %v2726 = vor.u32 %v2722, %v2725
      %v2727 = vrot.slane %v2726, 4
      %v2729 = vshll.u32 %v2668, 16
      %v2731 = vrot.slane %v2729, 5
      %v2732 = vsel %vm498, %v2727, %v2731
      %v2734 = vshrl.u32 %v2669, 16
      %v2736 = vrot.slane %v2734, 4
      %v2737 = vshll.u32 %v2669, 16
      %v2739 = vrot.slane %v2737, 5
      %v2740 = vor.u32 %v2736, %v2739
      %v2741 = vrot.slane %v2740, 4
      %v2743 = vshll.u32 %v2670, 16
      %v2745 = vrot.slane %v2743, 5
      %v2746 = vsel %vm498, %v2741, %v2745
      %v2748 = vshrl.u32 %v2671, 16
      %v2750 = vrot.slane %v2748, 4
      %v2751 = vshll.u32 %v2671, 16
      %v2753 = vrot.slane %v2751, 5
      %v2754 = vor.u32 %v2750, %v2753
      %v2755 = vrot.slane %v2754, 4
      %v2757 = vshll.u32 %v2672, 16
      %v2759 = vrot.slane %v2757, 5
      %v2760 = vsel %vm498, %v2755, %v2759
      %v2762 = vshrl.u32 %v2673, 16
      %v2764 = vrot.slane %v2762, 4
      %v2765 = vshll.u32 %v2673, 16
      %v2767 = vrot.slane %v2765, 5
      %v2768 = vor.u32 %v2764, %v2767
      %v2769 = vrot.slane %v2768, 4
      %v2771 = vshll.u32 %v2674, 16
      %v2773 = vrot.slane %v2771, 5
      %v2774 = vsel %vm498, %v2769, %v2773
      %v2776 = vshrl.u32 %v2675, 16
      %v2778 = vrot.slane %v2776, 4
      %v2779 = vshll.u32 %v2675, 16
      %v2781 = vrot.slane %v2779, 5
      %v2782 = vor.u32 %v2778, %v2781
      %v2783 = vrot.slane %v2782, 4
      %v2785 = vshll.u32 %v2676, 16
      %v2787 = vrot.slane %v2785, 5
      %v2788 = vsel %vm498, %v2783, %v2787
      %s2789 = scalar_lea.vmem %s3, 256
      %v2790 = vld [vmem:[%s2789] sm:$0xf]
      %v2791 = vld [vmem:[%s2789 + $0x4] sm:$0xf]
      %v2792 = vld [vmem:[%s2789 + $0x8] sm:$0xf]
      %v2793 = vld [vmem:[%s2789 + $0xc] sm:$0xf]
      %v2794 = vld [vmem:[%s2789 + $0x10] sm:$0xf]
      %v2795 = vld [vmem:[%s2789 + $0x14] sm:$0xf]
      %v2796 = vld [vmem:[%s2789 + $0x18] sm:$0xf]
      %v2797 = vld [vmem:[%s2789 + $0x1c] sm:$0xf]
      %v2798 = vld [vmem:[%s2789 + $0x20] sm:$0xf]
      %v2799 = vld [vmem:[%s2789 + $0x24] sm:$0xf]
      %v2800 = vld [vmem:[%s2789 + $0x28] sm:$0xf]
      %v2801 = vld [vmem:[%s2789 + $0x2c] sm:$0xf]
      %v2802 = vld [vmem:[%s2789 + $0x30] sm:$0xf]
      %v2803 = vld [vmem:[%s2789 + $0x34] sm:$0xf]
      %v2804 = vld [vmem:[%s2789 + $0x38] sm:$0xf]
      %v2805 = vld [vmem:[%s2789 + $0x3c] sm:$0xf]
      %v2806 = vunpack.c.l.b16 %v2690
      %v2807 = vunpack.c.l.b16 %v2704
      %v2808 = vunpack.c.l.b16 %v2718
      %v2809 = vunpack.c.l.b16 %v2732
      %v2810 = vunpack.c.l.b16 %v2746
      %v2811 = vunpack.c.l.b16 %v2760
      %v2812 = vunpack.c.l.b16 %v2774
      %v2813 = vunpack.c.l.b16 %v2788
      %v2814 = vpack.c.b16 %v2807, %v2806
      %v2815 = vpack.c.b16 %v2809, %v2808
      %v2816 = vpack.c.b16 %v2811, %v2810
      %v2817 = vpack.c.b16 %v2813, %v2812
      %v2838 = vunpack.c.l.b16 %v2790
      %v2839 = vunpack.c.l.b16 %v2791
      %v2840 = vunpack.c.l.b16 %v2792
      %v2841 = vunpack.c.l.b16 %v2793
      %v2842 = vunpack.c.l.b16 %v2794
      %v2843 = vunpack.c.l.b16 %v2795
      %v2844 = vunpack.c.l.b16 %v2796
      %v2845 = vunpack.c.l.b16 %v2797
      %v2846 = vunpack.c.l.b16 %v2798
      %v2847 = vunpack.c.l.b16 %v2799
      %v2848 = vunpack.c.l.b16 %v2800
      %v2849 = vunpack.c.l.b16 %v2801
      %v2850 = vunpack.c.l.b16 %v2802
      %v2851 = vunpack.c.l.b16 %v2803
      %v2852 = vunpack.c.l.b16 %v2804
      %v2853 = vunpack.c.l.b16 %v2805
      %v2854 = vpack.c.b16 %v2839, %v2838
      %v2855 = vpack.c.b16 %v2841, %v2840
      %v2856 = vpack.c.b16 %v2843, %v2842
      %v2857 = vpack.c.b16 %v2845, %v2844
      %v2858 = vpack.c.b16 %v2847, %v2846
      %v2859 = vpack.c.b16 %v2849, %v2848
      %v2860 = vpack.c.b16 %v2851, %v2850
      %v2861 = vpack.c.b16 %v2853, %v2852
      %2870 = vmatprep.subr.bf16.mxu0 0
      %2871 = vmatpush1.bf16.msra.mxu0 %v2854
      %2872 = vmatprep.subr.bf16.mxu0 0
      %2873 = vmatpush1.bf16.msra.mxu0 %v2855
      %2874 = vmatprep.subr.bf16.mxu0 0
      %2875 = vmatpush1.bf16.msra.mxu0 %v2856
      %2876 = vmatprep.subr.bf16.mxu0 0
      %2877 = vmatpush1.bf16.msra.mxu0 %v2857
      %2878 = vmatprep.subr.bf16.mxu0 0
      %2879 = vmatpush1.bf16.msra.mxu0 %v2858
      %2880 = vmatprep.subr.bf16.mxu0 0
      %2881 = vmatpush1.bf16.msra.mxu0 %v2859
      %2882 = vmatprep.subr.bf16.mxu0 0
      %2883 = vmatpush1.bf16.msra.mxu0 %v2860
      %2884 = vmatprep.subr.bf16.mxu0 0
      %2885 = vmatpush1.bf16.msra.mxu0 %v2861
      %2886 = vmatprep.subr.bf16.mxu0 0
      %2887 = vmatpush1.bf16.msra.mxu0 0
      %2888 = vmatprep.subr.bf16.mxu0 0
      %2889 = vmatpush1.bf16.msra.mxu0 0
      %2890 = vmatprep.subr.bf16.mxu0 0
      %2891 = vmatpush1.bf16.msra.mxu0 0
      %2892 = vmatprep.subr.bf16.mxu0 0
      %2893 = vmatpush1.bf16.msra.mxu0 0
      %2894 = vmatprep.subr.bf16.mxu0 0
      %2895 = vmatpush1.bf16.msra.mxu0 0
      %2896 = vmatprep.subr.bf16.mxu0 0
      %2897 = vmatpush1.bf16.msra.mxu0 0
      %2898 = vmatprep.subr.bf16.mxu0 0
      %2899 = vmatpush1.bf16.msra.mxu0 0
      %2900 = vmatprep.subr.bf16.mxu0 0
      %2901 = vmatpush1.bf16.msra.mxu0 0
      %2902 = vmatprep.mubr.bf16.mxu0 0
      %2903 = vmatmul.mubr.bf16.gmra.mrb[0].mxu0 %v2814
      %v2904 = vpop.f32.mrb[0].mxu0
      %v2905 = vadd.f32 0.0, %v2904
      %v2906 = vpop.f32.mrb[0].mxu0
      %v2907 = vpop.f32.mrb[0].mxu0
      %v2908 = vadd.f32 0.0, %v2907
      %v2909 = vpop.f32.mrb[0].mxu0
      %2910 = vmatprep.mubr.bf16.mxu0 0
      %2911 = vmatmul.mubr.bf16.gmra.mrb[0].mxu0 %v2815
      %v2912 = vpop.f32.mrb[0].mxu0
      %v2913 = vadd.f32 0.0, %v2912
      %v2914 = vpop.f32.mrb[0].mxu0
      %v2915 = vpop.f32.mrb[0].mxu0
      %v2916 = vadd.f32 0.0, %v2915
      %v2917 = vpop.f32.mrb[0].mxu0
      %2918 = vmatprep.mubr.bf16.mxu0 0
      %2919 = vmatmul.mubr.bf16.gmra.mrb[0].mxu0 %v2816
      %v2920 = vpop.f32.mrb[0].mxu0
      %v2921 = vadd.f32 0.0, %v2920
      %v2922 = vpop.f32.mrb[0].mxu0
      %v2923 = vpop.f32.mrb[0].mxu0
      %v2924 = vadd.f32 0.0, %v2923
      %v2925 = vpop.f32.mrb[0].mxu0
      %2926 = vmatprep.mubr.bf16.mxu0 0
      %2927 = vmatmul.mubr.bf16.gmra.mrb[0].mxu0 %v2817
      %v2928 = vpop.f32.mrb[0].mxu0
      %v2929 = vadd.f32 0.0, %v2928
      %v2930 = vpop.f32.mrb[0].mxu0
      %v2931 = vpop.f32.mrb[0].mxu0
      %v2932 = vadd.f32 0.0, %v2931
      %v2933 = vpop.f32.mrb[0].mxu0
      %2934 = vdwg.mxu0
      %v2935 = vadd.f32 %v2653, %v2905
      %v2936 = vadd.f32 %v2654, %v2908
      %v2937 = vadd.f32 %v2655, %v2913
      %v2938 = vadd.f32 %v2656, %v2916
      %v2939 = vadd.f32 %v2657, %v2921
      %v2940 = vadd.f32 %v2658, %v2924
      %v2941 = vadd.f32 %v2659, %v2929
      %v2942 = vadd.f32 %v2660, %v2932
      %v2943 = vld [vmem:[%s1796] sm:$0xe]
      %v2944 = vld [vmem:[%s1796 + $0x8] sm:$0xe]
      %v2945 = vld [vmem:[%s1796 + $0x10] sm:$0xe]
      %v2946 = vld [vmem:[%s1796 + $0x18] sm:$0xe]
      %v2947 = vld [vmem:[%s1796 + $0x20] sm:$0xe]
      %v2948 = vld [vmem:[%s1796 + $0x28] sm:$0xe]
      %v2949 = vld [vmem:[%s1796 + $0x30] sm:$0xe]
      %v2950 = vld [vmem:[%s1796 + $0x38] sm:$0xe]
      %v2967 = vrot.slane %v2943, 5
      %v2968 = vrot.slane %v2967, 4
      %v2969 = vrot.slane %v2662, 5
      %v2970 = vsel %vm2304, %v2968, %v2969
      %v2971 = vrot.slane %v2944, 5
      %v2972 = vrot.slane %v2971, 4
      %v2973 = vrot.slane %v2664, 5
      %v2974 = vsel %vm2304, %v2972, %v2973
      %v2975 = vrot.slane %v2945, 5
      %v2976 = vrot.slane %v2975, 4
      %v2977 = vrot.slane %v2666, 5
      %v2978 = vsel %vm2304, %v2976, %v2977
      %v2979 = vrot.slane %v2946, 5
      %v2980 = vrot.slane %v2979, 4
      %v2981 = vrot.slane %v2668, 5
      %v2982 = vsel %vm2304, %v2980, %v2981
      %v2983 = vrot.slane %v2947, 5
      %v2984 = vrot.slane %v2983, 4
      %v2985 = vrot.slane %v2670, 5
      %v2986 = vsel %vm2304, %v2984, %v2985
      %v2987 = vrot.slane %v2948, 5
      %v2988 = vrot.slane %v2987, 4
      %v2989 = vrot.slane %v2672, 5
      %v2990 = vsel %vm2304, %v2988, %v2989
      %v2991 = vrot.slane %v2949, 5
      %v2992 = vrot.slane %v2991, 4
      %v2993 = vrot.slane %v2674, 5
      %v2994 = vsel %vm2304, %v2992, %v2993
      %v2995 = vrot.slane %v2950, 5
      %v2996 = vrot.slane %v2995, 4
      %v2997 = vrot.slane %v2676, 5
      %v2998 = vsel %vm2304, %v2996, %v2997
      %s2999 = scalar_lea.vmem %s3, 320
      %v3000 = vld [vmem:[%s2999] sm:$0xf]
      %v3001 = vld [vmem:[%s2999 + $0x4] sm:$0xf]
      %v3002 = vld [vmem:[%s2999 + $0x8] sm:$0xf]
      %v3003 = vld [vmem:[%s2999 + $0xc] sm:$0xf]
      %v3004 = vld [vmem:[%s2999 + $0x10] sm:$0xf]
      %v3005 = vld [vmem:[%s2999 + $0x14] sm:$0xf]
      %v3006 = vld [vmem:[%s2999 + $0x18] sm:$0xf]
      %v3007 = vld [vmem:[%s2999 + $0x1c] sm:$0xf]
      %v3008 = vld [vmem:[%s2999 + $0x20] sm:$0xf]
      %v3009 = vld [vmem:[%s2999 + $0x24] sm:$0xf]
      %v3010 = vld [vmem:[%s2999 + $0x28] sm:$0xf]
      %v3011 = vld [vmem:[%s2999 + $0x2c] sm:$0xf]
      %v3012 = vld [vmem:[%s2999 + $0x30] sm:$0xf]
      %v3013 = vld [vmem:[%s2999 + $0x34] sm:$0xf]
      %v3014 = vld [vmem:[%s2999 + $0x38] sm:$0xf]
      %v3015 = vld [vmem:[%s2999 + $0x3c] sm:$0xf]
      %v3016 = vunpack.c.l.b16 %v2970
      %v3017 = vunpack.c.l.b16 %v2974
      %v3018 = vunpack.c.l.b16 %v2978
      %v3019 = vunpack.c.l.b16 %v2982
      %v3020 = vunpack.c.l.b16 %v2986
      %v3021 = vunpack.c.l.b16 %v2990
      %v3022 = vunpack.c.l.b16 %v2994
      %v3023 = vunpack.c.l.b16 %v2998
      %v3024 = vpack.c.b16 %v3017, %v3016
      %v3025 = vpack.c.b16 %v3019, %v3018
      %v3026 = vpack.c.b16 %v3021, %v3020
      %v3027 = vpack.c.b16 %v3023, %v3022
      %v3048 = vunpack.c.l.b16 %v3000
      %v3049 = vunpack.c.l.b16 %v3001
      %v3050 = vunpack.c.l.b16 %v3002
      %v3051 = vunpack.c.l.b16 %v3003
      %v3052 = vunpack.c.l.b16 %v3004
      %v3053 = vunpack.c.l.b16 %v3005
      %v3054 = vunpack.c.l.b16 %v3006
      %v3055 = vunpack.c.l.b16 %v3007
      %v3056 = vunpack.c.l.b16 %v3008
      %v3057 = vunpack.c.l.b16 %v3009
      %v3058 = vunpack.c.l.b16 %v3010
      %v3059 = vunpack.c.l.b16 %v3011
      %v3060 = vunpack.c.l.b16 %v3012
      %v3061 = vunpack.c.l.b16 %v3013
      %v3062 = vunpack.c.l.b16 %v3014
      %v3063 = vunpack.c.l.b16 %v3015
      %v3064 = vpack.c.b16 %v3049, %v3048
      %v3065 = vpack.c.b16 %v3051, %v3050
      %v3066 = vpack.c.b16 %v3053, %v3052
      %v3067 = vpack.c.b16 %v3055, %v3054
      %v3068 = vpack.c.b16 %v3057, %v3056
      %v3069 = vpack.c.b16 %v3059, %v3058
      %v3070 = vpack.c.b16 %v3061, %v3060
      %v3071 = vpack.c.b16 %v3063, %v3062
      %3080 = vmatprep.subr.bf16.mxu0 0
      %3081 = vmatpush1.bf16.msra.mxu0 %v3064
      %3082 = vmatprep.subr.bf16.mxu0 0
      %3083 = vmatpush1.bf16.msra.mxu0 %v3065
      %3084 = vmatprep.subr.bf16.mxu0 0
      %3085 = vmatpush1.bf16.msra.mxu0 %v3066
      %3086 = vmatprep.subr.bf16.mxu0 0
      %3087 = vmatpush1.bf16.msra.mxu0 %v3067
      %3088 = vmatprep.subr.bf16.mxu0 0
      %3089 = vmatpush1.bf16.msra.mxu0 %v3068
      %3090 = vmatprep.subr.bf16.mxu0 0
      %3091 = vmatpush1.bf16.msra.mxu0 %v3069
      %3092 = vmatprep.subr.bf16.mxu0 0
      %3093 = vmatpush1.bf16.msra.mxu0 %v3070
      %3094 = vmatprep.subr.bf16.mxu0 0
      %3095 = vmatpush1.bf16.msra.mxu0 %v3071
      %3096 = vmatprep.subr.bf16.mxu0 0
      %3097 = vmatpush1.bf16.msra.mxu0 0
      %3098 = vmatprep.subr.bf16.mxu0 0
      %3099 = vmatpush1.bf16.msra.mxu0 0
      %3100 = vmatprep.subr.bf16.mxu0 0
      %3101 = vmatpush1.bf16.msra.mxu0 0
      %3102 = vmatprep.subr.bf16.mxu0 0
      %3103 = vmatpush1.bf16.msra.mxu0 0
      %3104 = vmatprep.subr.bf16.mxu0 0
      %3105 = vmatpush1.bf16.msra.mxu0 0
      %3106 = vmatprep.subr.bf16.mxu0 0
      %3107 = vmatpush1.bf16.msra.mxu0 0
      %3108 = vmatprep.subr.bf16.mxu0 0
      %3109 = vmatpush1.bf16.msra.mxu0 0
      %3110 = vmatprep.subr.bf16.mxu0 0
      %3111 = vmatpush1.bf16.msra.mxu0 0
      %3112 = vmatprep.mubr.bf16.mxu0 0
      %3113 = vmatmul.mubr.bf16.gmra.mrb[0].mxu0 %v3024
      %v3114 = vpop.f32.mrb[0].mxu0
      %v3115 = vadd.f32 0.0, %v3114
      %v3116 = vpop.f32.mrb[0].mxu0
      %v3117 = vpop.f32.mrb[0].mxu0
      %v3118 = vadd.f32 0.0, %v3117
      %v3119 = vpop.f32.mrb[0].mxu0
      %3120 = vmatprep.mubr.bf16.mxu0 0
      %3121 = vmatmul.mubr.bf16.gmra.mrb[0].mxu0 %v3025
      %v3122 = vpop.f32.mrb[0].mxu0
      %v3123 = vadd.f32 0.0, %v3122
      %v3124 = vpop.f32.mrb[0].mxu0
      %v3125 = vpop.f32.mrb[0].mxu0
      %v3126 = vadd.f32 0.0, %v3125
      %v3127 = vpop.f32.mrb[0].mxu0
      %3128 = vmatprep.mubr.bf16.mxu0 0
      %3129 = vmatmul.mubr.bf16.gmra.mrb[0].mxu0 %v3026
      %v3130 = vpop.f32.mrb[0].mxu0
      %v3131 = vadd.f32 0.0, %v3130
      %v3132 = vpop.f32.mrb[0].mxu0
      %v3133 = vpop.f32.mrb[0].mxu0
      %v3134 = vadd.f32 0.0, %v3133
      %v3135 = vpop.f32.mrb[0].mxu0
      %3136 = vmatprep.mubr.bf16.mxu0 0
      %3137 = vmatmul.mubr.bf16.gmra.mrb[0].mxu0 %v3027
      %v3138 = vpop.f32.mrb[0].mxu0
      %v3139 = vadd.f32 0.0, %v3138
      %v3140 = vpop.f32.mrb[0].mxu0
      %v3141 = vpop.f32.mrb[0].mxu0
      %v3142 = vadd.f32 0.0, %v3141
      %v3143 = vpop.f32.mrb[0].mxu0
      %3144 = vdwg.mxu0
      %v3145 = vadd.f32 %v2935, %v3115
      %v3146 = vadd.f32 %v2936, %v3118
      %v3147 = vadd.f32 %v2937, %v3123
      %v3148 = vadd.f32 %v2938, %v3126
      %v3149 = vadd.f32 %v2939, %v3131
      %v3150 = vadd.f32 %v2940, %v3134
      %v3151 = vadd.f32 %v2941, %v3139
      %v3152 = vadd.f32 %v2942, %v3142
      %s3153 = scalar_lea.vmem [#allocation2], 16
      %v3154 = vld [vmem:[%s3153] sm:$0xf]
      %v3155 = vld [vmem:[%s3153 + $0x8] sm:$0xf]
      %v3156 = vld [vmem:[%s3153 + $0x10] sm:$0xf]
      %v3157 = vld [vmem:[%s3153 + $0x18] sm:$0xf]
      %v3158 = vld [vmem:[%s3153 + $0x20] sm:$0xf]
      %v3159 = vld [vmem:[%s3153 + $0x28] sm:$0xf]
      %v3160 = vld [vmem:[%s3153 + $0x30] sm:$0xf]
      %v3161 = vld [vmem:[%s3153 + $0x38] sm:$0xf]
      %s3162 = scalar_lea.vmem %s3, 384
      %v3163 = vld [vmem:[%s3162] sm:$0xf]
      %v3164 = vld [vmem:[%s3162 + $0x4] sm:$0xf]
      %v3165 = vld [vmem:[%s3162 + $0x8] sm:$0xf]
      %v3166 = vld [vmem:[%s3162 + $0xc] sm:$0xf]
      %v3167 = vld [vmem:[%s3162 + $0x10] sm:$0xf]
      %v3168 = vld [vmem:[%s3162 + $0x14] sm:$0xf]
      %v3169 = vld [vmem:[%s3162 + $0x18] sm:$0xf]
      %v3170 = vld [vmem:[%s3162 + $0x1c] sm:$0xf]
      %v3171 = vld [vmem:[%s3162 + $0x20] sm:$0xf]
      %v3172 = vld [vmem:[%s3162 + $0x24] sm:$0xf]
      %v3173 = vld [vmem:[%s3162 + $0x28] sm:$0xf]
      %v3174 = vld [vmem:[%s3162 + $0x2c] sm:$0xf]
      %v3175 = vld [vmem:[%s3162 + $0x30] sm:$0xf]
      %v3176 = vld [vmem:[%s3162 + $0x34] sm:$0xf]
      %v3177 = vld [vmem:[%s3162 + $0x38] sm:$0xf]
      %v3178 = vld [vmem:[%s3162 + $0x3c] sm:$0xf]
      %v3187 = vunpack.c.l.b16 %v3154
      %v3188 = vunpack.c.l.b16 %v3155
      %v3189 = vunpack.c.l.b16 %v3156
      %v3190 = vunpack.c.l.b16 %v3157
      %v3191 = vunpack.c.l.b16 %v3158
      %v3192 = vunpack.c.l.b16 %v3159
      %v3193 = vunpack.c.l.b16 %v3160
      %v3194 = vunpack.c.l.b16 %v3161
      %v3195 = vpack.c.b16 %v3188, %v3187
      %v3196 = vpack.c.b16 %v3190, %v3189
      %v3197 = vpack.c.b16 %v3192, %v3191
      %v3198 = vpack.c.b16 %v3194, %v3193
      %v3219 = vunpack.c.l.b16 %v3163
      %v3220 = vunpack.c.l.b16 %v3164
      %v3221 = vunpack.c.l.b16 %v3165
      %v3222 = vunpack.c.l.b16 %v3166
      %v3223 = vunpack.c.l.b16 %v3167
      %v3224 = vunpack.c.l.b16 %v3168
      %v3225 = vunpack.c.l.b16 %v3169
      %v3226 = vunpack.c.l.b16 %v3170
      %v3227 = vunpack.c.l.b16 %v3171
      %v3228 = vunpack.c.l.b16 %v3172
      %v3229 = vunpack.c.l.b16 %v3173
      %v3230 = vunpack.c.l.b16 %v3174
      %v3231 = vunpack.c.l.b16 %v3175
      %v3232 = vunpack.c.l.b16 %v3176
      %v3233 = vunpack.c.l.b16 %v3177
      %v3234 = vunpack.c.l.b16 %v3178
      %v3235 = vpack.c.b16 %v3220, %v3219
      %v3236 = vpack.c.b16 %v3222, %v3221
      %v3237 = vpack.c.b16 %v3224, %v3223
      %v3238 = vpack.c.b16 %v3226, %v3225
      %v3239 = vpack.c.b16 %v3228, %v3227
      %v3240 = vpack.c.b16 %v3230, %v3229
      %v3241 = vpack.c.b16 %v3232, %v3231
      %v3242 = vpack.c.b16 %v3234, %v3233
      %3251 = vmatprep.subr.bf16.mxu0 0
      %3252 = vmatpush1.bf16.msra.mxu0 %v3235
      %3253 = vmatprep.subr.bf16.mxu0 0
      %3254 = vmatpush1.bf16.msra.mxu0 %v3236
      %3255 = vmatprep.subr.bf16.mxu0 0
      %3256 = vmatpush1.bf16.msra.mxu0 %v3237
      %3257 = vmatprep.subr.bf16.mxu0 0
      %3258 = vmatpush1.bf16.msra.mxu0 %v3238
      %3259 = vmatprep.subr.bf16.mxu0 0
      %3260 = vmatpush1.bf16.msra.mxu0 %v3239
      %3261 = vmatprep.subr.bf16.mxu0 0
      %3262 = vmatpush1.bf16.msra.mxu0 %v3240
      %3263 = vmatprep.subr.bf16.mxu0 0
      %3264 = vmatpush1.bf16.msra.mxu0 %v3241
      %3265 = vmatprep.subr.bf16.mxu0 0
      %3266 = vmatpush1.bf16.msra.mxu0 %v3242
      %3267 = vmatprep.subr.bf16.mxu0 0
      %3268 = vmatpush1.bf16.msra.mxu0 0
      %3269 = vmatprep.subr.bf16.mxu0 0
      %3270 = vmatpush1.bf16.msra.mxu0 0
      %3271 = vmatprep.subr.bf16.mxu0 0
      %3272 = vmatpush1.bf16.msra.mxu0 0
      %3273 = vmatprep.subr.bf16.mxu0 0
      %3274 = vmatpush1.bf16.msra.mxu0 0
      %3275 = vmatprep.subr.bf16.mxu0 0
      %3276 = vmatpush1.bf16.msra.mxu0 0
      %3277 = vmatprep.subr.bf16.mxu0 0
      %3278 = vmatpush1.bf16.msra.mxu0 0
      %3279 = vmatprep.subr.bf16.mxu0 0
      %3280 = vmatpush1.bf16.msra.mxu0 0
      %3281 = vmatprep.subr.bf16.mxu0 0
      %3282 = vmatpush1.bf16.msra.mxu0 0
      %3283 = vmatprep.mubr.bf16.mxu0 0
      %3284 = vmatmul.mubr.bf16.gmra.mrb[0].mxu0 %v3195
      %v3285 = vpop.f32.mrb[0].mxu0
      %v3286 = vadd.f32 0.0, %v3285
      %v3287 = vpop.f32.mrb[0].mxu0
      %v3288 = vpop.f32.mrb[0].mxu0
      %v3289 = vadd.f32 0.0, %v3288
      %v3290 = vpop.f32.mrb[0].mxu0
      %3291 = vmatprep.mubr.bf16.mxu0 0
      %3292 = vmatmul.mubr.bf16.gmra.mrb[0].mxu0 %v3196
      %v3293 = vpop.f32.mrb[0].mxu0
      %v3294 = vadd.f32 0.0, %v3293
      %v3295 = vpop.f32.mrb[0].mxu0
      %v3296 = vpop.f32.mrb[0].mxu0
      %v3297 = vadd.f32 0.0, %v3296
      %v3298 = vpop.f32.mrb[0].mxu0
      %3299 = vmatprep.mubr.bf16.mxu0 0
      %3300 = vmatmul.mubr.bf16.gmra.mrb[0].mxu0 %v3197
      %v3301 = vpop.f32.mrb[0].mxu0
      %v3302 = vadd.f32 0.0, %v3301
      %v3303 = vpop.f32.mrb[0].mxu0
      %v3304 = vpop.f32.mrb[0].mxu0
      %v3305 = vadd.f32 0.0, %v3304
      %v3306 = vpop.f32.mrb[0].mxu0
      %3307 = vmatprep.mubr.bf16.mxu0 0
      %3308 = vmatmul.mubr.bf16.gmra.mrb[0].mxu0 %v3198
      %v3309 = vpop.f32.mrb[0].mxu0
      %v3310 = vadd.f32 0.0, %v3309
      %v3311 = vpop.f32.mrb[0].mxu0
      %v3312 = vpop.f32.mrb[0].mxu0
      %v3313 = vadd.f32 0.0, %v3312
      %v3314 = vpop.f32.mrb[0].mxu0
      %3315 = vdwg.mxu0
      %v3316 = vadd.f32 %v3145, %v3286
      %v3317 = vadd.f32 %v3146, %v3289
      %v3318 = vadd.f32 %v3147, %v3294
      %v3319 = vadd.f32 %v3148, %v3297
      %v3320 = vadd.f32 %v3149, %v3302
      %v3321 = vadd.f32 %v3150, %v3305
      %v3322 = vadd.f32 %v3151, %v3310
      %v3323 = vadd.f32 %v3152, %v3313
      %v3324 = vld [vmem:[%s3153] sm:$0xf]
      %v3325 = vld [vmem:[%s3153 + $0x4] sm:$0x1]
      %v3326 = vld [vmem:[%s3153 + $0x8] sm:$0xf]
      %v3327 = vld [vmem:[%s3153 + $0xc] sm:$0x1]
      %v3328 = vld [vmem:[%s3153 + $0x10] sm:$0xf]
      %v3329 = vld [vmem:[%s3153 + $0x14] sm:$0x1]
      %v3330 = vld [vmem:[%s3153 + $0x18] sm:$0xf]
      %v3331 = vld [vmem:[%s3153 + $0x1c] sm:$0x1]
      %v3332 = vld [vmem:[%s3153 + $0x20] sm:$0xf]
      %v3333 = vld [vmem:[%s3153 + $0x24] sm:$0x1]
      %v3334 = vld [vmem:[%s3153 + $0x28] sm:$0xf]
      %v3335 = vld [vmem:[%s3153 + $0x2c] sm:$0x1]
      %v3336 = vld [vmem:[%s3153 + $0x30] sm:$0xf]
      %v3337 = vld [vmem:[%s3153 + $0x34] sm:$0x1]
      %v3338 = vld [vmem:[%s3153 + $0x38] sm:$0xf]
      %v3339 = vld [vmem:[%s3153 + $0x3c] sm:$0x1]
      %v3341 = vshrl.u32 %v3324, 16
      %v3343 = vrot.slane %v3341, 4
      %v3344 = vshll.u32 %v3324, 16
      %v3346 = vrot.slane %v3344, 5
      %v3347 = vor.u32 %v3343, %v3346
      %v3348 = vrot.slane %v3347, 4
      %v3350 = vshll.u32 %v3325, 16
      %v3352 = vrot.slane %v3350, 5
      %v3353 = vsel %vm498, %v3348, %v3352
      %v3355 = vshrl.u32 %v3326, 16
      %v3357 = vrot.slane %v3355, 4
      %v3358 = vshll.u32 %v3326, 16
      %v3360 = vrot.slane %v3358, 5
      %v3361 = vor.u32 %v3357, %v3360
      %v3362 = vrot.slane %v3361, 4
      %v3364 = vshll.u32 %v3327, 16
      %v3366 = vrot.slane %v3364, 5
      %v3367 = vsel %vm498, %v3362, %v3366
      %v3369 = vshrl.u32 %v3328, 16
      %v3371 = vrot.slane %v3369, 4
      %v3372 = vshll.u32 %v3328, 16
      %v3374 = vrot.slane %v3372, 5
      %v3375 = vor.u32 %v3371, %v3374
      %v3376 = vrot.slane %v3375, 4
      %v3378 = vshll.u32 %v3329, 16
      %v3380 = vrot.slane %v3378, 5
      %v3381 = vsel %vm498, %v3376, %v3380
      %v3383 = vshrl.u32 %v3330, 16
      %v3385 = vrot.slane %v3383, 4
      %v3386 = vshll.u32 %v3330, 16
      %v3388 = vrot.slane %v3386, 5
      %v3389 = vor.u32 %v3385, %v3388
      %v3390 = vrot.slane %v3389, 4
      %v3392 = vshll.u32 %v3331, 16
      %v3394 = vrot.slane %v3392, 5
      %v3395 = vsel %vm498, %v3390, %v3394
      %v3397 = vshrl.u32 %v3332, 16
      %v3399 = vrot.slane %v3397, 4
      %v3400 = vshll.u32 %v3332, 16
      %v3402 = vrot.slane %v3400, 5
      %v3403 = vor.u32 %v3399, %v3402
      %v3404 = vrot.slane %v3403, 4
      %v3406 = vshll.u32 %v3333, 16
      %v3408 = vrot.slane %v3406, 5
      %v3409 = vsel %vm498, %v3404, %v3408
      %v3411 = vshrl.u32 %v3334, 16
      %v3413 = vrot.slane %v3411, 4
      %v3414 = vshll.u32 %v3334, 16
      %v3416 = vrot.slane %v3414, 5
      %v3417 = vor.u32 %v3413, %v3416
      %v3418 = vrot.slane %v3417, 4
      %v3420 = vshll.u32 %v3335, 16
      %v3422 = vrot.slane %v3420, 5
      %v3423 = vsel %vm498, %v3418, %v3422
      %v3425 = vshrl.u32 %v3336, 16
      %v3427 = vrot.slane %v3425, 4
      %v3428 = vshll.u32 %v3336, 16
      %v3430 = vrot.slane %v3428, 5
      %v3431 = vor.u32 %v3427, %v3430
      %v3432 = vrot.slane %v3431, 4
      %v3434 = vshll.u32 %v3337, 16
      %v3436 = vrot.slane %v3434, 5
      %v3437 = vsel %vm498, %v3432, %v3436
      %v3439 = vshrl.u32 %v3338, 16
      %v3441 = vrot.slane %v3439, 4
      %v3442 = vshll.u32 %v3338, 16
      %v3444 = vrot.slane %v3442, 5
      %v3445 = vor.u32 %v3441, %v3444
      %v3446 = vrot.slane %v3445, 4
      %v3448 = vshll.u32 %v3339, 16
      %v3450 = vrot.slane %v3448, 5
      %v3451 = vsel %vm498, %v3446, %v3450
      %s3452 = scalar_lea.vmem %s3, 448
      %v3453 = vld [vmem:[%s3452] sm:$0xf]
      %v3454 = vld [vmem:[%s3452 + $0x4] sm:$0xf]
      %v3455 = vld [vmem:[%s3452 + $0x8] sm:$0xf]
      %v3456 = vld [vmem:[%s3452 + $0xc] sm:$0xf]
      %v3457 = vld [vmem:[%s3452 + $0x10] sm:$0xf]
      %v3458 = vld [vmem:[%s3452 + $0x14] sm:$0xf]
      %v3459 = vld [vmem:[%s3452 + $0x18] sm:$0xf]
      %v3460 = vld [vmem:[%s3452 + $0x1c] sm:$0xf]
      %v3461 = vld [vmem:[%s3452 + $0x20] sm:$0xf]
      %v3462 = vld [vmem:[%s3452 + $0x24] sm:$0xf]
      %v3463 = vld [vmem:[%s3452 + $0x28] sm:$0xf]
      %v3464 = vld [vmem:[%s3452 + $0x2c] sm:$0xf]
      %v3465 = vld [vmem:[%s3452 + $0x30] sm:$0xf]
      %v3466 = vld [vmem:[%s3452 + $0x34] sm:$0xf]
      %v3467 = vld [vmem:[%s3452 + $0x38] sm:$0xf]
      %v3468 = vld [vmem:[%s3452 + $0x3c] sm:$0xf]
      %v3469 = vunpack.c.l.b16 %v3353
      %v3470 = vunpack.c.l.b16 %v3367
      %v3471 = vunpack.c.l.b16 %v3381
      %v3472 = vunpack.c.l.b16 %v3395
      %v3473 = vunpack.c.l.b16 %v3409
      %v3474 = vunpack.c.l.b16 %v3423
      %v3475 = vunpack.c.l.b16 %v3437
      %v3476 = vunpack.c.l.b16 %v3451
      %v3477 = vpack.c.b16 %v3470, %v3469
      %v3478 = vpack.c.b16 %v3472, %v3471
      %v3479 = vpack.c.b16 %v3474, %v3473
      %v3480 = vpack.c.b16 %v3476, %v3475
      %v3501 = vunpack.c.l.b16 %v3453
      %v3502 = vunpack.c.l.b16 %v3454
      %v3503 = vunpack.c.l.b16 %v3455
      %v3504 = vunpack.c.l.b16 %v3456
      %v3505 = vunpack.c.l.b16 %v3457
      %v3506 = vunpack.c.l.b16 %v3458
      %v3507 = vunpack.c.l.b16 %v3459
      %v3508 = vunpack.c.l.b16 %v3460
      %v3509 = vunpack.c.l.b16 %v3461
      %v3510 = vunpack.c.l.b16 %v3462
      %v3511 = vunpack.c.l.b16 %v3463
      %v3512 = vunpack.c.l.b16 %v3464
      %v3513 = vunpack.c.l.b16 %v3465
      %v3514 = vunpack.c.l.b16 %v3466
      %v3515 = vunpack.c.l.b16 %v3467
      %v3516 = vunpack.c.l.b16 %v3468
      %v3517 = vpack.c.b16 %v3502, %v3501
      %v3518 = vpack.c.b16 %v3504, %v3503
      %v3519 = vpack.c.b16 %v3506, %v3505
      %v3520 = vpack.c.b16 %v3508, %v3507
      %v3521 = vpack.c.b16 %v3510, %v3509
      %v3522 = vpack.c.b16 %v3512, %v3511
      %v3523 = vpack.c.b16 %v3514, %v3513
      %v3524 = vpack.c.b16 %v3516, %v3515
      %3533 = vmatprep.subr.bf16.mxu0 0
      %3534 = vmatpush1.bf16.msra.mxu0 %v3517
      %3535 = vmatprep.subr.bf16.mxu0 0
      %3536 = vmatpush1.bf16.msra.mxu0 %v3518
      %3537 = vmatprep.subr.bf16.mxu0 0
      %3538 = vmatpush1.bf16.msra.mxu0 %v3519
      %3539 = vmatprep.subr.bf16.mxu0 0
      %3540 = vmatpush1.bf16.msra.mxu0 %v3520
      %3541 = vmatprep.subr.bf16.mxu0 0
      %3542 = vmatpush1.bf16.msra.mxu0 %v3521
      %3543 = vmatprep.subr.bf16.mxu0 0
      %3544 = vmatpush1.bf16.msra.mxu0 %v3522
      %3545 = vmatprep.subr.bf16.mxu0 0
      %3546 = vmatpush1.bf16.msra.mxu0 %v3523
      %3547 = vmatprep.subr.bf16.mxu0 0
      %3548 = vmatpush1.bf16.msra.mxu0 %v3524
      %3549 = vmatprep.subr.bf16.mxu0 0
      %3550 = vmatpush1.bf16.msra.mxu0 0
      %3551 = vmatprep.subr.bf16.mxu0 0
      %3552 = vmatpush1.bf16.msra.mxu0 0
      %3553 = vmatprep.subr.bf16.mxu0 0
      %3554 = vmatpush1.bf16.msra.mxu0 0
      %3555 = vmatprep.subr.bf16.mxu0 0
      %3556 = vmatpush1.bf16.msra.mxu0 0
      %3557 = vmatprep.subr.bf16.mxu0 0
      %3558 = vmatpush1.bf16.msra.mxu0 0
      %3559 = vmatprep.subr.bf16.mxu0 0
      %3560 = vmatpush1.bf16.msra.mxu0 0
      %3561 = vmatprep.subr.bf16.mxu0 0
      %3562 = vmatpush1.bf16.msra.mxu0 0
      %3563 = vmatprep.subr.bf16.mxu0 0
      %3564 = vmatpush1.bf16.msra.mxu0 0
      %3565 = vmatprep.mubr.bf16.mxu0 0
      %3566 = vmatmul.mubr.bf16.gmra.mrb[0].mxu0 %v3477
      %v3567 = vpop.f32.mrb[0].mxu0
      %v3568 = vadd.f32 0.0, %v3567
      %v3569 = vpop.f32.mrb[0].mxu0
      %v3570 = vpop.f32.mrb[0].mxu0
      %v3571 = vadd.f32 0.0, %v3570
      %v3572 = vpop.f32.mrb[0].mxu0
      %3573 = vmatprep.mubr.bf16.mxu0 0
      %3574 = vmatmul.mubr.bf16.gmra.mrb[0].mxu0 %v3478
      %v3575 = vpop.f32.mrb[0].mxu0
      %v3576 = vadd.f32 0.0, %v3575
      %v3577 = vpop.f32.mrb[0].mxu0
      %v3578 = vpop.f32.mrb[0].mxu0
      %v3579 = vadd.f32 0.0, %v3578
      %v3580 = vpop.f32.mrb[0].mxu0
      %3581 = vmatprep.mubr.bf16.mxu0 0
      %3582 = vmatmul.mubr.bf16.gmra.mrb[0].mxu0 %v3479
      %v3583 = vpop.f32.mrb[0].mxu0
      %v3584 = vadd.f32 0.0, %v3583
      %v3585 = vpop.f32.mrb[0].mxu0
      %v3586 = vpop.f32.mrb[0].mxu0
      %v3587 = vadd.f32 0.0, %v3586
      %v3588 = vpop.f32.mrb[0].mxu0
      %3589 = vmatprep.mubr.bf16.mxu0 0
      %3590 = vmatmul.mubr.bf16.gmra.mrb[0].mxu0 %v3480
      %v3591 = vpop.f32.mrb[0].mxu0
      %v3592 = vadd.f32 0.0, %v3591
      %v3593 = vpop.f32.mrb[0].mxu0
      %v3594 = vpop.f32.mrb[0].mxu0
      %v3595 = vadd.f32 0.0, %v3594
      %v3596 = vpop.f32.mrb[0].mxu0
      %3597 = vdwg.mxu0
      %v3598 = vadd.f32 %v3316, %v3568
      %v3599 = vadd.f32 %v3317, %v3571
      %v3600 = vadd.f32 %v3318, %v3576
      %v3601 = vadd.f32 %v3319, %v3579
      %v3602 = vadd.f32 %v3320, %v3584
      %v3603 = vadd.f32 %v3321, %v3587
      %v3604 = vadd.f32 %v3322, %v3592
      %v3605 = vadd.f32 %v3323, %v3595
      %v3606 = vld [vmem:[%s3153] sm:$0xe]
      %v3607 = vld [vmem:[%s3153 + $0x8] sm:$0xe]
      %v3608 = vld [vmem:[%s3153 + $0x10] sm:$0xe]
      %v3609 = vld [vmem:[%s3153 + $0x18] sm:$0xe]
      %v3610 = vld [vmem:[%s3153 + $0x20] sm:$0xe]
      %v3611 = vld [vmem:[%s3153 + $0x28] sm:$0xe]
      %v3612 = vld [vmem:[%s3153 + $0x30] sm:$0xe]
      %v3613 = vld [vmem:[%s3153 + $0x38] sm:$0xe]
      %v3630 = vrot.slane %v3606, 5
      %v3631 = vrot.slane %v3630, 4
      %v3632 = vrot.slane %v3325, 5
      %v3633 = vsel %vm2304, %v3631, %v3632
      %v3634 = vrot.slane %v3607, 5
      %v3635 = vrot.slane %v3634, 4
      %v3636 = vrot.slane %v3327, 5
      %v3637 = vsel %vm2304, %v3635, %v3636
      %v3638 = vrot.slane %v3608, 5
      %v3639 = vrot.slane %v3638, 4
      %v3640 = vrot.slane %v3329, 5
      %v3641 = vsel %vm2304, %v3639, %v3640
      %v3642 = vrot.slane %v3609, 5
      %v3643 = vrot.slane %v3642, 4
      %v3644 = vrot.slane %v3331, 5
      %v3645 = vsel %vm2304, %v3643, %v3644
      %v3646 = vrot.slane %v3610, 5
      %v3647 = vrot.slane %v3646, 4
      %v3648 = vrot.slane %v3333, 5
      %v3649 = vsel %vm2304, %v3647, %v3648
      %v3650 = vrot.slane %v3611, 5
      %v3651 = vrot.slane %v3650, 4
      %v3652 = vrot.slane %v3335, 5
      %v3653 = vsel %vm2304, %v3651, %v3652
      %v3654 = vrot.slane %v3612, 5
      %v3655 = vrot.slane %v3654, 4
      %v3656 = vrot.slane %v3337, 5
      %v3657 = vsel %vm2304, %v3655, %v3656
      %v3658 = vrot.slane %v3613, 5
      %v3659 = vrot.slane %v3658, 4
      %v3660 = vrot.slane %v3339, 5
      %v3661 = vsel %vm2304, %v3659, %v3660
      %s3662 = scalar_lea.vmem %s3, 512
      %v3663 = vld [vmem:[%s3662] sm:$0xf]
      %v3664 = vld [vmem:[%s3662 + $0x4] sm:$0xf]
      %v3665 = vld [vmem:[%s3662 + $0x8] sm:$0xf]
      %v3666 = vld [vmem:[%s3662 + $0xc] sm:$0xf]
      %v3667 = vld [vmem:[%s3662 + $0x10] sm:$0xf]
      %v3668 = vld [vmem:[%s3662 + $0x14] sm:$0xf]
      %v3669 = vld [vmem:[%s3662 + $0x18] sm:$0xf]
      %v3670 = vld [vmem:[%s3662 + $0x1c] sm:$0xf]
      %v3671 = vld [vmem:[%s3662 + $0x20] sm:$0xf]
      %v3672 = vld [vmem:[%s3662 + $0x24] sm:$0xf]
      %v3673 = vld [vmem:[%s3662 + $0x28] sm:$0xf]
      %v3674 = vld [vmem:[%s3662 + $0x2c] sm:$0xf]
      %v3675 = vld [vmem:[%s3662 + $0x30] sm:$0xf]
      %v3676 = vld [vmem:[%s3662 + $0x34] sm:$0xf]
      %v3677 = vld [vmem:[%s3662 + $0x38] sm:$0xf]
      %v3678 = vld [vmem:[%s3662 + $0x3c] sm:$0xf]
      %v3679 = vunpack.c.l.b16 %v3633
      %v3680 = vunpack.c.l.b16 %v3637
      %v3681 = vunpack.c.l.b16 %v3641
      %v3682 = vunpack.c.l.b16 %v3645
      %v3683 = vunpack.c.l.b16 %v3649
      %v3684 = vunpack.c.l.b16 %v3653
      %v3685 = vunpack.c.l.b16 %v3657
      %v3686 = vunpack.c.l.b16 %v3661
      %v3687 = vpack.c.b16 %v3680, %v3679
      %v3688 = vpack.c.b16 %v3682, %v3681
      %v3689 = vpack.c.b16 %v3684, %v3683
      %v3690 = vpack.c.b16 %v3686, %v3685
      %v3711 = vunpack.c.l.b16 %v3663
      %v3712 = vunpack.c.l.b16 %v3664
      %v3713 = vunpack.c.l.b16 %v3665
      %v3714 = vunpack.c.l.b16 %v3666
      %v3715 = vunpack.c.l.b16 %v3667
      %v3716 = vunpack.c.l.b16 %v3668
      %v3717 = vunpack.c.l.b16 %v3669
      %v3718 = vunpack.c.l.b16 %v3670
      %v3719 = vunpack.c.l.b16 %v3671
      %v3720 = vunpack.c.l.b16 %v3672
      %v3721 = vunpack.c.l.b16 %v3673
      %v3722 = vunpack.c.l.b16 %v3674
      %v3723 = vunpack.c.l.b16 %v3675
      %v3724 = vunpack.c.l.b16 %v3676
      %v3725 = vunpack.c.l.b16 %v3677
      %v3726 = vunpack.c.l.b16 %v3678
      %v3727 = vpack.c.b16 %v3712, %v3711
      %v3728 = vpack.c.b16 %v3714, %v3713
      %v3729 = vpack.c.b16 %v3716, %v3715
      %v3730 = vpack.c.b16 %v3718, %v3717
      %v3731 = vpack.c.b16 %v3720, %v3719
      %v3732 = vpack.c.b16 %v3722, %v3721
      %v3733 = vpack.c.b16 %v3724, %v3723
      %v3734 = vpack.c.b16 %v3726, %v3725
      %3743 = vmatprep.subr.bf16.mxu0 0
      %3744 = vmatpush1.bf16.msra.mxu0 %v3727
      %3745 = vmatprep.subr.bf16.mxu0 0
      %3746 = vmatpush1.bf16.msra.mxu0 %v3728
      %3747 = vmatprep.subr.bf16.mxu0 0
      %3748 = vmatpush1.bf16.msra.mxu0 %v3729
      %3749 = vmatprep.subr.bf16.mxu0 0
      %3750 = vmatpush1.bf16.msra.mxu0 %v3730
      %3751 = vmatprep.subr.bf16.mxu0 0
      %3752 = vmatpush1.bf16.msra.mxu0 %v3731
      %3753 = vmatprep.subr.bf16.mxu0 0
      %3754 = vmatpush1.bf16.msra.mxu0 %v3732
      %3755 = vmatprep.subr.bf16.mxu0 0
      %3756 = vmatpush1.bf16.msra.mxu0 %v3733
      %3757 = vmatprep.subr.bf16.mxu0 0
      %3758 = vmatpush1.bf16.msra.mxu0 %v3734
      %3759 = vmatprep.subr.bf16.mxu0 0
      %3760 = vmatpush1.bf16.msra.mxu0 0
      %3761 = vmatprep.subr.bf16.mxu0 0
      %3762 = vmatpush1.bf16.msra.mxu0 0
      %3763 = vmatprep.subr.bf16.mxu0 0
      %3764 = vmatpush1.bf16.msra.mxu0 0
      %3765 = vmatprep.subr.bf16.mxu0 0
      %3766 = vmatpush1.bf16.msra.mxu0 0
      %3767 = vmatprep.subr.bf16.mxu0 0
      %3768 = vmatpush1.bf16.msra.mxu0 0
      %3769 = vmatprep.subr.bf16.mxu0 0
      %3770 = vmatpush1.bf16.msra.mxu0 0
      %3771 = vmatprep.subr.bf16.mxu0 0
      %3772 = vmatpush1.bf16.msra.mxu0 0
      %3773 = vmatprep.subr.bf16.mxu0 0
      %3774 = vmatpush1.bf16.msra.mxu0 0
      %3775 = vmatprep.mubr.bf16.mxu0 0
      %3776 = vmatmul.mubr.bf16.gmra.mrb[0].mxu0 %v3687
      %v3777 = vpop.f32.mrb[0].mxu0
      %v3778 = vadd.f32 0.0, %v3777
      %v3779 = vpop.f32.mrb[0].mxu0
      %v3780 = vpop.f32.mrb[0].mxu0
      %v3781 = vadd.f32 0.0, %v3780
      %v3782 = vpop.f32.mrb[0].mxu0
      %3783 = vmatprep.mubr.bf16.mxu0 0
      %3784 = vmatmul.mubr.bf16.gmra.mrb[0].mxu0 %v3688
      %v3785 = vpop.f32.mrb[0].mxu0
      %v3786 = vadd.f32 0.0, %v3785
      %v3787 = vpop.f32.mrb[0].mxu0
      %v3788 = vpop.f32.mrb[0].mxu0
      %v3789 = vadd.f32 0.0, %v3788
      %v3790 = vpop.f32.mrb[0].mxu0
      %3791 = vmatprep.mubr.bf16.mxu0 0
      %3792 = vmatmul.mubr.bf16.gmra.mrb[0].mxu0 %v3689
      %v3793 = vpop.f32.mrb[0].mxu0
      %v3794 = vadd.f32 0.0, %v3793
      %v3795 = vpop.f32.mrb[0].mxu0
      %v3796 = vpop.f32.mrb[0].mxu0
      %v3797 = vadd.f32 0.0, %v3796
      %v3798 = vpop.f32.mrb[0].mxu0
      %3799 = vmatprep.mubr.bf16.mxu0 0
      %3800 = vmatmul.mubr.bf16.gmra.mrb[0].mxu0 %v3690
      %v3801 = vpop.f32.mrb[0].mxu0
      %v3802 = vadd.f32 0.0, %v3801
      %v3803 = vpop.f32.mrb[0].mxu0
      %v3804 = vpop.f32.mrb[0].mxu0
      %v3805 = vadd.f32 0.0, %v3804
      %v3806 = vpop.f32.mrb[0].mxu0
      %3807 = vdwg.mxu0
      %v3808 = vadd.f32 %v3598, %v3778
      %v3809 = vadd.f32 %v3599, %v3781
      %v3810 = vadd.f32 %v3600, %v3786
      %v3811 = vadd.f32 %v3601, %v3789
      %v3812 = vadd.f32 %v3602, %v3794
      %v3813 = vadd.f32 %v3603, %v3797
      %v3814 = vadd.f32 %v3604, %v3802
      %v3815 = vadd.f32 %v3605, %v3805
      %v3816 = vld [vmem:[%s832] sm:$0xf]
      %v3817 = vld [vmem:[%s832 + $0x8] sm:$0xf]
      %v3818 = vld [vmem:[%s832 + $0x10] sm:$0xf]
      %v3819 = vld [vmem:[%s832 + $0x18] sm:$0xf]
      %v3820 = vld [vmem:[%s832 + $0x20] sm:$0xf]
      %v3821 = vld [vmem:[%s832 + $0x28] sm:$0xf]
      %v3822 = vld [vmem:[%s832 + $0x30] sm:$0xf]
      %v3823 = vld [vmem:[%s832 + $0x38] sm:$0xf]
      %v3824 = vld [vmem:[%s5] sm:$0xf]
      %v3833 = vunpack.c.l.b16 %v3816
      %v3834 = vunpack.c.l.b16 %v3817
      %v3835 = vunpack.c.l.b16 %v3818
      %v3836 = vunpack.c.l.b16 %v3819
      %v3837 = vunpack.c.l.b16 %v3820
      %v3838 = vunpack.c.l.b16 %v3821
      %v3839 = vunpack.c.l.b16 %v3822
      %v3840 = vunpack.c.l.b16 %v3823
      %v3841 = vpack.c.b16 %v3834, %v3833
      %v3842 = vpack.c.b16 %v3836, %v3835
      %v3843 = vpack.c.b16 %v3838, %v3837
      %v3844 = vpack.c.b16 %v3840, %v3839
      %v3846 = vsel %vm298, %v3841, 0
      %v3849 = vsel %vm298, %v3842, 0
      %v3852 = vsel %vm298, %v3843, 0
      %v3855 = vsel %vm298, %v3844, 0
      %v3858 = vsel %vm311, %v3824, 0
      %3860 = vmatprep.subr.bf16.mxu0 0
      %3861 = vmatpush1.bf16.msra.mxu0 %v3858
      %3862 = vmatprep.subr.bf16.mxu0 0
      %3863 = vmatpush1.bf16.msra.mxu0 0
      %3864 = vmatprep.subr.bf16.mxu0 0
      %3865 = vmatpush1.bf16.msra.mxu0 0
      %3866 = vmatprep.subr.bf16.mxu0 0
      %3867 = vmatpush1.bf16.msra.mxu0 0
      %3868 = vmatprep.subr.bf16.mxu0 0
      %3869 = vmatpush1.bf16.msra.mxu0 0
      %3870 = vmatprep.subr.bf16.mxu0 0
      %3871 = vmatpush1.bf16.msra.mxu0 0
      %3872 = vmatprep.subr.bf16.mxu0 0
      %3873 = vmatpush1.bf16.msra.mxu0 0
      %3874 = vmatprep.subr.bf16.mxu0 0
      %3875 = vmatpush1.bf16.msra.mxu0 0
      %3876 = vmatprep.subr.bf16.mxu0 0
      %3877 = vmatpush1.bf16.msra.mxu0 0
      %3878 = vmatprep.subr.bf16.mxu0 0
      %3879 = vmatpush1.bf16.msra.mxu0 0
      %3880 = vmatprep.subr.bf16.mxu0 0
      %3881 = vmatpush1.bf16.msra.mxu0 0
      %3882 = vmatprep.subr.bf16.mxu0 0
      %3883 = vmatpush1.bf16.msra.mxu0 0
      %3884 = vmatprep.subr.bf16.mxu0 0
      %3885 = vmatpush1.bf16.msra.mxu0 0
      %3886 = vmatprep.subr.bf16.mxu0 0
      %3887 = vmatpush1.bf16.msra.mxu0 0
      %3888 = vmatprep.subr.bf16.mxu0 0
      %3889 = vmatpush1.bf16.msra.mxu0 0
      %3890 = vmatprep.subr.bf16.mxu0 0
      %3891 = vmatpush1.bf16.msra.mxu0 0
      %3892 = vmatprep.mubr.bf16.mxu0 0
      %3893 = vmatmul.mubr.bf16.gmra.mrb[0].mxu0 %v3846
      %v3894 = vpop.f32.mrb[0].mxu0
      %v3895 = vadd.f32 0.0, %v3894
      %v3896 = vpop.f32.mrb[0].mxu0
      %v3897 = vpop.f32.mrb[0].mxu0
      %v3898 = vadd.f32 0.0, %v3897
      %v3899 = vpop.f32.mrb[0].mxu0
      %3900 = vmatprep.mubr.bf16.mxu0 0
      %3901 = vmatmul.mubr.bf16.gmra.mrb[0].mxu0 %v3849
      %v3902 = vpop.f32.mrb[0].mxu0
      %v3903 = vadd.f32 0.0, %v3902
      %v3904 = vpop.f32.mrb[0].mxu0
      %v3905 = vpop.f32.mrb[0].mxu0
      %v3906 = vadd.f32 0.0, %v3905
      %v3907 = vpop.f32.mrb[0].mxu0
      %3908 = vmatprep.mubr.bf16.mxu0 0
      %3909 = vmatmul.mubr.bf16.gmra.mrb[0].mxu0 %v3852
      %v3910 = vpop.f32.mrb[0].mxu0
      %v3911 = vadd.f32 0.0, %v3910
      %v3912 = vpop.f32.mrb[0].mxu0
      %v3913 = vpop.f32.mrb[0].mxu0
      %v3914 = vadd.f32 0.0, %v3913
      %v3915 = vpop.f32.mrb[0].mxu0
      %3916 = vmatprep.mubr.bf16.mxu0 0
      %3917 = vmatmul.mubr.bf16.gmra.mrb[0].mxu0 %v3855
      %v3918 = vpop.f32.mrb[0].mxu0
      %v3919 = vadd.f32 0.0, %v3918
      %v3920 = vpop.f32.mrb[0].mxu0
      %v3921 = vpop.f32.mrb[0].mxu0
      %v3922 = vadd.f32 0.0, %v3921
      %v3923 = vpop.f32.mrb[0].mxu0
      %3924 = vdwg.mxu0
      %v3925 = vadd.f32 %v3808, %v3895
      %v3926 = vadd.f32 %v3809, %v3898
      %v3927 = vadd.f32 %v3810, %v3903
      %v3928 = vadd.f32 %v3811, %v3906
      %v3929 = vadd.f32 %v3812, %v3911
      %v3930 = vadd.f32 %v3813, %v3914
      %v3931 = vadd.f32 %v3814, %v3919
      %v3932 = vadd.f32 %v3815, %v3922
      %v3933 = vld [vmem:[%s4] sm:$0x1]
      %v3935 = vlaneseq
      %v3936 = vshrl.u32 %v3935, 7
      %v3937 = vsub.s32 0, %v3936
      %v3938 = vrot.slane %v3933, %v3937
      %v3940 = vadd.f32 %v3925, %v3938
      %v3941 = vadd.f32 %v3926, %v3938
      %v3942 = vadd.f32 %v3927, %v3938
      %v3943 = vadd.f32 %v3928, %v3938
      %v3944 = vadd.f32 %v3929, %v3938
      %v3945 = vadd.f32 %v3930, %v3938
      %v3946 = vadd.f32 %v3931, %v3938
      %v3947 = vadd.f32 %v3932, %v3938
      %v3948 = vmax.f32 %v3940, 0.0
      %v3949 = vmax.f32 %v3941, 0.0
      %v3950 = vmax.f32 %v3942, 0.0
      %v3951 = vmax.f32 %v3943, 0.0
      %v3952 = vmax.f32 %v3944, 0.0
      %v3953 = vmax.f32 %v3945, 0.0
      %v3954 = vmax.f32 %v3946, 0.0
      %v3955 = vmax.f32 %v3947, 0.0
      %3956 = vst [vmem:[%s256] sm:$0xff] %v3948
      %3957 = vst [vmem:[%s256 + $0x8] sm:$0xff] %v3949
      %3958 = vst [vmem:[%s256 + $0x10] sm:$0xff] %v3950
      %3959 = vst [vmem:[%s256 + $0x18] sm:$0xff] %v3951
      %3960 = vst [vmem:[%s256 + $0x20] sm:$0xff] %v3952
      %3961 = vst [vmem:[%s256 + $0x28] sm:$0xff] %v3953
      %3962 = vst [vmem:[%s256 + $0x30] sm:$0xff] %v3954
      %3963 = vst [vmem:[%s256 + $0x38] sm:$0xff] %v3955
      %p3964 = scmp.lt.s32.totalorder %s17, 1
      %s3965 = scalar_select %p3964, %s17, 1
      %s3966 = smul.addr %s3965, 8
      %s3967 = smul.addr %s3966, 8
      %s3968 = scalar_lea.vmem %s6, %s3967
      // Predicated region
      $region45: #{residual_block_forward.1} parent=43 // pred_check
        %p3969 = pneg %p166
      $region46: #{residual_block_forward.1} parent=43 // pred_check_branch
        %3971 = sbr.rel (%p3969) target = $region48
      $region47: #{residual_block_forward.1} parent=43 // pred_region
        _
      $region48: #{residual_block_forward.1} parent=43 // pred_fallthru
        _
    $region44: #{residual_block_forward.1} parent=5 // pred_fallthru
      _
    %p3972 = scmp.le.s32.totalorder 2, %s12
    // Predicated region
    $region49: #{residual_block_forward.1} parent=5 // pred_check
      %p3973 = pneg %p3972
    $region50: #{residual_block_forward.1} parent=5 // pred_check_branch
      %3975 = sbr.rel (%p3973) target = $region52
    $region51: #{residual_block_forward.1} parent=5 // pred_region
      %s3976 = ssub.s32 %s12, 2
      // Predicated region
      $region53: #{residual_block_forward.1} parent=51 // pred_check
        %p3977 = pneg %p172
      $region54: #{residual_block_forward.1} parent=51 // pred_check_branch
        %3979 = sbr.rel (%p3977) target = $region56
      $region55: #{residual_block_forward.1} parent=51 // pred_region
        %p3980 = scmp.lt.s32.totalorder %s18, 1
        %s3981 = scalar_select %p3980, %s18, 1
        %s3982 = smul.addr %s3981, 8
        %s3983 = smul.addr %s3982, 8
        %s3984 = scalar_lea.vmem %s6, %s3983
      $region56: #{residual_block_forward.1} parent=51 // pred_fallthru
        _
    $region52: #{residual_block_forward.1} parent=5 // pred_fallthru
      _
  $region6: #{residual_block_forward.1} parent=0 // loop_footer
    %s16 = sadd.s32 1, %s12
  $region7: #{residual_block_forward.1} parent=0 // loop_footer_branch
    %11 = sbr.rel target = $region3
  $region8: #{residual_block_forward.1} parent=0 // loop_exit
    _

</llo_original>
